<compile_context>
chip_gen: v7x
topology: tpu7x:2x2x1
jax: 0.10.0
libtpu: 0.0.40
codegen_flags: <defaults>
</compile_context>

<pallas_src>
import functools
import math

import jax
import jax.numpy as jnp
from jax.experimental import pallas as pl
from jax.experimental.pallas import tpu as pltpu

LN_EPS = 1e-5  # torch.nn.LayerNorm / F.layer_norm default eps


# -----------------------------------------------------------------------------
# Per-generation knobs (resolved once at import time, outside jit)
# -----------------------------------------------------------------------------
def _device_kind():
    try:
        return jax.devices()[0].device_kind.lower()
    except Exception:
        return ""


_KIND = _device_kind()
_IS_V5 = "v5" in _KIND
_IS_V7 = ("v7" in _KIND) or ("7x" in _KIND) or ("tpu7" in _KIND)
_ROW_CAP = 256 if _IS_V7 else 512          # max rows (G*S) per layer-kernel grid step
_MIN_GRID_STEPS = 4 if _IS_V7 else 2       # keep both v7x TCs busy / keep pipelining
_GELU_DTYPE = jnp.float32 if _IS_V5 else jnp.bfloat16  # bf16 VPU/EUP only on v6e/v7x
_PHYS_VMEM = (64 if _IS_V7 else 128) * (1 << 20)
_VMEM_CAP = int(0.85 * _PHYS_VMEM)


def _round_up(x, m):
    return ((x + m - 1) // m) * m


def _vmem_limit(est_bytes):
    # generous 2x margin over the estimate, never below 32 MiB, never above ~85%
    # of physical VMEM for the generation.
    return int(min(max(2 * est_bytes, 32 << 20), _VMEM_CAP))


def _largest_divisor_leq(n, cap):
    best = 1
    for d in range(1, min(n, cap) + 1):
        if n % d == 0:
            best = d
    return best


def _const_spec(a, single_buffer=True):
    """Full-array block with a constant index map (weights / biases / gammas)."""
    nd = a.ndim
    idx = lambda *args, _nd=nd: (0,) * _nd
    if single_buffer:
        # Constant blocks never change between grid steps -> single-buffer them.
        return pl.BlockSpec(a.shape, idx, pipeline_mode=pl.Buffered(1))
    return pl.BlockSpec(a.shape, idx)


# -----------------------------------------------------------------------------
# In-kernel math helpers
# -----------------------------------------------------------------------------
def _layernorm(x, g, b):
    mu = jnp.mean(x, axis=-1, keepdims=True)
    var = jnp.mean(jnp.square(x - mu), axis=-1, keepdims=True)
    return (x - mu) * jax.lax.rsqrt(var + LN_EPS) * g + b


def _softmax_last(s):
    s = s - jnp.max(s, axis=-1, keepdims=True)
    p = jnp.exp(s)
    return p * pl.reciprocal(jnp.sum(p, axis=-1, keepdims=True), approx=True)


# -----------------------------------------------------------------------------
# Kernel 1: one full transformer layer:
#   pre-norm -> fused QKV projection -> per-segment attention -> residual
#   -> Linear -> GELU -> Linear -> residual
# One grid step processes G segments, i.e. a (G, S, D) activation tile.
# -----------------------------------------------------------------------------
def _layer_kernel(x_ref, gblk_ref, wqkv_ref, bqkv_ref, gat_ref, bat_ref,
                  w1_ref, b1_ref, w2_ref, b2_ref, o_ref, *, gelu_dtype):
    G, S, D = x_ref.shape
    x = x_ref[...].astype(jnp.float32)                    # (G, S, D)
    xf = x.reshape(G * S, D)

    # --- ParallelTransformerBlock pre-norm (gamma-only LayerNorm, beta=0) ---
    h = _layernorm(xf, gblk_ref[...], 0.0)

    # --- fused q/k/v projection: one (G*S, D) @ (D, 3D) bf16 MXU pass ---
    qkv = jnp.dot(h.astype(jnp.bfloat16), wqkv_ref[...],
                  preferred_element_type=jnp.float32) + bqkv_ref[...]
    gat = gat_ref[...]
    bat = bat_ref[...]
    q = _layernorm(qkv[:, :D], gat, bat).reshape(G, S, D)
    k = _layernorm(qkv[:, D:2 * D], gat, bat).reshape(G, S, D)
    v = _layernorm(qkv[:, 2 * D:], gat, bat).reshape(G, S, D)

    # --- per-segment attention (softmax(q k^T / sqrt(D)) v) ---
    # TODO(synk): for segment_size < 128 the (S,S) score matmuls under-utilize the
    # MXU; a lane-padded / segment-folded layout would raise MXU utilization.
    scale = 1.0 / math.sqrt(D)
    s = jnp.einsum('gsd,gtd->gst', q.astype(jnp.bfloat16), k.astype(jnp.bfloat16),
                   preferred_element_type=jnp.float32) * scale
    p = _softmax_last(s)
    o = jnp.einsum('gst,gtd->gsd', p.astype(jnp.bfloat16), v.astype(jnp.bfloat16),
                   preferred_element_type=jnp.float32)
    x1 = o.reshape(G * S, D) + xf                          # residual: block(x) + x

    # --- FeedForward: Linear -> GELU -> Linear, + residual (ff(x) + x) ---
    hh = (jnp.dot(x1.astype(jnp.bfloat16), w1_ref[...],
                  preferred_element_type=jnp.float32) + b1_ref[...]).astype(gelu_dtype)
    # TODO(synk): torch nn.GELU default is exact (erf) GELU; tanh approximation used here.
    hh = 0.5 * hh * (1.0 + jnp.tanh(0.7978845608028654 * (hh + 0.044715 * hh * hh * hh)))
    y = jnp.dot(hh.astype(jnp.bfloat16), w2_ref[...],
                preferred_element_type=jnp.float32) + b2_ref[...]
    o_ref[...] = (y + x1).reshape(G, S, D).astype(o_ref.dtype)


# -----------------------------------------------------------------------------
# Kernel 2: to_logits = RMSNorm(x) @ Wout + bout, tiled over rows AND vocab.
# The RMSNorm'd row tile is computed once (vocab tile j == 0) into VMEM scratch
# and reused for every vocab tile of the same row tile.
# -----------------------------------------------------------------------------
def _rmsnorm_logits_kernel(x_ref, g_ref, w_ref, b_ref, o_ref, xn_ref):
    @pl.when(pl.program_id(1) == 0)
    def _():
        x = x_ref[...].astype(jnp.float32)
        d = x.shape[-1]
        # lucidrains RMSNorm: F.normalize(x, dim=-1) * sqrt(D) * g
        nrm = jnp.sqrt(jnp.sum(x * x, axis=-1, keepdims=True))
        xn = x / jnp.maximum(nrm, 1e-12) * jnp.sqrt(jnp.float32(d)) * g_ref[...]
        xn_ref[...] = xn.astype(jnp.bfloat16)

    y = jnp.dot(xn_ref[...], w_ref[...],
                preferred_element_type=jnp.float32) + b_ref[...]
    o_ref[...] = y.astype(o_ref.dtype)


# -----------------------------------------------------------------------------
# Wrappers
# -----------------------------------------------------------------------------
def transformer_layer(x, lp, segment_size, dilation_rate):
    B, N, D = x.shape
    assert dilation_rate == 1, "Transformer residual requires dilation_rate == 1"
    assert N % segment_size == 0, "sequence must be a multiple of segment_size"
    S = segment_size
    total = (B * N) // S                       # total number of segments

    # Batch G segments per grid step (up to _ROW_CAP rows) but never collapse the
    # grid below _MIN_GRID_STEPS steps (megacore / pipelining).
    cap = max(1, _ROW_CAP // S)
    if total >= _MIN_GRID_STEPS:
        cap = max(1, min(cap, total // _MIN_GRID_STEPS))
    G = _largest_divisor_leq(total, cap)
    xs = x.reshape(total, S, D)

    rows = G * S
    hidden = lp["w1"].shape[1]
    est = ((3 * D * D + D * hidden + hidden * D) * 2      # bf16 weights (single-buffered)
           + (3 * D + hidden + 4 * D) * 4 * 2             # biases / gammas
           + 2 * 2 * rows * D * 2                         # in/out tiles, double-buffered bf16
           + rows * (14 * D + 2 * S) * 4)                 # f32 intermediates (rough)

    kernel = functools.partial(_layer_kernel, gelu_dtype=_GELU_DTYPE)
    out = pl.pallas_call(
        kernel,
        out_shape=jax.ShapeDtypeStruct(xs.shape, xs.dtype),   # bf16 residual stream
        grid=(total // G,),
        in_specs=[
            pl.BlockSpec((G, S, D), lambda i: (i, 0, 0)),
            _const_spec(lp["g_blk"]),
            _const_spec(lp["wqkv"]), _const_spec(lp["bqkv"]),
            _const_spec(lp["g_attn"]), _const_spec(lp["b_attn"]),
            _const_spec(lp["w1"]), _const_spec(lp["b1"]),
            _const_spec(lp["w2"]), _const_spec(lp["b2"]),
        ],
        out_specs=pl.BlockSpec((G, S, D), lambda i: (i, 0, 0)),
        compiler_params=pltpu.CompilerParams(
            dimension_semantics=("parallel",),
            vmem_limit_bytes=_vmem_limit(est)),
    )(xs, lp["g_blk"], lp["wqkv"], lp["bqkv"], lp["g_attn"], lp["b_attn"],
      lp["w1"], lp["b1"], lp["w2"], lp["b2"])
    return out.reshape(B, N, D)


def _pick_vocab_tile(V, cap):
    """Largest multiple-of-128 divisor of V that is <= cap; otherwise pad V."""
    best = None
    t = 128
    while t <= min(V, cap):
        if V % t == 0:
            best = t
        t += 128
    if best is not None:
        return best, V
    Vp = _round_up(V, 128)
    if Vp <= cap:
        return Vp, Vp
    t = min(cap, Vp)
    Vp = _round_up(Vp, t)
    return t, Vp


def rmsnorm_logits(x, fp):
    B, N, D = x.shape
    rows = B * N
    V = fp["w_out"].shape[1]
    xs = x.reshape(rows, D)

    # Row tile: always a multiple of 8 (pad rows if needed -> unmasked stores).
    tm = min(_round_up(rows, 8), 256)
    rows_p = _round_up(rows, tm)
    if rows_p != rows:
        xs = jnp.pad(xs, ((0, rows_p - rows), (0, 0)))

    # Vocab tile: lane-dense multiple of 128, as large as the budget allows.
    cap_tv = 1024 if _IS_V7 else 2048
    tv, V_p = _pick_vocab_tile(V, cap_tv)
    w_out, b_out = fp["w_out"], fp["b_out"]
    if V_p != V:
        w_out = jnp.pad(w_out, ((0, 0), (0, V_p - V)))
        b_out = jnp.pad(b_out, ((0, 0), (0, V_p - V)))

    est = ((D * tv * 2) * 2       # bf16 w tile, double-buffered
           + (tm * D * 2) * 2     # bf16 x tile, double-buffered
           + (tm * tv * 4) * 2    # f32 out tile, double-buffered
           + tm * D * 2           # bf16 normalized-row scratch
           + tv * 4 * 2)          # bias tile

    out = pl.pallas_call(
        _rmsnorm_logits_kernel,
        out_shape=jax.ShapeDtypeStruct((rows_p, V_p), jnp.float32),
        grid=(rows_p // tm, V_p // tv),
        in_specs=[
            pl.BlockSpec((tm, D), lambda i, j: (i, 0)),
            _const_spec(fp["g_rms"]),
            pl.BlockSpec((D, tv), lambda i, j: (0, j)),
            pl.BlockSpec((1, tv), lambda i, j: (0, j)),
        ],
        out_specs=pl.BlockSpec((tm, tv), lambda i, j: (i, j)),
        scratch_shapes=[pltpu.VMEM((tm, D), jnp.bfloat16)],
        compiler_params=pltpu.CompilerParams(
            dimension_semantics=("parallel", "arbitrary"),
            vmem_limit_bytes=_vmem_limit(est)),
    )(xs, fp["g_rms"], w_out, b_out)
    out = out[:rows, :V]
    return out.reshape(B, N, V)


@functools.partial(jax.jit, static_argnames=("segment_size", "dilation_rate"))
def longnet_forward(tokens, params, segment_size, dilation_rate):
    # Embedding lookup is glue (gather); heavy math lives in the Pallas kernels.
    # Residual stream stays bf16 between layers (f32 math inside the kernels).
    x = jnp.take(params["emb"], tokens, axis=0)            # (B, N, D) bf16
    for lp in params["layers"]:
        x = transformer_layer(x, lp, segment_size, dilation_rate)  # (attn+x, ff+x) fused
    return rmsnorm_logits(x, params["final"])               # (B, N, V) f32


def init_params(key, vocab, dim, depth, ff_mult=4):
    # Weights converted to bf16 ONCE here (outside the per-step forward) so no
    # per-forward f32->bf16 convert ops / extra HBM traffic.
    def dense(k, shape, scale=0.02):
        return (scale * jax.random.normal(k, shape)).astype(jnp.float32)

    k_emb, k_fin, *k_layers = jax.random.split(key, 2 + depth)
    params = {"emb": dense(k_emb, (vocab, dim), 1.0).astype(jnp.bfloat16)}  # nn.Embedding ~ N(0,1)
    layers = []
    hidden = dim * ff_mult
    for kl in k_layers:
        ks = jax.random.split(kl, 10)
        wq, bq = dense(ks[0], (dim, dim)), dense(ks[1], (1, dim))
        wk, bk = dense(ks[2], (dim, dim)), dense(ks[3], (1, dim))
        wv, bv = dense(ks[4], (dim, dim)), dense(ks[5], (1, dim))
        layers.append({
            "g_blk": jnp.ones((1, dim), jnp.float32),               # lucidrains LayerNorm gamma
            "wqkv": jnp.concatenate([wq, wk, wv], axis=1).astype(jnp.bfloat16),  # fused (D,3D)
            "bqkv": jnp.concatenate([bq, bk, bv], axis=1),          # fused (1, 3D) f32
            "g_attn": jnp.ones((1, dim), jnp.float32),              # shared qk_norm LayerNorm
            "b_attn": jnp.zeros((1, dim), jnp.float32),
            "w1": dense(ks[6], (dim, hidden)).astype(jnp.bfloat16),
            "b1": dense(ks[7], (1, hidden)),
            "w2": dense(ks[8], (hidden, dim)).astype(jnp.bfloat16),
            "b2": dense(ks[9], (1, dim)),
        })
    params["layers"] = layers
    kf1, kf2 = jax.random.split(k_fin)
    params["final"] = {
        "g_rms": jnp.ones((1, dim), jnp.float32),
        "w_out": dense(kf1, (dim, vocab)).astype(jnp.bfloat16),
        "b_out": dense(kf2, (1, vocab)),
    }
    return params


if __name__ == "__main__":
    # Small config consistent with the module's forward:
    #   dim=128, depth=2, num_tokens=256, ff_mult=4,
    #   dilation_rate=1, segment_size=16, batch=2, seq=32 (4 segments total).
    B, N = 2, 32
    DIM, VOCAB, DEPTH = 128, 256, 2
    SEGMENT_SIZE, DILATION_RATE, FF_MULT = 16, 1, 4

    key = jax.random.PRNGKey(0)
    k_tok, k_par = jax.random.split(key)
    tokens = jax.random.randint(k_tok, (B, N), 0, VOCAB, dtype=jnp.int32)
    params = init_params(k_par, VOCAB, DIM, DEPTH, FF_MULT)

    logits = longnet_forward(tokens, params, SEGMENT_SIZE, DILATION_RATE)
    logits = jax.block_until_ready(logits)
    assert logits.shape == (B, N, VOCAB), logits.shape
    assert jnp.all(jnp.isfinite(logits))
    print("KERNEL_OK")
</pallas_src>

<mosaic_0001>
module attributes {stable_mosaic.version = 11 : i64} {
  func.func @_layer_kernel(%arg0: i32, %arg1: memref<2x16x128xbf16, #tpu.memory_space<vmem>>, %arg2: memref<1x128xf32, #tpu.memory_space<vmem>>, %arg3: memref<128x384xbf16, #tpu.memory_space<vmem>>, %arg4: memref<1x384xf32, #tpu.memory_space<vmem>>, %arg5: memref<1x128xf32, #tpu.memory_space<vmem>>, %arg6: memref<1x128xf32, #tpu.memory_space<vmem>>, %arg7: memref<128x512xbf16, #tpu.memory_space<vmem>>, %arg8: memref<1x512xf32, #tpu.memory_space<vmem>>, %arg9: memref<512x128xbf16, #tpu.memory_space<vmem>>, %arg10: memref<1x128xf32, #tpu.memory_space<vmem>>, %arg11: memref<2x16x128xbf16, #tpu.memory_space<vmem>>) attributes {dimension_semantics = [#tpu.dimension_semantics<parallel>], iteration_bounds = array<i64: 2>, scalar_prefetch = 0 : i64, scratch_operands = 0 : i64, tpu.core_type = #tpu.core_type<tc>, window_params = [{transform_indices = @transform_0, window_bounds = array<i64: 2, 16, 128>}, {pipeline_mode = #tpu.pipeline_mode<synchronous>, transform_indices = @transform_1, window_bounds = array<i64: 1, 128>}, {pipeline_mode = #tpu.pipeline_mode<synchronous>, transform_indices = @transform_2, window_bounds = array<i64: 128, 384>}, {pipeline_mode = #tpu.pipeline_mode<synchronous>, transform_indices = @transform_3, window_bounds = array<i64: 1, 384>}, {pipeline_mode = #tpu.pipeline_mode<synchronous>, transform_indices = @transform_4, window_bounds = array<i64: 1, 128>}, {pipeline_mode = #tpu.pipeline_mode<synchronous>, transform_indices = @transform_5, window_bounds = array<i64: 1, 128>}, {pipeline_mode = #tpu.pipeline_mode<synchronous>, transform_indices = @transform_6, window_bounds = array<i64: 128, 512>}, {pipeline_mode = #tpu.pipeline_mode<synchronous>, transform_indices = @transform_7, window_bounds = array<i64: 1, 512>}, {pipeline_mode = #tpu.pipeline_mode<synchronous>, transform_indices = @transform_8, window_bounds = array<i64: 512, 128>}, {pipeline_mode = #tpu.pipeline_mode<synchronous>, transform_indices = @transform_9, window_bounds = array<i64: 1, 128>}, {transform_indices = @transform_10, window_bounds = array<i64: 2, 16, 128>}]} {
    %c0 = arith.constant 0 : index
    %c0_0 = arith.constant 0 : index
    %c0_1 = arith.constant 0 : index
    %0 = vector.load %arg1[%c0, %c0_0, %c0_1] : memref<2x16x128xbf16, #tpu.memory_space<vmem>>, vector<2x16x128xbf16>
    %1 = arith.extf %0 : vector<2x16x128xbf16> to vector<2x16x128xf32>
    %2 = vector.shape_cast %1 : vector<2x16x128xf32> to vector<32x128xf32>
    %c0_2 = arith.constant 0 : index
    %c0_3 = arith.constant 0 : index
    %3 = vector.load %arg2[%c0_2, %c0_3] : memref<1x128xf32, #tpu.memory_space<vmem>>, vector<1x128xf32>
    %cst = arith.constant dense<0.000000e+00> : vector<32xf32>
    %4 = vector.multi_reduction <add>, %2, %cst [1] : vector<32x128xf32> to vector<32xf32>
    %5 = vector.shape_cast %4 : vector<32xf32> to vector<32x1xf32>
    %cst_4 = arith.constant 1.280000e+02 : f32
    %6 = vector.broadcast %cst_4 : f32 to vector<32x1xf32>
    %7 = arith.divf %5, %6 : vector<32x1xf32>
    %8 = vector.broadcast %7 : vector<32x1xf32> to vector<32x128xf32>
    %9 = arith.subf %2, %8 : vector<32x128xf32>
    %10 = arith.mulf %9, %9 : vector<32x128xf32>
    %cst_5 = arith.constant dense<0.000000e+00> : vector<32xf32>
    %11 = vector.multi_reduction <add>, %10, %cst_5 [1] : vector<32x128xf32> to vector<32xf32>
    %12 = vector.shape_cast %11 : vector<32xf32> to vector<32x1xf32>
    %cst_6 = arith.constant 1.280000e+02 : f32
    %13 = vector.broadcast %cst_6 : f32 to vector<32x1xf32>
    %14 = arith.divf %12, %13 : vector<32x1xf32>
    %15 = vector.broadcast %7 : vector<32x1xf32> to vector<32x128xf32>
    %16 = arith.subf %2, %15 : vector<32x128xf32>
    %cst_7 = arith.constant 9.99999974E-6 : f32
    %17 = vector.broadcast %cst_7 : f32 to vector<32x1xf32>
    %18 = arith.addf %14, %17 : vector<32x1xf32>
    %19 = math.rsqrt %18 : vector<32x1xf32>
    %20 = vector.broadcast %19 : vector<32x1xf32> to vector<32x128xf32>
    %21 = arith.mulf %16, %20 : vector<32x128xf32>
    %22 = vector.broadcast %3 : vector<1x128xf32> to vector<32x128xf32>
    %23 = arith.mulf %21, %22 : vector<32x128xf32>
    %cst_8 = arith.constant 0.000000e+00 : f32
    %24 = vector.broadcast %cst_8 : f32 to vector<32x128xf32>
    %25 = arith.addf %23, %24 : vector<32x128xf32>
    %26 = arith.truncf %25 : vector<32x128xf32> to vector<32x128xbf16>
    %c0_9 = arith.constant 0 : index
    %c0_10 = arith.constant 0 : index
    %27 = vector.load %arg3[%c0_9, %c0_10] : memref<128x384xbf16, #tpu.memory_space<vmem>>, vector<128x384xbf16>
    %cst_11 = arith.constant dense<0.000000e+00> : vector<32x384xf32>
    %28 = tpu.matmul %26, %27, %cst_11 {dimension_numbers = #tpu.dot_dimension_numbers<[1], [0], [0], [1], [0, 0, 1, 1], [], []>} : vector<32x128xbf16>, vector<128x384xbf16>, vector<32x384xf32> -> vector<32x384xf32>
    %c0_12 = arith.constant 0 : index
    %c0_13 = arith.constant 0 : index
    %29 = vector.load %arg4[%c0_12, %c0_13] : memref<1x384xf32, #tpu.memory_space<vmem>>, vector<1x384xf32>
    %30 = vector.broadcast %29 : vector<1x384xf32> to vector<32x384xf32>
    %31 = arith.addf %28, %30 : vector<32x384xf32>
    %c0_14 = arith.constant 0 : index
    %c0_15 = arith.constant 0 : index
    %32 = vector.load %arg5[%c0_14, %c0_15] : memref<1x128xf32, #tpu.memory_space<vmem>>, vector<1x128xf32>
    %c0_16 = arith.constant 0 : index
    %c0_17 = arith.constant 0 : index
    %33 = vector.load %arg6[%c0_16, %c0_17] : memref<1x128xf32, #tpu.memory_space<vmem>>, vector<1x128xf32>
    %34 = vector.extract_strided_slice %31 {offsets = [0, 0], sizes = [32, 128], strides = [1, 1]} : vector<32x384xf32> to vector<32x128xf32>
    %cst_18 = arith.constant dense<0.000000e+00> : vector<32xf32>
    %35 = vector.multi_reduction <add>, %34, %cst_18 [1] : vector<32x128xf32> to vector<32xf32>
    %36 = vector.shape_cast %35 : vector<32xf32> to vector<32x1xf32>
    %cst_19 = arith.constant 1.280000e+02 : f32
    %37 = vector.broadcast %cst_19 : f32 to vector<32x1xf32>
    %38 = arith.divf %36, %37 : vector<32x1xf32>
    %39 = vector.broadcast %38 : vector<32x1xf32> to vector<32x128xf32>
    %40 = arith.subf %34, %39 : vector<32x128xf32>
    %41 = arith.mulf %40, %40 : vector<32x128xf32>
    %cst_20 = arith.constant dense<0.000000e+00> : vector<32xf32>
    %42 = vector.multi_reduction <add>, %41, %cst_20 [1] : vector<32x128xf32> to vector<32xf32>
    %43 = vector.shape_cast %42 : vector<32xf32> to vector<32x1xf32>
    %cst_21 = arith.constant 1.280000e+02 : f32
    %44 = vector.broadcast %cst_21 : f32 to vector<32x1xf32>
    %45 = arith.divf %43, %44 : vector<32x1xf32>
    %46 = vector.broadcast %38 : vector<32x1xf32> to vector<32x128xf32>
    %47 = arith.subf %34, %46 : vector<32x128xf32>
    %cst_22 = arith.constant 9.99999974E-6 : f32
    %48 = vector.broadcast %cst_22 : f32 to vector<32x1xf32>
    %49 = arith.addf %45, %48 : vector<32x1xf32>
    %50 = math.rsqrt %49 : vector<32x1xf32>
    %51 = vector.broadcast %50 : vector<32x1xf32> to vector<32x128xf32>
    %52 = arith.mulf %47, %51 : vector<32x128xf32>
    %53 = vector.broadcast %32 : vector<1x128xf32> to vector<32x128xf32>
    %54 = arith.mulf %52, %53 : vector<32x128xf32>
    %55 = vector.broadcast %33 : vector<1x128xf32> to vector<32x128xf32>
    %56 = arith.addf %54, %55 : vector<32x128xf32>
    %57 = vector.shape_cast %56 : vector<32x128xf32> to vector<2x16x128xf32>
    %58 = vector.extract_strided_slice %31 {offsets = [0, 128], sizes = [32, 128], strides = [1, 1]} : vector<32x384xf32> to vector<32x128xf32>
    %cst_23 = arith.constant dense<0.000000e+00> : vector<32xf32>
    %59 = vector.multi_reduction <add>, %58, %cst_23 [1] : vector<32x128xf32> to vector<32xf32>
    %60 = vector.shape_cast %59 : vector<32xf32> to vector<32x1xf32>
    %cst_24 = arith.constant 1.280000e+02 : f32
    %61 = vector.broadcast %cst_24 : f32 to vector<32x1xf32>
    %62 = arith.divf %60, %61 : vector<32x1xf32>
    %63 = vector.broadcast %62 : vector<32x1xf32> to vector<32x128xf32>
    %64 = arith.subf %58, %63 : vector<32x128xf32>
    %65 = arith.mulf %64, %64 : vector<32x128xf32>
    %cst_25 = arith.constant dense<0.000000e+00> : vector<32xf32>
    %66 = vector.multi_reduction <add>, %65, %cst_25 [1] : vector<32x128xf32> to vector<32xf32>
    %67 = vector.shape_cast %66 : vector<32xf32> to vector<32x1xf32>
    %cst_26 = arith.constant 1.280000e+02 : f32
    %68 = vector.broadcast %cst_26 : f32 to vector<32x1xf32>
    %69 = arith.divf %67, %68 : vector<32x1xf32>
    %70 = vector.broadcast %62 : vector<32x1xf32> to vector<32x128xf32>
    %71 = arith.subf %58, %70 : vector<32x128xf32>
    %cst_27 = arith.constant 9.99999974E-6 : f32
    %72 = vector.broadcast %cst_27 : f32 to vector<32x1xf32>
    %73 = arith.addf %69, %72 : vector<32x1xf32>
    %74 = math.rsqrt %73 : vector<32x1xf32>
    %75 = vector.broadcast %74 : vector<32x1xf32> to vector<32x128xf32>
    %76 = arith.mulf %71, %75 : vector<32x128xf32>
    %77 = vector.broadcast %32 : vector<1x128xf32> to vector<32x128xf32>
    %78 = arith.mulf %76, %77 : vector<32x128xf32>
    %79 = vector.broadcast %33 : vector<1x128xf32> to vector<32x128xf32>
    %80 = arith.addf %78, %79 : vector<32x128xf32>
    %81 = vector.shape_cast %80 : vector<32x128xf32> to vector<2x16x128xf32>
    %82 = vector.extract_strided_slice %31 {offsets = [0, 256], sizes = [32, 128], strides = [1, 1]} : vector<32x384xf32> to vector<32x128xf32>
    %cst_28 = arith.constant dense<0.000000e+00> : vector<32xf32>
    %83 = vector.multi_reduction <add>, %82, %cst_28 [1] : vector<32x128xf32> to vector<32xf32>
    %84 = vector.shape_cast %83 : vector<32xf32> to vector<32x1xf32>
    %cst_29 = arith.constant 1.280000e+02 : f32
    %85 = vector.broadcast %cst_29 : f32 to vector<32x1xf32>
    %86 = arith.divf %84, %85 : vector<32x1xf32>
    %87 = vector.broadcast %86 : vector<32x1xf32> to vector<32x128xf32>
    %88 = arith.subf %82, %87 : vector<32x128xf32>
    %89 = arith.mulf %88, %88 : vector<32x128xf32>
    %cst_30 = arith.constant dense<0.000000e+00> : vector<32xf32>
    %90 = vector.multi_reduction <add>, %89, %cst_30 [1] : vector<32x128xf32> to vector<32xf32>
    %91 = vector.shape_cast %90 : vector<32xf32> to vector<32x1xf32>
    %cst_31 = arith.constant 1.280000e+02 : f32
    %92 = vector.broadcast %cst_31 : f32 to vector<32x1xf32>
    %93 = arith.divf %91, %92 : vector<32x1xf32>
    %94 = vector.broadcast %86 : vector<32x1xf32> to vector<32x128xf32>
    %95 = arith.subf %82, %94 : vector<32x128xf32>
    %cst_32 = arith.constant 9.99999974E-6 : f32
    %96 = vector.broadcast %cst_32 : f32 to vector<32x1xf32>
    %97 = arith.addf %93, %96 : vector<32x1xf32>
    %98 = math.rsqrt %97 : vector<32x1xf32>
    %99 = vector.broadcast %98 : vector<32x1xf32> to vector<32x128xf32>
    %100 = arith.mulf %95, %99 : vector<32x128xf32>
    %101 = vector.broadcast %32 : vector<1x128xf32> to vector<32x128xf32>
    %102 = arith.mulf %100, %101 : vector<32x128xf32>
    %103 = vector.broadcast %33 : vector<1x128xf32> to vector<32x128xf32>
    %104 = arith.addf %102, %103 : vector<32x128xf32>
    %105 = vector.shape_cast %104 : vector<32x128xf32> to vector<2x16x128xf32>
    %106 = arith.truncf %57 : vector<2x16x128xf32> to vector<2x16x128xbf16>
    %107 = arith.truncf %81 : vector<2x16x128xf32> to vector<2x16x128xbf16>
    "tpu.trace_start"() <{level = 10 : i32, message = "gsd,gtd->gst"}> : () -> ()
    %cst_33 = arith.constant dense<0.000000e+00> : vector<2x16x16xf32>
    %108 = tpu.matmul %106, %107, %cst_33 {dimension_numbers = #tpu.dot_dimension_numbers<[2], [2], [1], [1], [0, 0, 0, 1, 1, 1], [0], [0]>} : vector<2x16x128xbf16>, vector<2x16x128xbf16>, vector<2x16x16xf32> -> vector<2x16x16xf32>
    "tpu.trace_stop"() : () -> ()
    %cst_34 = arith.constant 0.0883883461 : f32
    %109 = vector.broadcast %cst_34 : f32 to vector<2x16x16xf32>
    %110 = arith.mulf %108, %109 : vector<2x16x16xf32>
    %cst_35 = arith.constant dense<0xFF800000> : vector<2x16xf32>
    %111 = vector.multi_reduction <maximumf>, %110, %cst_35 [2] : vector<2x16x16xf32> to vector<2x16xf32>
    %112 = vector.shape_cast %111 : vector<2x16xf32> to vector<2x16x1xf32>
    %113 = vector.broadcast %112 : vector<2x16x1xf32> to vector<2x16x16xf32>
    %114 = arith.subf %110, %113 : vector<2x16x16xf32>
    %115 = math.exp %114 : vector<2x16x16xf32>
    %cst_36 = arith.constant dense<0.000000e+00> : vector<2x16xf32>
    %116 = vector.multi_reduction <add>, %115, %cst_36 [2] : vector<2x16x16xf32> to vector<2x16xf32>
    %117 = vector.shape_cast %116 : vector<2x16xf32> to vector<2x16x1xf32>
    %118 = tpu.reciprocal %117 {approx = true} : vector<2x16x1xf32> -> vector<2x16x1xf32>
    %119 = vector.broadcast %118 : vector<2x16x1xf32> to vector<2x16x16xf32>
    %120 = arith.mulf %115, %119 : vector<2x16x16xf32>
    %121 = arith.truncf %120 : vector<2x16x16xf32> to vector<2x16x16xbf16>
    %122 = arith.truncf %105 : vector<2x16x128xf32> to vector<2x16x128xbf16>
    "tpu.trace_start"() <{level = 10 : i32, message = "gst,gtd->gsd"}> : () -> ()
    %cst_37 = arith.constant dense<0.000000e+00> : vector<2x16x128xf32>
    %123 = tpu.matmul %121, %122, %cst_37 {dimension_numbers = #tpu.dot_dimension_numbers<[2], [1], [1], [2], [0, 0, 0, 1, 1, 2], [0], [0]>} : vector<2x16x16xbf16>, vector<2x16x128xbf16>, vector<2x16x128xf32> -> vector<2x16x128xf32>
    "tpu.trace_stop"() : () -> ()
    %124 = vector.shape_cast %123 : vector<2x16x128xf32> to vector<32x128xf32>
    %125 = arith.addf %124, %2 : vector<32x128xf32>
    %126 = arith.truncf %125 : vector<32x128xf32> to vector<32x128xbf16>
    %c0_38 = arith.constant 0 : index
    %c0_39 = arith.constant 0 : index
    %127 = vector.load %arg7[%c0_38, %c0_39] : memref<128x512xbf16, #tpu.memory_space<vmem>>, vector<128x512xbf16>
    %cst_40 = arith.constant dense<0.000000e+00> : vector<32x512xf32>
    %128 = tpu.matmul %126, %127, %cst_40 {dimension_numbers = #tpu.dot_dimension_numbers<[1], [0], [0], [1], [0, 0, 1, 1], [], []>} : vector<32x128xbf16>, vector<128x512xbf16>, vector<32x512xf32> -> vector<32x512xf32>
    %c0_41 = arith.constant 0 : index
    %c0_42 = arith.constant 0 : index
    %129 = vector.load %arg8[%c0_41, %c0_42] : memref<1x512xf32, #tpu.memory_space<vmem>>, vector<1x512xf32>
    %130 = vector.broadcast %129 : vector<1x512xf32> to vector<32x512xf32>
    %131 = arith.addf %128, %130 : vector<32x512xf32>
    %132 = arith.truncf %131 : vector<32x512xf32> to vector<32x512xbf16>
    %cst_43 = arith.constant 5.000000e-01 : bf16
    %133 = vector.broadcast %cst_43 : bf16 to vector<32x512xbf16>
    %134 = arith.mulf %133, %132 : vector<32x512xbf16>
    %cst_44 = arith.constant 4.467770e-02 : bf16
    %135 = vector.broadcast %cst_44 : bf16 to vector<32x512xbf16>
    %136 = arith.mulf %135, %132 : vector<32x512xbf16>
    %137 = arith.mulf %136, %132 : vector<32x512xbf16>
    %138 = arith.mulf %137, %132 : vector<32x512xbf16>
    %139 = arith.addf %132, %138 : vector<32x512xbf16>
    %cst_45 = arith.constant 7.968750e-01 : bf16
    %140 = vector.broadcast %cst_45 : bf16 to vector<32x512xbf16>
    %141 = arith.mulf %140, %139 : vector<32x512xbf16>
    %142 = math.tanh %141 : vector<32x512xbf16>
    %cst_46 = arith.constant 1.000000e+00 : bf16
    %143 = vector.broadcast %cst_46 : bf16 to vector<32x512xbf16>
    %144 = arith.addf %143, %142 : vector<32x512xbf16>
    %145 = arith.mulf %134, %144 : vector<32x512xbf16>
    %c0_47 = arith.constant 0 : index
    %c0_48 = arith.constant 0 : index
    %146 = vector.load %arg9[%c0_47, %c0_48] : memref<512x128xbf16, #tpu.memory_space<vmem>>, vector<512x128xbf16>
    %cst_49 = arith.constant dense<0.000000e+00> : vector<32x128xf32>
    %147 = tpu.matmul %145, %146, %cst_49 {dimension_numbers = #tpu.dot_dimension_numbers<[1], [0], [0], [1], [0, 0, 1, 1], [], []>} : vector<32x512xbf16>, vector<512x128xbf16>, vector<32x128xf32> -> vector<32x128xf32>
    %c0_50 = arith.constant 0 : index
    %c0_51 = arith.constant 0 : index
    %148 = vector.load %arg10[%c0_50, %c0_51] : memref<1x128xf32, #tpu.memory_space<vmem>>, vector<1x128xf32>
    %149 = vector.broadcast %148 : vector<1x128xf32> to vector<32x128xf32>
    %150 = arith.addf %147, %149 : vector<32x128xf32>
    %151 = arith.addf %150, %125 : vector<32x128xf32>
    %152 = vector.shape_cast %151 : vector<32x128xf32> to vector<2x16x128xf32>
    %153 = arith.truncf %152 : vector<2x16x128xf32> to vector<2x16x128xbf16>
    %c0_52 = arith.constant 0 : index
    %c0_53 = arith.constant 0 : index
    %c0_54 = arith.constant 0 : index
    %154 = vector.load %arg11[%c0_52, %c0_53, %c0_54] : memref<2x16x128xbf16, #tpu.memory_space<vmem>>, vector<2x16x128xbf16>
    tpu.vector_store %arg11[%c0_52, %c0_53, %c0_54], %153 {strides = array<i32>} : memref<2x16x128xbf16, #tpu.memory_space<vmem>>, vector<2x16x128xbf16>,
    return
  }
  func.func @transform_0(%arg0: i32) -> (i32, i32, i32) {
    %c0_i32 = arith.constant 0 : i32
    %c0_i32_0 = arith.constant 0 : i32
    %c0_i32_1 = arith.constant 0 : i32
    return %arg0, %c0_i32, %c0_i32_0 : i32, i32, i32
  }
  func.func @transform_1(%arg0: i32) -> (i32, i32) {
    %c0_i32 = arith.constant 0 : i32
    %c0_i32_0 = arith.constant 0 : i32
    %c0_i32_1 = arith.constant 0 : i32
    return %c0_i32, %c0_i32_0 : i32, i32
  }
  func.func @transform_2(%arg0: i32) -> (i32, i32) {
    %c0_i32 = arith.constant 0 : i32
    %c0_i32_0 = arith.constant 0 : i32
    %c0_i32_1 = arith.constant 0 : i32
    return %c0_i32, %c0_i32_0 : i32, i32
  }
  func.func @transform_3(%arg0: i32) -> (i32, i32) {
    %c0_i32 = arith.constant 0 : i32
    %c0_i32_0 = arith.constant 0 : i32
    %c0_i32_1 = arith.constant 0 : i32
    return %c0_i32, %c0_i32_0 : i32, i32
  }
  func.func @transform_4(%arg0: i32) -> (i32, i32) {
    %c0_i32 = arith.constant 0 : i32
    %c0_i32_0 = arith.constant 0 : i32
    %c0_i32_1 = arith.constant 0 : i32
    return %c0_i32, %c0_i32_0 : i32, i32
  }
  func.func @transform_5(%arg0: i32) -> (i32, i32) {
    %c0_i32 = arith.constant 0 : i32
    %c0_i32_0 = arith.constant 0 : i32
    %c0_i32_1 = arith.constant 0 : i32
    return %c0_i32, %c0_i32_0 : i32, i32
  }
  func.func @transform_6(%arg0: i32) -> (i32, i32) {
    %c0_i32 = arith.constant 0 : i32
    %c0_i32_0 = arith.constant 0 : i32
    %c0_i32_1 = arith.constant 0 : i32
    return %c0_i32, %c0_i32_0 : i32, i32
  }
  func.func @transform_7(%arg0: i32) -> (i32, i32) {
    %c0_i32 = arith.constant 0 : i32
    %c0_i32_0 = arith.constant 0 : i32
    %c0_i32_1 = arith.constant 0 : i32
    return %c0_i32, %c0_i32_0 : i32, i32
  }
  func.func @transform_8(%arg0: i32) -> (i32, i32) {
    %c0_i32 = arith.constant 0 : i32
    %c0_i32_0 = arith.constant 0 : i32
    %c0_i32_1 = arith.constant 0 : i32
    return %c0_i32, %c0_i32_0 : i32, i32
  }
  func.func @transform_9(%arg0: i32) -> (i32, i32) {
    %c0_i32 = arith.constant 0 : i32
    %c0_i32_0 = arith.constant 0 : i32
    %c0_i32_1 = arith.constant 0 : i32
    return %c0_i32, %c0_i32_0 : i32, i32
  }
  func.func @transform_10(%arg0: i32) -> (i32, i32, i32) {
    %c0_i32 = arith.constant 0 : i32
    %c0_i32_0 = arith.constant 0 : i32
    %c0_i32_1 = arith.constant 0 : i32
    return %arg0, %c0_i32, %c0_i32_0 : i32, i32, i32
  }
}

module attributes {stable_mosaic.version = 11 : i64} {
  func.func @_rmsnorm_logits_kernel(%arg0: i32, %arg1: i32, %arg2: memref<64x128xbf16, #tpu.memory_space<vmem>>, %arg3: memref<1x128xf32, #tpu.memory_space<vmem>>, %arg4: memref<128x256xbf16, #tpu.memory_space<vmem>>, %arg5: memref<1x256xf32, #tpu.memory_space<vmem>>, %arg6: memref<64x256xf32, #tpu.memory_space<vmem>>, %arg7: memref<64x128xbf16, #tpu.memory_space<vmem>>) attributes {dimension_semantics = [#tpu.dimension_semantics<parallel>, #tpu.dimension_semantics<arbitrary>], iteration_bounds = array<i64: 1, 1>, scalar_prefetch = 0 : i64, scratch_operands = 1 : i64, tpu.core_type = #tpu.core_type<tc>, window_params = [{transform_indices = @transform_0, window_bounds = array<i64: 64, 128>}, {pipeline_mode = #tpu.pipeline_mode<synchronous>, transform_indices = @transform_1, window_bounds = array<i64: 1, 128>}, {transform_indices = @transform_2, window_bounds = array<i64: 128, 256>}, {transform_indices = @transform_3, window_bounds = array<i64: 1, 256>}, {transform_indices = @transform_4, window_bounds = array<i64: 64, 256>}]} {
    %c0_i32 = arith.constant 0 : i32
    %0 = arith.cmpi eq, %arg1, %c0_i32 : i32
    %1 = arith.extui %0 : i1 to i32
    %c0_i32_0 = arith.constant 0 : i32
    %2 = arith.cmpi ne, %1, %c0_i32_0 : i32
    scf.if %2 {
      %c0_8 = arith.constant 0 : index
      %c0_9 = arith.constant 0 : index
      %10 = vector.load %arg2[%c0_8, %c0_9] : memref<64x128xbf16, #tpu.memory_space<vmem>>, vector<64x128xbf16>
      %11 = arith.extf %10 : vector<64x128xbf16> to vector<64x128xf32>
      %12 = arith.mulf %11, %11 : vector<64x128xf32>
      %cst_10 = arith.constant dense<0.000000e+00> : vector<64xf32>
      %13 = vector.multi_reduction <add>, %12, %cst_10 [1] : vector<64x128xf32> to vector<64xf32>
      %14 = vector.shape_cast %13 : vector<64xf32> to vector<64x1xf32>
      %15 = math.sqrt %14 : vector<64x1xf32>
      %cst_11 = arith.constant 9.99999996E-13 : f32
      %16 = vector.broadcast %cst_11 : f32 to vector<64x1xf32>
      %17 = arith.maximumf %15, %16 : vector<64x1xf32>
      %18 = vector.broadcast %17 : vector<64x1xf32> to vector<64x128xf32>
      %19 = arith.divf %11, %18 : vector<64x128xf32>
      %cst_12 = arith.constant 1.280000e+02 : f32
      %20 = math.sqrt %cst_12 : f32
      %21 = vector.broadcast %20 : f32 to vector<64x128xf32>
      %22 = arith.mulf %19, %21 : vector<64x128xf32>
      %c0_13 = arith.constant 0 : index
      %c0_14 = arith.constant 0 : index
      %23 = vector.load %arg3[%c0_13, %c0_14] : memref<1x128xf32, #tpu.memory_space<vmem>>, vector<1x128xf32>
      %24 = vector.broadcast %23 : vector<1x128xf32> to vector<64x128xf32>
      %25 = arith.mulf %22, %24 : vector<64x128xf32>
      %26 = arith.truncf %25 : vector<64x128xf32> to vector<64x128xbf16>
      %c0_15 = arith.constant 0 : index
      %c0_16 = arith.constant 0 : index
      %27 = vector.load %arg7[%c0_15, %c0_16] : memref<64x128xbf16, #tpu.memory_space<vmem>>, vector<64x128xbf16>
      tpu.vector_store %arg7[%c0_15, %c0_16], %26 {strides = array<i32>} : memref<64x128xbf16, #tpu.memory_space<vmem>>, vector<64x128xbf16>,
    } else {
    }
    %c0 = arith.constant 0 : index
    %c0_1 = arith.constant 0 : index
    %3 = vector.load %arg7[%c0, %c0_1] : memref<64x128xbf16, #tpu.memory_space<vmem>>, vector<64x128xbf16>
    %c0_2 = arith.constant 0 : index
    %c0_3 = arith.constant 0 : index
    %4 = vector.load %arg4[%c0_2, %c0_3] : memref<128x256xbf16, #tpu.memory_space<vmem>>, vector<128x256xbf16>
    %cst = arith.constant dense<0.000000e+00> : vector<64x256xf32>
    %5 = tpu.matmul %3, %4, %cst {dimension_numbers = #tpu.dot_dimension_numbers<[1], [0], [0], [1], [0, 0, 1, 1], [], []>} : vector<64x128xbf16>, vector<128x256xbf16>, vector<64x256xf32> -> vector<64x256xf32>
    %c0_4 = arith.constant 0 : index
    %c0_5 = arith.constant 0 : index
    %6 = vector.load %arg5[%c0_4, %c0_5] : memref<1x256xf32, #tpu.memory_space<vmem>>, vector<1x256xf32>
    %7 = vector.broadcast %6 : vector<1x256xf32> to vector<64x256xf32>
    %8 = arith.addf %5, %7 : vector<64x256xf32>
    %c0_6 = arith.constant 0 : index
    %c0_7 = arith.constant 0 : index
    %9 = vector.load %arg6[%c0_6, %c0_7] : memref<64x256xf32, #tpu.memory_space<vmem>>, vector<64x256xf32>
    tpu.vector_store %arg6[%c0_6, %c0_7], %8 {strides = array<i32>} : memref<64x256xf32, #tpu.memory_space<vmem>>, vector<64x256xf32>,
    return
  }
  func.func @transform_0(%arg0: i32, %arg1: i32) -> (i32, i32) {
    %c0_i32 = arith.constant 0 : i32
    %c0_i32_0 = arith.constant 0 : i32
    return %arg0, %c0_i32 : i32, i32
  }
  func.func @transform_1(%arg0: i32, %arg1: i32) -> (i32, i32) {
    %c0_i32 = arith.constant 0 : i32
    %c0_i32_0 = arith.constant 0 : i32
    %c0_i32_1 = arith.constant 0 : i32
    return %c0_i32, %c0_i32_0 : i32, i32
  }
  func.func @transform_2(%arg0: i32, %arg1: i32) -> (i32, i32) {
    %c0_i32 = arith.constant 0 : i32
    %c0_i32_0 = arith.constant 0 : i32
    return %c0_i32, %arg1 : i32, i32
  }
  func.func @transform_3(%arg0: i32, %arg1: i32) -> (i32, i32) {
    %c0_i32 = arith.constant 0 : i32
    %c0_i32_0 = arith.constant 0 : i32
    return %c0_i32, %arg1 : i32, i32
  }
  func.func @transform_4(%arg0: i32, %arg1: i32) -> (i32, i32) {
    %c0_i32 = arith.constant 0 : i32
    return %arg0, %arg1 : i32, i32
  }
}

module attributes {stable_mosaic.version = 11 : i64} {
  func.func @_layer_kernel(%arg0: i32, %arg1: memref<2x16x128xbf16, #tpu.memory_space<vmem>>, %arg2: memref<1x128xf32, #tpu.memory_space<vmem>>, %arg3: memref<128x384xbf16, #tpu.memory_space<vmem>>, %arg4: memref<1x384xf32, #tpu.memory_space<vmem>>, %arg5: memref<1x128xf32, #tpu.memory_space<vmem>>, %arg6: memref<1x128xf32, #tpu.memory_space<vmem>>, %arg7: memref<128x512xbf16, #tpu.memory_space<vmem>>, %arg8: memref<1x512xf32, #tpu.memory_space<vmem>>, %arg9: memref<512x128xbf16, #tpu.memory_space<vmem>>, %arg10: memref<1x128xf32, #tpu.memory_space<vmem>>, %arg11: memref<2x16x128xbf16, #tpu.memory_space<vmem>>) attributes {dimension_semantics = [#tpu.dimension_semantics<parallel>], iteration_bounds = array<i64: 2>, scalar_prefetch = 0 : i64, scratch_operands = 0 : i64, tpu.core_type = #tpu.core_type<tc>, window_params = [{transform_indices = @transform_0, window_bounds = array<i64: 2, 16, 128>}, {pipeline_mode = #tpu.pipeline_mode<synchronous>, transform_indices = @transform_1, window_bounds = array<i64: 1, 128>}, {pipeline_mode = #tpu.pipeline_mode<synchronous>, transform_indices = @transform_2, window_bounds = array<i64: 128, 384>}, {pipeline_mode = #tpu.pipeline_mode<synchronous>, transform_indices = @transform_3, window_bounds = array<i64: 1, 384>}, {pipeline_mode = #tpu.pipeline_mode<synchronous>, transform_indices = @transform_4, window_bounds = array<i64: 1, 128>}, {pipeline_mode = #tpu.pipeline_mode<synchronous>, transform_indices = @transform_5, window_bounds = array<i64: 1, 128>}, {pipeline_mode = #tpu.pipeline_mode<synchronous>, transform_indices = @transform_6, window_bounds = array<i64: 128, 512>}, {pipeline_mode = #tpu.pipeline_mode<synchronous>, transform_indices = @transform_7, window_bounds = array<i64: 1, 512>}, {pipeline_mode = #tpu.pipeline_mode<synchronous>, transform_indices = @transform_8, window_bounds = array<i64: 512, 128>}, {pipeline_mode = #tpu.pipeline_mode<synchronous>, transform_indices = @transform_9, window_bounds = array<i64: 1, 128>}, {transform_indices = @transform_10, window_bounds = array<i64: 2, 16, 128>}]} {
    %c0 = arith.constant 0 : index
    %c0_0 = arith.constant 0 : index
    %c0_1 = arith.constant 0 : index
    %0 = vector.load %arg1[%c0, %c0_0, %c0_1] : memref<2x16x128xbf16, #tpu.memory_space<vmem>>, vector<2x16x128xbf16>
    %1 = arith.extf %0 : vector<2x16x128xbf16> to vector<2x16x128xf32>
    %2 = vector.shape_cast %1 : vector<2x16x128xf32> to vector<32x128xf32>
    %c0_2 = arith.constant 0 : index
    %c0_3 = arith.constant 0 : index
    %3 = vector.load %arg2[%c0_2, %c0_3] : memref<1x128xf32, #tpu.memory_space<vmem>>, vector<1x128xf32>
    %cst = arith.constant dense<0.000000e+00> : vector<32xf32>
    %4 = vector.multi_reduction <add>, %2, %cst [1] : vector<32x128xf32> to vector<32xf32>
    %5 = vector.shape_cast %4 : vector<32xf32> to vector<32x1xf32>
    %cst_4 = arith.constant 1.280000e+02 : f32
    %6 = vector.broadcast %cst_4 : f32 to vector<32x1xf32>
    %7 = arith.divf %5, %6 : vector<32x1xf32>
    %8 = vector.broadcast %7 : vector<32x1xf32> to vector<32x128xf32>
    %9 = arith.subf %2, %8 : vector<32x128xf32>
    %10 = arith.mulf %9, %9 : vector<32x128xf32>
    %cst_5 = arith.constant dense<0.000000e+00> : vector<32xf32>
    %11 = vector.multi_reduction <add>, %10, %cst_5 [1] : vector<32x128xf32> to vector<32xf32>
    %12 = vector.shape_cast %11 : vector<32xf32> to vector<32x1xf32>
    %cst_6 = arith.constant 1.280000e+02 : f32
    %13 = vector.broadcast %cst_6 : f32 to vector<32x1xf32>
    %14 = arith.divf %12, %13 : vector<32x1xf32>
    %15 = vector.broadcast %7 : vector<32x1xf32> to vector<32x128xf32>
    %16 = arith.subf %2, %15 : vector<32x128xf32>
    %cst_7 = arith.constant 9.99999974E-6 : f32
    %17 = vector.broadcast %cst_7 : f32 to vector<32x1xf32>
    %18 = arith.addf %14, %17 : vector<32x1xf32>
    %19 = math.rsqrt %18 : vector<32x1xf32>
    %20 = vector.broadcast %19 : vector<32x1xf32> to vector<32x128xf32>
    %21 = arith.mulf %16, %20 : vector<32x128xf32>
    %22 = vector.broadcast %3 : vector<1x128xf32> to vector<32x128xf32>
    %23 = arith.mulf %21, %22 : vector<32x128xf32>
    %cst_8 = arith.constant 0.000000e+00 : f32
    %24 = vector.broadcast %cst_8 : f32 to vector<32x128xf32>
    %25 = arith.addf %23, %24 : vector<32x128xf32>
    %26 = arith.truncf %25 : vector<32x128xf32> to vector<32x128xbf16>
    %c0_9 = arith.constant 0 : index
    %c0_10 = arith.constant 0 : index
    %27 = vector.load %arg3[%c0_9, %c0_10] : memref<128x384xbf16, #tpu.memory_space<vmem>>, vector<128x384xbf16>
    %cst_11 = arith.constant dense<0.000000e+00> : vector<32x384xf32>
    %28 = tpu.matmul %26, %27, %cst_11 {dimension_numbers = #tpu.dot_dimension_numbers<[1], [0], [0], [1], [0, 0, 1, 1], [], []>} : vector<32x128xbf16>, vector<128x384xbf16>, vector<32x384xf32> -> vector<32x384xf32>
    %c0_12 = arith.constant 0 : index
    %c0_13 = arith.constant 0 : index
    %29 = vector.load %arg4[%c0_12, %c0_13] : memref<1x384xf32, #tpu.memory_space<vmem>>, vector<1x384xf32>
    %30 = vector.broadcast %29 : vector<1x384xf32> to vector<32x384xf32>
    %31 = arith.addf %28, %30 : vector<32x384xf32>
    %c0_14 = arith.constant 0 : index
    %c0_15 = arith.constant 0 : index
    %32 = vector.load %arg5[%c0_14, %c0_15] : memref<1x128xf32, #tpu.memory_space<vmem>>, vector<1x128xf32>
    %c0_16 = arith.constant 0 : index
    %c0_17 = arith.constant 0 : index
    %33 = vector.load %arg6[%c0_16, %c0_17] : memref<1x128xf32, #tpu.memory_space<vmem>>, vector<1x128xf32>
    %34 = vector.extract_strided_slice %31 {offsets = [0, 0], sizes = [32, 128], strides = [1, 1]} : vector<32x384xf32> to vector<32x128xf32>
    %cst_18 = arith.constant dense<0.000000e+00> : vector<32xf32>
    %35 = vector.multi_reduction <add>, %34, %cst_18 [1] : vector<32x128xf32> to vector<32xf32>
    %36 = vector.shape_cast %35 : vector<32xf32> to vector<32x1xf32>
    %cst_19 = arith.constant 1.280000e+02 : f32
    %37 = vector.broadcast %cst_19 : f32 to vector<32x1xf32>
    %38 = arith.divf %36, %37 : vector<32x1xf32>
    %39 = vector.broadcast %38 : vector<32x1xf32> to vector<32x128xf32>
    %40 = arith.subf %34, %39 : vector<32x128xf32>
    %41 = arith.mulf %40, %40 : vector<32x128xf32>
    %cst_20 = arith.constant dense<0.000000e+00> : vector<32xf32>
    %42 = vector.multi_reduction <add>, %41, %cst_20 [1] : vector<32x128xf32> to vector<32xf32>
    %43 = vector.shape_cast %42 : vector<32xf32> to vector<32x1xf32>
    %cst_21 = arith.constant 1.280000e+02 : f32
    %44 = vector.broadcast %cst_21 : f32 to vector<32x1xf32>
    %45 = arith.divf %43, %44 : vector<32x1xf32>
    %46 = vector.broadcast %38 : vector<32x1xf32> to vector<32x128xf32>
    %47 = arith.subf %34, %46 : vector<32x128xf32>
    %cst_22 = arith.constant 9.99999974E-6 : f32
    %48 = vector.broadcast %cst_22 : f32 to vector<32x1xf32>
    %49 = arith.addf %45, %48 : vector<32x1xf32>
    %50 = math.rsqrt %49 : vector<32x1xf32>
    %51 = vector.broadcast %50 : vector<32x1xf32> to vector<32x128xf32>
    %52 = arith.mulf %47, %51 : vector<32x128xf32>
    %53 = vector.broadcast %32 : vector<1x128xf32> to vector<32x128xf32>
    %54 = arith.mulf %52, %53 : vector<32x128xf32>
    %55 = vector.broadcast %33 : vector<1x128xf32> to vector<32x128xf32>
    %56 = arith.addf %54, %55 : vector<32x128xf32>
    %57 = vector.shape_cast %56 : vector<32x128xf32> to vector<2x16x128xf32>
    %58 = vector.extract_strided_slice %31 {offsets = [0, 128], sizes = [32, 128], strides = [1, 1]} : vector<32x384xf32> to vector<32x128xf32>
    %cst_23 = arith.constant dense<0.000000e+00> : vector<32xf32>
    %59 = vector.multi_reduction <add>, %58, %cst_23 [1] : vector<32x128xf32> to vector<32xf32>
    %60 = vector.shape_cast %59 : vector<32xf32> to vector<32x1xf32>
    %cst_24 = arith.constant 1.280000e+02 : f32
    %61 = vector.broadcast %cst_24 : f32 to vector<32x1xf32>
    %62 = arith.divf %60, %61 : vector<32x1xf32>
    %63 = vector.broadcast %62 : vector<32x1xf32> to vector<32x128xf32>
    %64 = arith.subf %58, %63 : vector<32x128xf32>
    %65 = arith.mulf %64, %64 : vector<32x128xf32>
    %cst_25 = arith.constant dense<0.000000e+00> : vector<32xf32>
    %66 = vector.multi_reduction <add>, %65, %cst_25 [1] : vector<32x128xf32> to vector<32xf32>
    %67 = vector.shape_cast %66 : vector<32xf32> to vector<32x1xf32>
    %cst_26 = arith.constant 1.280000e+02 : f32
    %68 = vector.broadcast %cst_26 : f32 to vector<32x1xf32>
    %69 = arith.divf %67, %68 : vector<32x1xf32>
    %70 = vector.broadcast %62 : vector<32x1xf32> to vector<32x128xf32>
    %71 = arith.subf %58, %70 : vector<32x128xf32>
    %cst_27 = arith.constant 9.99999974E-6 : f32
    %72 = vector.broadcast %cst_27 : f32 to vector<32x1xf32>
    %73 = arith.addf %69, %72 : vector<32x1xf32>
    %74 = math.rsqrt %73 : vector<32x1xf32>
    %75 = vector.broadcast %74 : vector<32x1xf32> to vector<32x128xf32>
    %76 = arith.mulf %71, %75 : vector<32x128xf32>
    %77 = vector.broadcast %32 : vector<1x128xf32> to vector<32x128xf32>
    %78 = arith.mulf %76, %77 : vector<32x128xf32>
    %79 = vector.broadcast %33 : vector<1x128xf32> to vector<32x128xf32>
    %80 = arith.addf %78, %79 : vector<32x128xf32>
    %81 = vector.shape_cast %80 : vector<32x128xf32> to vector<2x16x128xf32>
    %82 = vector.extract_strided_slice %31 {offsets = [0, 256], sizes = [32, 128], strides = [1, 1]} : vector<32x384xf32> to vector<32x128xf32>
    %cst_28 = arith.constant dense<0.000000e+00> : vector<32xf32>
    %83 = vector.multi_reduction <add>, %82, %cst_28 [1] : vector<32x128xf32> to vector<32xf32>
    %84 = vector.shape_cast %83 : vector<32xf32> to vector<32x1xf32>
    %cst_29 = arith.constant 1.280000e+02 : f32
    %85 = vector.broadcast %cst_29 : f32 to vector<32x1xf32>
    %86 = arith.divf %84, %85 : vector<32x1xf32>
    %87 = vector.broadcast %86 : vector<32x1xf32> to vector<32x128xf32>
    %88 = arith.subf %82, %87 : vector<32x128xf32>
    %89 = arith.mulf %88, %88 : vector<32x128xf32>
    %cst_30 = arith.constant dense<0.000000e+00> : vector<32xf32>
    %90 = vector.multi_reduction <add>, %89, %cst_30 [1] : vector<32x128xf32> to vector<32xf32>
    %91 = vector.shape_cast %90 : vector<32xf32> to vector<32x1xf32>
    %cst_31 = arith.constant 1.280000e+02 : f32
    %92 = vector.broadcast %cst_31 : f32 to vector<32x1xf32>
    %93 = arith.divf %91, %92 : vector<32x1xf32>
    %94 = vector.broadcast %86 : vector<32x1xf32> to vector<32x128xf32>
    %95 = arith.subf %82, %94 : vector<32x128xf32>
    %cst_32 = arith.constant 9.99999974E-6 : f32
    %96 = vector.broadcast %cst_32 : f32 to vector<32x1xf32>
    %97 = arith.addf %93, %96 : vector<32x1xf32>
    %98 = math.rsqrt %97 : vector<32x1xf32>
    %99 = vector.broadcast %98 : vector<32x1xf32> to vector<32x128xf32>
    %100 = arith.mulf %95, %99 : vector<32x128xf32>
    %101 = vector.broadcast %32 : vector<1x128xf32> to vector<32x128xf32>
    %102 = arith.mulf %100, %101 : vector<32x128xf32>
    %103 = vector.broadcast %33 : vector<1x128xf32> to vector<32x128xf32>
    %104 = arith.addf %102, %103 : vector<32x128xf32>
    %105 = vector.shape_cast %104 : vector<32x128xf32> to vector<2x16x128xf32>
    %106 = arith.truncf %57 : vector<2x16x128xf32> to vector<2x16x128xbf16>
    %107 = arith.truncf %81 : vector<2x16x128xf32> to vector<2x16x128xbf16>
    "tpu.trace_start"() <{level = 10 : i32, message = "gsd,gtd->gst"}> : () -> ()
    %cst_33 = arith.constant dense<0.000000e+00> : vector<2x16x16xf32>
    %108 = tpu.matmul %106, %107, %cst_33 {dimension_numbers = #tpu.dot_dimension_numbers<[2], [2], [1], [1], [0, 0, 0, 1, 1, 1], [0], [0]>} : vector<2x16x128xbf16>, vector<2x16x128xbf16>, vector<2x16x16xf32> -> vector<2x16x16xf32>
    "tpu.trace_stop"() : () -> ()
    %cst_34 = arith.constant 0.0883883461 : f32
    %109 = vector.broadcast %cst_34 : f32 to vector<2x16x16xf32>
    %110 = arith.mulf %108, %109 : vector<2x16x16xf32>
    %cst_35 = arith.constant dense<0xFF800000> : vector<2x16xf32>
    %111 = vector.multi_reduction <maximumf>, %110, %cst_35 [2] : vector<2x16x16xf32> to vector<2x16xf32>
    %112 = vector.shape_cast %111 : vector<2x16xf32> to vector<2x16x1xf32>
    %113 = vector.broadcast %112 : vector<2x16x1xf32> to vector<2x16x16xf32>
    %114 = arith.subf %110, %113 : vector<2x16x16xf32>
    %115 = math.exp %114 : vector<2x16x16xf32>
    %cst_36 = arith.constant dense<0.000000e+00> : vector<2x16xf32>
    %116 = vector.multi_reduction <add>, %115, %cst_36 [2] : vector<2x16x16xf32> to vector<2x16xf32>
    %117 = vector.shape_cast %116 : vector<2x16xf32> to vector<2x16x1xf32>
    %118 = tpu.reciprocal %117 {approx = true} : vector<2x16x1xf32> -> vector<2x16x1xf32>
    %119 = vector.broadcast %118 : vector<2x16x1xf32> to vector<2x16x16xf32>
    %120 = arith.mulf %115, %119 : vector<2x16x16xf32>
    %121 = arith.truncf %120 : vector<2x16x16xf32> to vector<2x16x16xbf16>
    %122 = arith.truncf %105 : vector<2x16x128xf32> to vector<2x16x128xbf16>
    "tpu.trace_start"() <{level = 10 : i32, message = "gst,gtd->gsd"}> : () -> ()
    %cst_37 = arith.constant dense<0.000000e+00> : vector<2x16x128xf32>
    %123 = tpu.matmul %121, %122, %cst_37 {dimension_numbers = #tpu.dot_dimension_numbers<[2], [1], [1], [2], [0, 0, 0, 1, 1, 2], [0], [0]>} : vector<2x16x16xbf16>, vector<2x16x128xbf16>, vector<2x16x128xf32> -> vector<2x16x128xf32>
    "tpu.trace_stop"() : () -> ()
    %124 = vector.shape_cast %123 : vector<2x16x128xf32> to vector<32x128xf32>
    %125 = arith.addf %124, %2 : vector<32x128xf32>
    %126 = arith.truncf %125 : vector<32x128xf32> to vector<32x128xbf16>
    %c0_38 = arith.constant 0 : index
    %c0_39 = arith.constant 0 : index
    %127 = vector.load %arg7[%c0_38, %c0_39] : memref<128x512xbf16, #tpu.memory_space<vmem>>, vector<128x512xbf16>
    %cst_40 = arith.constant dense<0.000000e+00> : vector<32x512xf32>
    %128 = tpu.matmul %126, %127, %cst_40 {dimension_numbers = #tpu.dot_dimension_numbers<[1], [0], [0], [1], [0, 0, 1, 1], [], []>} : vector<32x128xbf16>, vector<128x512xbf16>, vector<32x512xf32> -> vector<32x512xf32>
    %c0_41 = arith.constant 0 : index
    %c0_42 = arith.constant 0 : index
    %129 = vector.load %arg8[%c0_41, %c0_42] : memref<1x512xf32, #tpu.memory_space<vmem>>, vector<1x512xf32>
    %130 = vector.broadcast %129 : vector<1x512xf32> to vector<32x512xf32>
    %131 = arith.addf %128, %130 : vector<32x512xf32>
    %132 = arith.truncf %131 : vector<32x512xf32> to vector<32x512xbf16>
    %cst_43 = arith.constant 5.000000e-01 : bf16
    %133 = vector.broadcast %cst_43 : bf16 to vector<32x512xbf16>
    %134 = arith.mulf %133, %132 : vector<32x512xbf16>
    %cst_44 = arith.constant 4.467770e-02 : bf16
    %135 = vector.broadcast %cst_44 : bf16 to vector<32x512xbf16>
    %136 = arith.mulf %135, %132 : vector<32x512xbf16>
    %137 = arith.mulf %136, %132 : vector<32x512xbf16>
    %138 = arith.mulf %137, %132 : vector<32x512xbf16>
    %139 = arith.addf %132, %138 : vector<32x512xbf16>
    %cst_45 = arith.constant 7.968750e-01 : bf16
    %140 = vector.broadcast %cst_45 : bf16 to vector<32x512xbf16>
    %141 = arith.mulf %140, %139 : vector<32x512xbf16>
    %142 = math.tanh %141 : vector<32x512xbf16>
    %cst_46 = arith.constant 1.000000e+00 : bf16
    %143 = vector.broadcast %cst_46 : bf16 to vector<32x512xbf16>
    %144 = arith.addf %143, %142 : vector<32x512xbf16>
    %145 = arith.mulf %134, %144 : vector<32x512xbf16>
    %c0_47 = arith.constant 0 : index
    %c0_48 = arith.constant 0 : index
    %146 = vector.load %arg9[%c0_47, %c0_48] : memref<512x128xbf16, #tpu.memory_space<vmem>>, vector<512x128xbf16>
    %cst_49 = arith.constant dense<0.000000e+00> : vector<32x128xf32>
    %147 = tpu.matmul %145, %146, %cst_49 {dimension_numbers = #tpu.dot_dimension_numbers<[1], [0], [0], [1], [0, 0, 1, 1], [], []>} : vector<32x512xbf16>, vector<512x128xbf16>, vector<32x128xf32> -> vector<32x128xf32>
    %c0_50 = arith.constant 0 : index
    %c0_51 = arith.constant 0 : index
    %148 = vector.load %arg10[%c0_50, %c0_51] : memref<1x128xf32, #tpu.memory_space<vmem>>, vector<1x128xf32>
    %149 = vector.broadcast %148 : vector<1x128xf32> to vector<32x128xf32>
    %150 = arith.addf %147, %149 : vector<32x128xf32>
    %151 = arith.addf %150, %125 : vector<32x128xf32>
    %152 = vector.shape_cast %151 : vector<32x128xf32> to vector<2x16x128xf32>
    %153 = arith.truncf %152 : vector<2x16x128xf32> to vector<2x16x128xbf16>
    %c0_52 = arith.constant 0 : index
    %c0_53 = arith.constant 0 : index
    %c0_54 = arith.constant 0 : index
    %154 = vector.load %arg11[%c0_52, %c0_53, %c0_54] : memref<2x16x128xbf16, #tpu.memory_space<vmem>>, vector<2x16x128xbf16>
    tpu.vector_store %arg11[%c0_52, %c0_53, %c0_54], %153 {strides = array<i32>} : memref<2x16x128xbf16, #tpu.memory_space<vmem>>, vector<2x16x128xbf16>,
    return
  }
  func.func @transform_0(%arg0: i32) -> (i32, i32, i32) {
    %c0_i32 = arith.constant 0 : i32
    %c0_i32_0 = arith.constant 0 : i32
    %c0_i32_1 = arith.constant 0 : i32
    return %arg0, %c0_i32, %c0_i32_0 : i32, i32, i32
  }
  func.func @transform_1(%arg0: i32) -> (i32, i32) {
    %c0_i32 = arith.constant 0 : i32
    %c0_i32_0 = arith.constant 0 : i32
    %c0_i32_1 = arith.constant 0 : i32
    return %c0_i32, %c0_i32_0 : i32, i32
  }
  func.func @transform_2(%arg0: i32) -> (i32, i32) {
    %c0_i32 = arith.constant 0 : i32
    %c0_i32_0 = arith.constant 0 : i32
    %c0_i32_1 = arith.constant 0 : i32
    return %c0_i32, %c0_i32_0 : i32, i32
  }
  func.func @transform_3(%arg0: i32) -> (i32, i32) {
    %c0_i32 = arith.constant 0 : i32
    %c0_i32_0 = arith.constant 0 : i32
    %c0_i32_1 = arith.constant 0 : i32
    return %c0_i32, %c0_i32_0 : i32, i32
  }
  func.func @transform_4(%arg0: i32) -> (i32, i32) {
    %c0_i32 = arith.constant 0 : i32
    %c0_i32_0 = arith.constant 0 : i32
    %c0_i32_1 = arith.constant 0 : i32
    return %c0_i32, %c0_i32_0 : i32, i32
  }
  func.func @transform_5(%arg0: i32) -> (i32, i32) {
    %c0_i32 = arith.constant 0 : i32
    %c0_i32_0 = arith.constant 0 : i32
    %c0_i32_1 = arith.constant 0 : i32
    return %c0_i32, %c0_i32_0 : i32, i32
  }
  func.func @transform_6(%arg0: i32) -> (i32, i32) {
    %c0_i32 = arith.constant 0 : i32
    %c0_i32_0 = arith.constant 0 : i32
    %c0_i32_1 = arith.constant 0 : i32
    return %c0_i32, %c0_i32_0 : i32, i32
  }
  func.func @transform_7(%arg0: i32) -> (i32, i32) {
    %c0_i32 = arith.constant 0 : i32
    %c0_i32_0 = arith.constant 0 : i32
    %c0_i32_1 = arith.constant 0 : i32
    return %c0_i32, %c0_i32_0 : i32, i32
  }
  func.func @transform_8(%arg0: i32) -> (i32, i32) {
    %c0_i32 = arith.constant 0 : i32
    %c0_i32_0 = arith.constant 0 : i32
    %c0_i32_1 = arith.constant 0 : i32
    return %c0_i32, %c0_i32_0 : i32, i32
  }
  func.func @transform_9(%arg0: i32) -> (i32, i32) {
    %c0_i32 = arith.constant 0 : i32
    %c0_i32_0 = arith.constant 0 : i32
    %c0_i32_1 = arith.constant 0 : i32
    return %c0_i32, %c0_i32_0 : i32, i32
  }
  func.func @transform_10(%arg0: i32) -> (i32, i32, i32) {
    %c0_i32 = arith.constant 0 : i32
    %c0_i32_0 = arith.constant 0 : i32
    %c0_i32_1 = arith.constant 0 : i32
    return %arg0, %c0_i32, %c0_i32_0 : i32, i32, i32
  }
}

</mosaic_0001>

<llo_original>
// kernel: longnet_forward.5
$region0: #{longnet_forward.5}
  #allocation0 [shape = 'u32[]', space=smem, size = 0x4, offset = 0x4, fixed_abs, tag = 'smem constant byte address 0x4 - core index']
  #allocation1 [shape = 'u32[144,128]{1,0:T(1,128)}', space=vmem, size = 0x12000, scoped, tag = 'internal scratch']
  #allocation2 [shape = 'bf16[64,128]{1,0:T(16,128)(2,1)}', space=vmem, size = 0x4000, scoped, tag = 'scratch operand']
  %s0 = inlined_call_operand.vmem [shape: bf16[64,128], index: 0, kind: input, shape index: {}]
  %s1 = inlined_call_operand.vmem [shape: f32[1,128], index: 1, kind: input, shape index: {}]
  %s2 = inlined_call_operand.vmem [shape: bf16[128,256], index: 2, kind: input, shape index: {}]
  %s3 = inlined_call_operand.vmem [shape: f32[1,256], index: 3, kind: input, shape index: {}]
  %s4 = inlined_call_operand.hbm [shape: f32[64,256], index: 4, kind: output, shape index: {}]
  %s5 = sld [smem:[#allocation0]]
  $region30: #{longnet_forward.5} parent=0
    _
  %s7 = ssub.s32 1, %s5
  %s8 = scalar_select 0, %s7, %s5
  $region1: #{longnet_forward.5} parent=0
    #allocation3 [shape = 'u8[65536]{0}', space=vmem, size = 0x10000, scoped, tag = 'output window, operand 0, single buffered']
    #allocation4 [shape = 's32[1]{0}', space=sflag, size = 0x4, scoped, tag = 'scoped memory for longnet_forward.5']
    %9 = vsyncpa [#allocation4], 0
    // Predicated region
    $region2: #{longnet_forward.5} parent=1 // pred_check
      _
    $region3: #{longnet_forward.5} parent=1 // pred_check_branch
      %11 = sbr.rel (0) target = $region5
    $region4: #{longnet_forward.5} parent=1 // pred_region
      _
    $region5: #{longnet_forward.5} parent=1 // pred_fallthru
      _
    // Predicated region
    $region6: #{longnet_forward.5} parent=1 // pred_check
      _
    $region7: #{longnet_forward.5} parent=1 // pred_check_branch
      %13 = sbr.rel (0) target = $region9
    $region8: #{longnet_forward.5} parent=1 // pred_region
      _
    $region9: #{longnet_forward.5} parent=1 // pred_fallthru
      _
    // Predicated region
    $region10: #{longnet_forward.5} parent=1 // pred_check
      _
    $region11: #{longnet_forward.5} parent=1 // pred_check_branch
      %15 = sbr.rel (0) target = $region13
    $region12: #{longnet_forward.5} parent=1 // pred_region
      _
    $region13: #{longnet_forward.5} parent=1 // pred_fallthru
      _
    // Predicated region
    $region14: #{longnet_forward.5} parent=1 // pred_check
      _
    $region15: #{longnet_forward.5} parent=1 // pred_check_branch
      %17 = sbr.rel (0) target = $region17
    $region16: #{longnet_forward.5} parent=1 // pred_region
      _
    $region17: #{longnet_forward.5} parent=1 // pred_fallthru
      _
    %p19 = scmp.eq.s32.totalorder 0, 0
    // Predicated region
    $region18: #{longnet_forward.5} parent=1 // pred_check
      %p20 = pneg %p19
    $region19: #{longnet_forward.5} parent=1 // pred_check_branch
      %22 = sbr.rel (%p20) target = $region21
    $region20: #{longnet_forward.5} parent=1 // pred_region
      %v23 = vld [vmem:[%s0] sm:$0xf]
      %v24 = vld [vmem:[%s0 + $0x4] sm:$0xf]
      %v25 = vld [vmem:[%s0 + $0x8] sm:$0xf]
      %v26 = vld [vmem:[%s0 + $0xc] sm:$0xf]
      %v27 = vld [vmem:[%s0 + $0x10] sm:$0xf]
      %v28 = vld [vmem:[%s0 + $0x14] sm:$0xf]
      %v29 = vld [vmem:[%s0 + $0x18] sm:$0xf]
      %v30 = vld [vmem:[%s0 + $0x1c] sm:$0xf]
      %v31 = vunpack.c.l.bf16 %v23
      %v32 = vunpack.c.l.bf16 %v24
      %v33 = vunpack.c.l.bf16 %v25
      %v34 = vunpack.c.l.bf16 %v26
      %v35 = vunpack.c.l.bf16 %v27
      %v36 = vunpack.c.l.bf16 %v28
      %v37 = vunpack.c.l.bf16 %v29
      %v38 = vunpack.c.l.bf16 %v30
      %v39 = vmul.f32 %v31, %v31
      %v40 = vmul.f32 %v32, %v32
      %v41 = vmul.f32 %v33, %v33
      %v42 = vmul.f32 %v34, %v34
      %v43 = vmul.f32 %v35, %v35
      %v44 = vmul.f32 %v36, %v36
      %v45 = vmul.f32 %v37, %v37
      %v46 = vmul.f32 %v38, %v38
      %47 = vadd.xlane.f32.xlu0 %v39
      %v48 = vpop.xlane.xlu0 %47
      %49 = vadd.xlane.f32.xlu0 %v40
      %v50 = vpop.xlane.xlu0 %49
      %51 = vadd.xlane.f32.xlu0 %v41
      %v52 = vpop.xlane.xlu0 %51
      %53 = vadd.xlane.f32.xlu0 %v42
      %v54 = vpop.xlane.xlu0 %53
      %55 = vadd.xlane.f32.xlu0 %v43
      %v56 = vpop.xlane.xlu0 %55
      %57 = vadd.xlane.f32.xlu0 %v44
      %v58 = vpop.xlane.xlu0 %57
      %59 = vadd.xlane.f32.xlu0 %v45
      %v60 = vpop.xlane.xlu0 %59
      %61 = vadd.xlane.f32.xlu0 %v46
      %v62 = vpop.xlane.xlu0 %61
      %v63 = vrsqrt.pop %v48
      %v64 = vmul.f32 %v48, %v63
      %vm65 = vcmp.eq.f32.partialorder %v48, inf
      %v66 = vsel %vm65, %v48, %v64
      %vm67 = vcmp.eq.f32.partialorder %v48, 0.0
      %v68 = vand.u32 %v48, 2147483648
      %v69 = vsel %vm67, %v68, %v66
      %v70 = vrsqrt.pop %v50
      %v71 = vmul.f32 %v50, %v70
      %vm72 = vcmp.eq.f32.partialorder %v50, inf
      %v73 = vsel %vm72, %v50, %v71
      %vm74 = vcmp.eq.f32.partialorder %v50, 0.0
      %v75 = vand.u32 %v50, 2147483648
      %v76 = vsel %vm74, %v75, %v73
      %v77 = vrsqrt.pop %v52
      %v78 = vmul.f32 %v52, %v77
      %vm79 = vcmp.eq.f32.partialorder %v52, inf
      %v80 = vsel %vm79, %v52, %v78
      %vm81 = vcmp.eq.f32.partialorder %v52, 0.0
      %v82 = vand.u32 %v52, 2147483648
      %v83 = vsel %vm81, %v82, %v80
      %v84 = vrsqrt.pop %v54
      %v85 = vmul.f32 %v54, %v84
      %vm86 = vcmp.eq.f32.partialorder %v54, inf
      %v87 = vsel %vm86, %v54, %v85
      %vm88 = vcmp.eq.f32.partialorder %v54, 0.0
      %v89 = vand.u32 %v54, 2147483648
      %v90 = vsel %vm88, %v89, %v87
      %v91 = vrsqrt.pop %v56
      %v92 = vmul.f32 %v56, %v91
      %vm93 = vcmp.eq.f32.partialorder %v56, inf
      %v94 = vsel %vm93, %v56, %v92
      %vm95 = vcmp.eq.f32.partialorder %v56, 0.0
      %v96 = vand.u32 %v56, 2147483648
      %v97 = vsel %vm95, %v96, %v94
      %v98 = vrsqrt.pop %v58
      %v99 = vmul.f32 %v58, %v98
      %vm100 = vcmp.eq.f32.partialorder %v58, inf
      %v101 = vsel %vm100, %v58, %v99
      %vm102 = vcmp.eq.f32.partialorder %v58, 0.0
      %v103 = vand.u32 %v58, 2147483648
      %v104 = vsel %vm102, %v103, %v101
      %v105 = vrsqrt.pop %v60
      %v106 = vmul.f32 %v60, %v105
      %vm107 = vcmp.eq.f32.partialorder %v60, inf
      %v108 = vsel %vm107, %v60, %v106
      %vm109 = vcmp.eq.f32.partialorder %v60, 0.0
      %v110 = vand.u32 %v60, 2147483648
      %v111 = vsel %vm109, %v110, %v108
      %v112 = vrsqrt.pop %v62
      %v113 = vmul.f32 %v62, %v112
      %vm114 = vcmp.eq.f32.partialorder %v62, inf
      %v115 = vsel %vm114, %v62, %v113
      %vm116 = vcmp.eq.f32.partialorder %v62, 0.0
      %v117 = vand.u32 %v62, 2147483648
      %v118 = vsel %vm116, %v117, %v115
      %v119 = vmax.f32 %v69, 1e-12
      %v120 = vmax.f32 %v76, 1e-12
      %v121 = vmax.f32 %v83, 1e-12
      %v122 = vmax.f32 %v90, 1e-12
      %v123 = vmax.f32 %v97, 1e-12
      %v124 = vmax.f32 %v104, 1e-12
      %v125 = vmax.f32 %v111, 1e-12
      %v126 = vmax.f32 %v118, 1e-12
      %v127 = vrcp.pop %v119
      %v128 = vmul.f32 %v31, %v127
      %v129 = vrcp.pop %v120
      %v130 = vmul.f32 %v32, %v129
      %v131 = vrcp.pop %v121
      %v132 = vmul.f32 %v33, %v131
      %v133 = vrcp.pop %v122
      %v134 = vmul.f32 %v34, %v133
      %v135 = vrcp.pop %v123
      %v136 = vmul.f32 %v35, %v135
      %v137 = vrcp.pop %v124
      %v138 = vmul.f32 %v36, %v137
      %v139 = vrcp.pop %v125
      %v140 = vmul.f32 %v37, %v139
      %v141 = vrcp.pop %v126
      %v142 = vmul.f32 %v38, %v141
      %v143 = vmul.f32 %v128, 11.313708
      %v144 = vmul.f32 %v130, 11.313708
      %v145 = vmul.f32 %v132, 11.313708
      %v146 = vmul.f32 %v134, 11.313708
      %v147 = vmul.f32 %v136, 11.313708
      %v148 = vmul.f32 %v138, 11.313708
      %v149 = vmul.f32 %v140, 11.313708
      %v150 = vmul.f32 %v142, 11.313708
      %v151 = vld [vmem:[%s1] sm:$0x1]
      %v153 = vlaneseq
      %v154 = vshrl.u32 %v153, 7
      %v155 = vsub.s32 0, %v154
      %v156 = vrot.slane %v151, %v155
      %v158 = vmul.f32 %v143, %v156
      %v159 = vmul.f32 %v144, %v156
      %v160 = vmul.f32 %v145, %v156
      %v161 = vmul.f32 %v146, %v156
      %v162 = vmul.f32 %v147, %v156
      %v163 = vmul.f32 %v148, %v156
      %v164 = vmul.f32 %v149, %v156
      %v165 = vmul.f32 %v150, %v156
      %v166 = vpack.c.bf16 %v159, %v158
      %v167 = vpack.c.bf16 %v161, %v160
      %v168 = vpack.c.bf16 %v163, %v162
      %v169 = vpack.c.bf16 %v165, %v164
      %170 = vst [vmem:[#allocation2] sm:$0xff] %v166
      %171 = vst [vmem:[#allocation2 + $0x8] sm:$0xff] %v167
      %172 = vst [vmem:[#allocation2 + $0x10] sm:$0xff] %v168
      %173 = vst [vmem:[#allocation2 + $0x18] sm:$0xff] %v169
    $region21: #{longnet_forward.5} parent=1 // pred_fallthru
      _
    %v174 = vld [vmem:[#allocation2] sm:$0xff]
    %v175 = vld [vmem:[#allocation2 + $0x8] sm:$0xff]
    %v176 = vld [vmem:[#allocation2 + $0x10] sm:$0xff]
    %v177 = vld [vmem:[#allocation2 + $0x18] sm:$0xff]
    %v178 = vld [vmem:[%s2] sm:$0xff]
    %v179 = vld [vmem:[%s2 + $0x8] sm:$0xff]
    %v180 = vld [vmem:[%s2 + $0x10] sm:$0xff]
    %v181 = vld [vmem:[%s2 + $0x18] sm:$0xff]
    %v182 = vld [vmem:[%s2 + $0x20] sm:$0xff]
    %v183 = vld [vmem:[%s2 + $0x28] sm:$0xff]
    %v184 = vld [vmem:[%s2 + $0x30] sm:$0xff]
    %v185 = vld [vmem:[%s2 + $0x38] sm:$0xff]
    %v186 = vld [vmem:[%s2 + $0x40] sm:$0xff]
    %v187 = vld [vmem:[%s2 + $0x48] sm:$0xff]
    %v188 = vld [vmem:[%s2 + $0x50] sm:$0xff]
    %v189 = vld [vmem:[%s2 + $0x58] sm:$0xff]
    %v190 = vld [vmem:[%s2 + $0x60] sm:$0xff]
    %v191 = vld [vmem:[%s2 + $0x68] sm:$0xff]
    %v192 = vld [vmem:[%s2 + $0x70] sm:$0xff]
    %v193 = vld [vmem:[%s2 + $0x78] sm:$0xff]
    %v194 = vld [vmem:[%s3] sm:$0x3]
    %v196 = vlaneseq
    %v197 = vshrl.u32 %v196, 7
    %v198 = vsub.s32 0, %v197
    %v199 = vrot.slane %v194, %v198
    %v200 = vlaneseq
    %v201 = vshrl.u32 %v200, 7
    %v202 = vsub.s32 1, %v201
    %v203 = vrot.slane %v194, %v202
    %v222 = vunpack.c.l.b16 %v178
    %v223 = vunpack.c.h.b16 %v178
    %v224 = vunpack.c.l.b16 %v179
    %v225 = vunpack.c.h.b16 %v179
    %v226 = vunpack.c.l.b16 %v180
    %v227 = vunpack.c.h.b16 %v180
    %v228 = vunpack.c.l.b16 %v181
    %v229 = vunpack.c.h.b16 %v181
    %v230 = vunpack.c.l.b16 %v182
    %v231 = vunpack.c.h.b16 %v182
    %v232 = vunpack.c.l.b16 %v183
    %v233 = vunpack.c.h.b16 %v183
    %v234 = vunpack.c.l.b16 %v184
    %v235 = vunpack.c.h.b16 %v184
    %v236 = vunpack.c.l.b16 %v185
    %v237 = vunpack.c.h.b16 %v185
    %v238 = vunpack.c.l.b16 %v186
    %v239 = vunpack.c.h.b16 %v186
    %v240 = vunpack.c.l.b16 %v187
    %v241 = vunpack.c.h.b16 %v187
    %v242 = vunpack.c.l.b16 %v188
    %v243 = vunpack.c.h.b16 %v188
    %v244 = vunpack.c.l.b16 %v189
    %v245 = vunpack.c.h.b16 %v189
    %v246 = vunpack.c.l.b16 %v190
    %v247 = vunpack.c.h.b16 %v190
    %v248 = vunpack.c.l.b16 %v191
    %v249 = vunpack.c.h.b16 %v191
    %v250 = vunpack.c.l.b16 %v192
    %v251 = vunpack.c.h.b16 %v192
    %v252 = vunpack.c.l.b16 %v193
    %v253 = vunpack.c.h.b16 %v193
    %v254 = vpack.c.b16 %v224, %v222
    %v255 = vpack.c.b16 %v225, %v223
    %v256 = vpack.c.b16 %v228, %v226
    %v257 = vpack.c.b16 %v229, %v227
    %v258 = vpack.c.b16 %v232, %v230
    %v259 = vpack.c.b16 %v233, %v231
    %v260 = vpack.c.b16 %v236, %v234
    %v261 = vpack.c.b16 %v237, %v235
    %v262 = vpack.c.b16 %v240, %v238
    %v263 = vpack.c.b16 %v241, %v239
    %v264 = vpack.c.b16 %v244, %v242
    %v265 = vpack.c.b16 %v245, %v243
    %v266 = vpack.c.b16 %v248, %v246
    %v267 = vpack.c.b16 %v249, %v247
    %v268 = vpack.c.b16 %v252, %v250
    %v269 = vpack.c.b16 %v253, %v251
    %286 = vmatprep.subr.bf16.mxu0 %v255
    %287 = vmatpush1.bf16.msra.mxu0 %v254
    %288 = vmatprep.subr.bf16.mxu0 %v257
    %289 = vmatpush1.bf16.msra.mxu0 %v256
    %290 = vmatprep.subr.bf16.mxu0 %v259
    %291 = vmatpush1.bf16.msra.mxu0 %v258
    %292 = vmatprep.subr.bf16.mxu0 %v261
    %293 = vmatpush1.bf16.msra.mxu0 %v260
    %294 = vmatprep.subr.bf16.mxu0 %v263
    %295 = vmatpush1.bf16.msra.mxu0 %v262
    %296 = vmatprep.subr.bf16.mxu0 %v265
    %297 = vmatpush1.bf16.msra.mxu0 %v264
    %298 = vmatprep.subr.bf16.mxu0 %v267
    %299 = vmatpush1.bf16.msra.mxu0 %v266
    %300 = vmatprep.subr.bf16.mxu0 %v269
    %301 = vmatpush1.bf16.msra.mxu0 %v268
    %302 = vmatprep.subr.bf16.mxu0 0
    %303 = vmatpush1.bf16.msra.mxu0 0
    %304 = vmatprep.subr.bf16.mxu0 0
    %305 = vmatpush1.bf16.msra.mxu0 0
    %306 = vmatprep.subr.bf16.mxu0 0
    %307 = vmatpush1.bf16.msra.mxu0 0
    %308 = vmatprep.subr.bf16.mxu0 0
    %309 = vmatpush1.bf16.msra.mxu0 0
    %310 = vmatprep.subr.bf16.mxu0 0
    %311 = vmatpush1.bf16.msra.mxu0 0
    %312 = vmatprep.subr.bf16.mxu0 0
    %313 = vmatpush1.bf16.msra.mxu0 0
    %314 = vmatprep.subr.bf16.mxu0 0
    %315 = vmatpush1.bf16.msra.mxu0 0
    %316 = vmatprep.subr.bf16.mxu0 0
    %317 = vmatpush1.bf16.msra.mxu0 0
    %318 = vmatprep.mubr.bf16.mxu0 0
    %319 = vmatmul.mubr.bf16.gmra.mrb[0].mxu0 %v174
    %v320 = vpop.f32.mrb[0].mxu0
    %v321 = vadd.f32 %v199, %v320
    %v322 = vpop.f32.mrb[0].mxu0
    %v323 = vadd.f32 %v203, %v322
    %v324 = vpop.f32.mrb[0].mxu0
    %v325 = vadd.f32 %v199, %v324
    %v326 = vpop.f32.mrb[0].mxu0
    %v327 = vadd.f32 %v203, %v326
    %328 = vmatprep.mubr.bf16.mxu0 0
    %329 = vmatmul.mubr.bf16.gmra.mrb[0].mxu0 %v175
    %v330 = vpop.f32.mrb[0].mxu0
    %v331 = vadd.f32 %v199, %v330
    %v332 = vpop.f32.mrb[0].mxu0
    %v333 = vadd.f32 %v203, %v332
    %v334 = vpop.f32.mrb[0].mxu0
    %v335 = vadd.f32 %v199, %v334
    %v336 = vpop.f32.mrb[0].mxu0
    %v337 = vadd.f32 %v203, %v336
    %338 = vmatprep.mubr.bf16.mxu0 0
    %339 = vmatmul.mubr.bf16.gmra.mrb[0].mxu0 %v176
    %v340 = vpop.f32.mrb[0].mxu0
    %v341 = vadd.f32 %v199, %v340
    %v342 = vpop.f32.mrb[0].mxu0
    %v343 = vadd.f32 %v203, %v342
    %v344 = vpop.f32.mrb[0].mxu0
    %v345 = vadd.f32 %v199, %v344
    %v346 = vpop.f32.mrb[0].mxu0
    %v347 = vadd.f32 %v203, %v346
    %348 = vmatprep.mubr.bf16.mxu0 0
    %349 = vmatmul.mubr.bf16.gmra.mrb[0].mxu0 %v177
    %v350 = vpop.f32.mrb[0].mxu0
    %v351 = vadd.f32 %v199, %v350
    %v352 = vpop.f32.mrb[0].mxu0
    %v353 = vadd.f32 %v203, %v352
    %v354 = vpop.f32.mrb[0].mxu0
    %v355 = vadd.f32 %v199, %v354
    %v356 = vpop.f32.mrb[0].mxu0
    %v357 = vadd.f32 %v203, %v356
    %358 = vdwg.mxu0
    %359 = vst [vmem:[#allocation3] sm:$0xff] %v321
    %360 = vst [vmem:[#allocation3 + $0x8] sm:$0xff] %v323
    %361 = vst [vmem:[#allocation3 + $0x10] sm:$0xff] %v325
    %362 = vst [vmem:[#allocation3 + $0x18] sm:$0xff] %v327
    %363 = vst [vmem:[#allocation3 + $0x20] sm:$0xff] %v331
    %364 = vst [vmem:[#allocation3 + $0x28] sm:$0xff] %v333
    %365 = vst [vmem:[#allocation3 + $0x30] sm:$0xff] %v335
    %366 = vst [vmem:[#allocation3 + $0x38] sm:$0xff] %v337
    %367 = vst [vmem:[#allocation3 + $0x40] sm:$0xff] %v341
    %368 = vst [vmem:[#allocation3 + $0x48] sm:$0xff] %v343
    %369 = vst [vmem:[#allocation3 + $0x50] sm:$0xff] %v345
    %370 = vst [vmem:[#allocation3 + $0x58] sm:$0xff] %v347
    %371 = vst [vmem:[#allocation3 + $0x60] sm:$0xff] %v351
    %372 = vst [vmem:[#allocation3 + $0x68] sm:$0xff] %v353
    %373 = vst [vmem:[#allocation3 + $0x70] sm:$0xff] %v355
    %374 = vst [vmem:[#allocation3 + $0x78] sm:$0xff] %v357
    // Predicated region
    $region22: #{longnet_forward.5} parent=1 // pred_check
      _
    $region23: #{longnet_forward.5} parent=1 // pred_check_branch
      %376 = sbr.rel (0) target = $region25
    $region24: #{longnet_forward.5} parent=1 // pred_region
      %s378 = ssub.s32 2048, 2048
      %379 = vsyncadd [#allocation4], %s378
      %s380 = sshll.u32 [#allocation3], 4
      %s381 = int_to_ptr.vmem [resolvable:$true] %s380
      %386 = dma.vmem_to_hbm [thread:$0]  %s381, 2048, %s4, [#allocation4], 256, 256, 16
    $region25: #{longnet_forward.5} parent=1 // pred_fallthru
      _
    // Predicated region
    $region26: #{longnet_forward.5} parent=1 // pred_check
      _
    $region27: #{longnet_forward.5} parent=1 // pred_check_branch
      %388 = sbr.rel (0) target = $region29
    $region28: #{longnet_forward.5} parent=1 // pred_region
      %389 = dma.done [#allocation4], 2048
    $region29: #{longnet_forward.5} parent=1 // pred_fallthru
      _
    %390 = vsyncpa [#allocation4], 1

// kernel: longnet_forward.4
$region0: #{longnet_forward.4}
  #allocation0 [shape = 'u32[]', space=smem, size = 0x4, offset = 0x4, fixed_abs, tag = 'smem constant byte address 0x4 - core index']
  #allocation1 [shape = 'u32[144,128]{1,0:T(1,128)}', space=vmem, size = 0x12000, scoped, tag = 'internal scratch']
  %s0 = inlined_call_operand.vmem [shape: bf16[4,16,128], index: 0, kind: input, shape index: {}]
  %s1 = inlined_call_operand.vmem [shape: f32[1,128], index: 1, kind: input, shape index: {}]
  %s2 = inlined_call_operand.vmem [shape: bf16[128,384], index: 2, kind: input, shape index: {}]
  %s3 = inlined_call_operand.vmem [shape: f32[1,384], index: 3, kind: input, shape index: {}]
  %s4 = inlined_call_operand.vmem [shape: f32[1,128], index: 4, kind: input, shape index: {}]
  %s5 = inlined_call_operand.vmem [shape: f32[1,128], index: 5, kind: input, shape index: {}]
  %s6 = inlined_call_operand.vmem [shape: bf16[128,512], index: 6, kind: input, shape index: {}]
  %s7 = inlined_call_operand.vmem [shape: f32[1,512], index: 7, kind: input, shape index: {}]
  %s8 = inlined_call_operand.vmem [shape: bf16[512,128], index: 8, kind: input, shape index: {}]
  %s9 = inlined_call_operand.vmem [shape: f32[1,128], index: 9, kind: input, shape index: {}]
  %s10 = inlined_call_operand.vmem [shape: bf16[4,16,128], index: 10, kind: output, shape index: {}]
  %s11 = sld [smem:[#allocation0]]
  $region73: #{longnet_forward.4} parent=0
    _
  %s13 = ssub.s32 1, %s11
  %s14 = scalar_select 0, %s13, %s11
  loop: start=0, step=1, limit=4
  $region2: #{longnet_forward.4} parent=0 // loop_pre_header
    _
  $region3: #{longnet_forward.4} parent=0 // loop_header
    %s16 = sphi 0, %s20
    %p17 = scmp.ge.s32.totalorder %s16, 4
    %s26 = sphi 0, %s28
    %s29 = sphi 0, %s26
    %s30 = sphi 0, %s29
    %s46 = sphi 0, %s30
    %s50 = sphi 0, %s50
    %s52 = sphi 0, %s50
    %s53 = sphi 0, %s52
    %s67 = sphi 0, %s53
    %s71 = sphi 0, %s71
    %s73 = sphi 0, %s71
    %s74 = sphi 0, %s73
    %s88 = sphi 0, %s74
    %s92 = sphi 0, %s92
    %s94 = sphi 0, %s92
    %s95 = sphi 0, %s94
    %s109 = sphi 0, %s95
    %s113 = sphi 0, %s113
    %s115 = sphi 0, %s113
    %s116 = sphi 0, %s115
    %s130 = sphi 0, %s116
    %s134 = sphi 0, %s134
    %s136 = sphi 0, %s134
    %s137 = sphi 0, %s136
    %s151 = sphi 0, %s137
    %s155 = sphi 0, %s155
    %s157 = sphi 0, %s155
    %s158 = sphi 0, %s157
    %s172 = sphi 0, %s158
    %s176 = sphi 0, %s176
    %s178 = sphi 0, %s176
    %s179 = sphi 0, %s178
    %s193 = sphi 0, %s179
    %s197 = sphi 0, %s197
    %s199 = sphi 0, %s197
    %s200 = sphi 0, %s199
    %s214 = sphi 0, %s200
    %s218 = sphi 0, %s218
    %s220 = sphi 0, %s218
    %s221 = sphi 0, %s220
    %s235 = sphi 0, %s221
    %s241 = sphi 0, %s243
    %s244 = sphi 0, %s241
    %s245 = sphi 0, %s244
    %s261 = sphi 0, %s245
  $region4: #{longnet_forward.4} parent=0 // loop_header_branch
    %19 = sbr.rel (%p17) target = $region8
  $region5: #{longnet_forward.4} parent=0 // loop_body
    %s21 = ssub.s32 %s16, 1
    %s22 = ssub.s32 %s16, 2
    %s23 = sadd.s32 %s16, 1
    %s24 = ssub.s32 %s16, %s23
    %p25 = scmp.eq.s32.totalorder %s24, 0
    %s27 = sadd.s32 %s26, 1
    %s28 = scalar_select %p25, %s26, %s27
    %p31 = pneg %p25
    %p32 = scmp.eq.s32.totalorder %s16, 1
    %p33 = por %p31, %p32
    %p34 = scmp.ne.s32.totalorder %s26, %s29
    %p35 = scmp.eq.s32.totalorder %s16, 0
    %p36 = por %p34, %p35
    %p37 = scmp.ne.s32.totalorder %s26, %s29
    %p38 = scmp.eq.s32.totalorder %s21, 1
    %p39 = por %p37, %p38
    %p40 = scmp.ne.s32.totalorder %s29, %s30
    %p41 = scmp.eq.s32.totalorder %s21, 0
    %p42 = por %p40, %p41
    %p43 = scmp.ne.s32.totalorder %s29, %s30
    %p44 = scmp.eq.s32.totalorder %s22, 1
    %p45 = por %p43, %p44
    %p47 = scmp.ne.s32.totalorder %s30, %s46
    %p48 = scmp.eq.s32.totalorder %s22, 0
    %p49 = por %p47, %p48
    %s51 = sadd.s32 %s50, 1
    %p54 = scmp.eq.s32.totalorder %s16, 1
    %p55 = scmp.ne.s32.totalorder %s50, %s52
    %p56 = scmp.eq.s32.totalorder %s16, 0
    %p57 = por %p55, %p56
    %p58 = scmp.ne.s32.totalorder %s50, %s52
    %p59 = scmp.eq.s32.totalorder %s21, 1
    %p60 = por %p58, %p59
    %p61 = scmp.ne.s32.totalorder %s52, %s53
    %p62 = scmp.eq.s32.totalorder %s21, 0
    %p63 = por %p61, %p62
    %p64 = scmp.ne.s32.totalorder %s52, %s53
    %p65 = scmp.eq.s32.totalorder %s22, 1
    %p66 = por %p64, %p65
    %p68 = scmp.ne.s32.totalorder %s53, %s67
    %p69 = scmp.eq.s32.totalorder %s22, 0
    %p70 = por %p68, %p69
    %s72 = sadd.s32 %s71, 1
    %p75 = scmp.eq.s32.totalorder %s16, 1
    %p76 = scmp.ne.s32.totalorder %s71, %s73
    %p77 = scmp.eq.s32.totalorder %s16, 0
    %p78 = por %p76, %p77
    %p79 = scmp.ne.s32.totalorder %s71, %s73
    %p80 = scmp.eq.s32.totalorder %s21, 1
    %p81 = por %p79, %p80
    %p82 = scmp.ne.s32.totalorder %s73, %s74
    %p83 = scmp.eq.s32.totalorder %s21, 0
    %p84 = por %p82, %p83
    %p85 = scmp.ne.s32.totalorder %s73, %s74
    %p86 = scmp.eq.s32.totalorder %s22, 1
    %p87 = por %p85, %p86
    %p89 = scmp.ne.s32.totalorder %s74, %s88
    %p90 = scmp.eq.s32.totalorder %s22, 0
    %p91 = por %p89, %p90
    %s93 = sadd.s32 %s92, 1
    %p96 = scmp.eq.s32.totalorder %s16, 1
    %p97 = scmp.ne.s32.totalorder %s92, %s94
    %p98 = scmp.eq.s32.totalorder %s16, 0
    %p99 = por %p97, %p98
    %p100 = scmp.ne.s32.totalorder %s92, %s94
    %p101 = scmp.eq.s32.totalorder %s21, 1
    %p102 = por %p100, %p101
    %p103 = scmp.ne.s32.totalorder %s94, %s95
    %p104 = scmp.eq.s32.totalorder %s21, 0
    %p105 = por %p103, %p104
    %p106 = scmp.ne.s32.totalorder %s94, %s95
    %p107 = scmp.eq.s32.totalorder %s22, 1
    %p108 = por %p106, %p107
    %p110 = scmp.ne.s32.totalorder %s95, %s109
    %p111 = scmp.eq.s32.totalorder %s22, 0
    %p112 = por %p110, %p111
    %s114 = sadd.s32 %s113, 1
    %p117 = scmp.eq.s32.totalorder %s16, 1
    %p118 = scmp.ne.s32.totalorder %s113, %s115
    %p119 = scmp.eq.s32.totalorder %s16, 0
    %p120 = por %p118, %p119
    %p121 = scmp.ne.s32.totalorder %s113, %s115
    %p122 = scmp.eq.s32.totalorder %s21, 1
    %p123 = por %p121, %p122
    %p124 = scmp.ne.s32.totalorder %s115, %s116
    %p125 = scmp.eq.s32.totalorder %s21, 0
    %p126 = por %p124, %p125
    %p127 = scmp.ne.s32.totalorder %s115, %s116
    %p128 = scmp.eq.s32.totalorder %s22, 1
    %p129 = por %p127, %p128
    %p131 = scmp.ne.s32.totalorder %s116, %s130
    %p132 = scmp.eq.s32.totalorder %s22, 0
    %p133 = por %p131, %p132
    %s135 = sadd.s32 %s134, 1
    %p138 = scmp.eq.s32.totalorder %s16, 1
    %p139 = scmp.ne.s32.totalorder %s134, %s136
    %p140 = scmp.eq.s32.totalorder %s16, 0
    %p141 = por %p139, %p140
    %p142 = scmp.ne.s32.totalorder %s134, %s136
    %p143 = scmp.eq.s32.totalorder %s21, 1
    %p144 = por %p142, %p143
    %p145 = scmp.ne.s32.totalorder %s136, %s137
    %p146 = scmp.eq.s32.totalorder %s21, 0
    %p147 = por %p145, %p146
    %p148 = scmp.ne.s32.totalorder %s136, %s137
    %p149 = scmp.eq.s32.totalorder %s22, 1
    %p150 = por %p148, %p149
    %p152 = scmp.ne.s32.totalorder %s137, %s151
    %p153 = scmp.eq.s32.totalorder %s22, 0
    %p154 = por %p152, %p153
    %s156 = sadd.s32 %s155, 1
    %p159 = scmp.eq.s32.totalorder %s16, 1
    %p160 = scmp.ne.s32.totalorder %s155, %s157
    %p161 = scmp.eq.s32.totalorder %s16, 0
    %p162 = por %p160, %p161
    %p163 = scmp.ne.s32.totalorder %s155, %s157
    %p164 = scmp.eq.s32.totalorder %s21, 1
    %p165 = por %p163, %p164
    %p166 = scmp.ne.s32.totalorder %s157, %s158
    %p167 = scmp.eq.s32.totalorder %s21, 0
    %p168 = por %p166, %p167
    %p169 = scmp.ne.s32.totalorder %s157, %s158
    %p170 = scmp.eq.s32.totalorder %s22, 1
    %p171 = por %p169, %p170
    %p173 = scmp.ne.s32.totalorder %s158, %s172
    %p174 = scmp.eq.s32.totalorder %s22, 0
    %p175 = por %p173, %p174
    %s177 = sadd.s32 %s176, 1
    %p180 = scmp.eq.s32.totalorder %s16, 1
    %p181 = scmp.ne.s32.totalorder %s176, %s178
    %p182 = scmp.eq.s32.totalorder %s16, 0
    %p183 = por %p181, %p182
    %p184 = scmp.ne.s32.totalorder %s176, %s178
    %p185 = scmp.eq.s32.totalorder %s21, 1
    %p186 = por %p184, %p185
    %p187 = scmp.ne.s32.totalorder %s178, %s179
    %p188 = scmp.eq.s32.totalorder %s21, 0
    %p189 = por %p187, %p188
    %p190 = scmp.ne.s32.totalorder %s178, %s179
    %p191 = scmp.eq.s32.totalorder %s22, 1
    %p192 = por %p190, %p191
    %p194 = scmp.ne.s32.totalorder %s179, %s193
    %p195 = scmp.eq.s32.totalorder %s22, 0
    %p196 = por %p194, %p195
    %s198 = sadd.s32 %s197, 1
    %p201 = scmp.eq.s32.totalorder %s16, 1
    %p202 = scmp.ne.s32.totalorder %s197, %s199
    %p203 = scmp.eq.s32.totalorder %s16, 0
    %p204 = por %p202, %p203
    %p205 = scmp.ne.s32.totalorder %s197, %s199
    %p206 = scmp.eq.s32.totalorder %s21, 1
    %p207 = por %p205, %p206
    %p208 = scmp.ne.s32.totalorder %s199, %s200
    %p209 = scmp.eq.s32.totalorder %s21, 0
    %p210 = por %p208, %p209
    %p211 = scmp.ne.s32.totalorder %s199, %s200
    %p212 = scmp.eq.s32.totalorder %s22, 1
    %p213 = por %p211, %p212
    %p215 = scmp.ne.s32.totalorder %s200, %s214
    %p216 = scmp.eq.s32.totalorder %s22, 0
    %p217 = por %p215, %p216
    %s219 = sadd.s32 %s218, 1
    %p222 = scmp.eq.s32.totalorder %s16, 1
    %p223 = scmp.ne.s32.totalorder %s218, %s220
    %p224 = scmp.eq.s32.totalorder %s16, 0
    %p225 = por %p223, %p224
    %p226 = scmp.ne.s32.totalorder %s218, %s220
    %p227 = scmp.eq.s32.totalorder %s21, 1
    %p228 = por %p226, %p227
    %p229 = scmp.ne.s32.totalorder %s220, %s221
    %p230 = scmp.eq.s32.totalorder %s21, 0
    %p231 = por %p229, %p230
    %p232 = scmp.ne.s32.totalorder %s220, %s221
    %p233 = scmp.eq.s32.totalorder %s22, 1
    %p234 = por %p232, %p233
    %p236 = scmp.ne.s32.totalorder %s221, %s235
    %p237 = scmp.eq.s32.totalorder %s22, 0
    %p238 = por %p236, %p237
    %s239 = ssub.s32 %s16, %s23
    %p240 = scmp.eq.s32.totalorder %s239, 0
    %s242 = sadd.s32 %s241, 1
    %s243 = scalar_select %p240, %s241, %s242
    %p246 = pneg %p240
    %p247 = scmp.eq.s32.totalorder %s16, 1
    %p248 = por %p246, %p247
    %p249 = scmp.ne.s32.totalorder %s241, %s244
    %p250 = scmp.eq.s32.totalorder %s16, 0
    %p251 = por %p249, %p250
    %p252 = scmp.ne.s32.totalorder %s241, %s244
    %p253 = scmp.eq.s32.totalorder %s21, 1
    %p254 = por %p252, %p253
    %p255 = scmp.ne.s32.totalorder %s244, %s245
    %p256 = scmp.eq.s32.totalorder %s21, 0
    %p257 = por %p255, %p256
    %p258 = scmp.ne.s32.totalorder %s244, %s245
    %p259 = scmp.eq.s32.totalorder %s22, 1
    %p260 = por %p258, %p259
    %p262 = scmp.ne.s32.totalorder %s245, %s261
    %p263 = scmp.eq.s32.totalorder %s22, 0
    %p264 = por %p262, %p263
    %p265 = scmp.le.s32.totalorder 1, %s16
    %p266 = scmp.lt.s32.totalorder %s16, 3
    %p267 = pnand %p265, %p266
    %p268 = pneg %p267
    // Predicated region
    $region9: #{longnet_forward.4} parent=5 // pred_check
      _
    $region10: #{longnet_forward.4} parent=5 // pred_check_branch
      %270 = sbr.rel (%p267) target = $region12
    $region11: #{longnet_forward.4} parent=5 // pred_region
      %s271 = ssub.s32 %s16, 1
      // Predicated region
      $region13: #{longnet_forward.4} parent=11 // pred_check
        %p272 = pneg %p63
      $region14: #{longnet_forward.4} parent=11 // pred_check_branch
        %274 = sbr.rel (%p272) target = $region16
      $region15: #{longnet_forward.4} parent=11 // pred_region
        _
      $region16: #{longnet_forward.4} parent=11 // pred_fallthru
        _
      // Predicated region
      $region17: #{longnet_forward.4} parent=11 // pred_check
        %p275 = pneg %p84
      $region18: #{longnet_forward.4} parent=11 // pred_check_branch
        %277 = sbr.rel (%p275) target = $region20
      $region19: #{longnet_forward.4} parent=11 // pred_region
        _
      $region20: #{longnet_forward.4} parent=11 // pred_fallthru
        _
      // Predicated region
      $region21: #{longnet_forward.4} parent=11 // pred_check
        %p278 = pneg %p105
      $region22: #{longnet_forward.4} parent=11 // pred_check_branch
        %280 = sbr.rel (%p278) target = $region24
      $region23: #{longnet_forward.4} parent=11 // pred_region
        _
      $region24: #{longnet_forward.4} parent=11 // pred_fallthru
        _
      // Predicated region
      $region25: #{longnet_forward.4} parent=11 // pred_check
        %p281 = pneg %p126
      $region26: #{longnet_forward.4} parent=11 // pred_check_branch
        %283 = sbr.rel (%p281) target = $region28
      $region27: #{longnet_forward.4} parent=11 // pred_region
        _
      $region28: #{longnet_forward.4} parent=11 // pred_fallthru
        _
      // Predicated region
      $region29: #{longnet_forward.4} parent=11 // pred_check
        %p284 = pneg %p147
      $region30: #{longnet_forward.4} parent=11 // pred_check_branch
        %286 = sbr.rel (%p284) target = $region32
      $region31: #{longnet_forward.4} parent=11 // pred_region
        _
      $region32: #{longnet_forward.4} parent=11 // pred_fallthru
        _
      // Predicated region
      $region33: #{longnet_forward.4} parent=11 // pred_check
        %p287 = pneg %p168
      $region34: #{longnet_forward.4} parent=11 // pred_check_branch
        %289 = sbr.rel (%p287) target = $region36
      $region35: #{longnet_forward.4} parent=11 // pred_region
        _
      $region36: #{longnet_forward.4} parent=11 // pred_fallthru
        _
      // Predicated region
      $region37: #{longnet_forward.4} parent=11 // pred_check
        %p290 = pneg %p189
      $region38: #{longnet_forward.4} parent=11 // pred_check_branch
        %292 = sbr.rel (%p290) target = $region40
      $region39: #{longnet_forward.4} parent=11 // pred_region
        _
      $region40: #{longnet_forward.4} parent=11 // pred_fallthru
        _
      // Predicated region
      $region41: #{longnet_forward.4} parent=11 // pred_check
        %p293 = pneg %p210
      $region42: #{longnet_forward.4} parent=11 // pred_check_branch
        %295 = sbr.rel (%p293) target = $region44
      $region43: #{longnet_forward.4} parent=11 // pred_region
        _
      $region44: #{longnet_forward.4} parent=11 // pred_fallthru
        _
      // Predicated region
      $region45: #{longnet_forward.4} parent=11 // pred_check
        %p296 = pneg %p231
      $region46: #{longnet_forward.4} parent=11 // pred_check_branch
        %298 = sbr.rel (%p296) target = $region48
      $region47: #{longnet_forward.4} parent=11 // pred_region
        _
      $region48: #{longnet_forward.4} parent=11 // pred_fallthru
        _
    $region12: #{longnet_forward.4} parent=5 // pred_fallthru
      _
    %p299 = scmp.lt.s32.totalorder %s16, 2
    // Predicated region
    $region49: #{longnet_forward.4} parent=5 // pred_check
      %p300 = pneg %p299
    $region50: #{longnet_forward.4} parent=5 // pred_check_branch
      %302 = sbr.rel (%p300) target = $region52
    $region51: #{longnet_forward.4} parent=5 // pred_region
      // Predicated region
      $region53: #{longnet_forward.4} parent=51 // pred_check
        %p303 = pneg %p36
      $region54: #{longnet_forward.4} parent=51 // pred_check_branch
        %305 = sbr.rel (%p303) target = $region56
      $region55: #{longnet_forward.4} parent=51 // pred_region
        %s306 = smul.u32 2, %s16
        %p307 = scmp.lt.s32.totalorder %s306, 3
        %s308 = scalar_select %p307, %s306, 3
        %s309 = smul.addr %s308, 2
        %s310 = smul.addr %s309, 4
        %s311 = scalar_lea.vmem %s0, %s310
        %s312 = smul.u32 2, %s16
      $region56: #{longnet_forward.4} parent=51 // pred_fallthru
        _
    $region52: #{longnet_forward.4} parent=5 // pred_fallthru
      _
    %p313 = scmp.le.s32.totalorder 1, %s16
    %p314 = scmp.lt.s32.totalorder %s16, 3
    %p315 = pnand %p313, %p314
    %p316 = pneg %p315
    // Predicated region
    $region57: #{longnet_forward.4} parent=5 // pred_check
      _
    $region58: #{longnet_forward.4} parent=5 // pred_check_branch
      %318 = sbr.rel (%p315) target = $region60
    $region59: #{longnet_forward.4} parent=5 // pred_region
      %s319 = ssub.s32 %s16, 1
      %s320 = smul.u32 2, %s21
      %p321 = scmp.lt.s32.totalorder %s320, 3
      %s322 = scalar_select %p321, %s320, 3
      %s323 = smul.addr %s322, 2
      %s324 = smul.addr %s323, 4
      %s325 = scalar_lea.vmem %s0, %s324
      %p326 = pneg %p42
      %p327 = pneg %p39
      %p328 = pneg %p63
      %p329 = pneg %p60
      %p330 = pneg %p84
      %p331 = pneg %p81
      %p332 = pneg %p105
      %p333 = pneg %p102
      %p334 = pneg %p126
      %p335 = pneg %p123
      %p336 = pneg %p147
      %p337 = pneg %p144
      %p338 = pneg %p168
      %p339 = pneg %p165
      %p340 = pneg %p189
      %p341 = pneg %p186
      %p342 = pneg %p210
      %p343 = pneg %p207
      %p344 = pneg %p231
      %p345 = pneg %p228
      %p346 = pneg %p257
      %p347 = pneg %p254
      %s348 = smul.u32 2, %s21
      %p349 = scmp.lt.s32.totalorder %s348, 3
      %s350 = scalar_select %p349, %s348, 3
      %s351 = smul.addr %s350, 2
      %s352 = smul.addr %s351, 4
      %s353 = scalar_lea.vmem %s10, %s352
      %s354 = smul.u32 2, %s21
      %p355 = scmp.lt.s32.totalorder %s354, 3
      %s356 = scalar_select %p355, %s354, 3
      %s357 = smul.addr %s356, 2
      %s358 = smul.addr %s357, 4
      %s359 = scalar_lea.vmem %s0, %s358
      %s360 = smul.u32 2, %s21
      %s361 = smul.u32 2, %s21
      %p362 = scmp.lt.s32.totalorder %s361, 3
      %s363 = scalar_select %p362, %s361, 3
      %s364 = smul.addr %s363, 2
      %s365 = smul.addr %s364, 4
      %s366 = scalar_lea.vmem %s10, %s365
      %s367 = smul.u32 2, %s21
      %v373 = vld [vmem:[%s359] sm:$0xf]
      %v374 = vld [vmem:[%s359 + $0x4] sm:$0xf]
      %v375 = vld [vmem:[%s359 + $0x8] sm:$0xf]
      %v376 = vld [vmem:[%s359 + $0xc] sm:$0xf]
      %v377 = vunpack.c.l.bf16 %v373
      %v378 = vunpack.c.l.bf16 %v374
      %v379 = vunpack.c.l.bf16 %v375
      %v380 = vunpack.c.l.bf16 %v376
      %v381 = vld [vmem:[%s1] sm:$0x1]
      %382 = vadd.xlane.f32.xlu0 %v377
      %v383 = vpop.xlane.xlu0 %382
      %384 = vadd.xlane.f32.xlu0 %v378
      %v385 = vpop.xlane.xlu0 %384
      %386 = vadd.xlane.f32.xlu0 %v379
      %v387 = vpop.xlane.xlu0 %386
      %388 = vadd.xlane.f32.xlu0 %v380
      %v389 = vpop.xlane.xlu0 %388
      %v390 = vrcp.pop 128.0
      %v391 = vmul.f32 %v383, %v390
      %v392 = vmul.f32 %v385, %v390
      %v393 = vmul.f32 %v387, %v390
      %v394 = vmul.f32 %v389, %v390
      %v395 = vsub.f32 %v377, %v391
      %v396 = vsub.f32 %v378, %v392
      %v397 = vsub.f32 %v379, %v393
      %v398 = vsub.f32 %v380, %v394
      %v399 = vmul.f32 %v395, %v395
      %v400 = vmul.f32 %v396, %v396
      %v401 = vmul.f32 %v397, %v397
      %v402 = vmul.f32 %v398, %v398
      %403 = vadd.xlane.f32.xlu0 %v399
      %v404 = vpop.xlane.xlu0 %403
      %405 = vadd.xlane.f32.xlu0 %v400
      %v406 = vpop.xlane.xlu0 %405
      %407 = vadd.xlane.f32.xlu0 %v401
      %v408 = vpop.xlane.xlu0 %407
      %409 = vadd.xlane.f32.xlu0 %v402
      %v410 = vpop.xlane.xlu0 %409
      %v411 = vmul.f32 %v404, %v390
      %v412 = vmul.f32 %v406, %v390
      %v413 = vmul.f32 %v408, %v390
      %v414 = vmul.f32 %v410, %v390
      %v415 = vadd.f32 %v411, 1e-05
      %v416 = vadd.f32 %v412, 1e-05
      %v417 = vadd.f32 %v413, 1e-05
      %v418 = vadd.f32 %v414, 1e-05
      %v419 = vrsqrt.pop %v415
      %v420 = vrsqrt.pop %v416
      %v421 = vrsqrt.pop %v417
      %v422 = vrsqrt.pop %v418
      %v423 = vmul.f32 %v395, %v419
      %v424 = vmul.f32 %v396, %v420
      %v425 = vmul.f32 %v397, %v421
      %v426 = vmul.f32 %v398, %v422
      %v428 = vlaneseq
      %v429 = vshrl.u32 %v428, 7
      %v430 = vsub.s32 0, %v429
      %v431 = vrot.slane %v381, %v430
      %v433 = vmul.f32 %v423, %v431
      %v434 = vmul.f32 %v424, %v431
      %v435 = vmul.f32 %v425, %v431
      %v436 = vmul.f32 %v426, %v431
      %v437 = vadd.f32 %v433, 0.0
      %v438 = vadd.f32 %v434, 0.0
      %v439 = vadd.f32 %v435, 0.0
      %v440 = vadd.f32 %v436, 0.0
      %v441 = vpack.c.bf16 %v438, %v437
      %v442 = vpack.c.bf16 %v440, %v439
      %v443 = vld [vmem:[%s2] sm:$0xff]
      %v444 = vld [vmem:[%s2 + $0x8] sm:$0xf]
      %v445 = vld [vmem:[%s2 + $0xc] sm:$0xff]
      %v446 = vld [vmem:[%s2 + $0x14] sm:$0xf]
      %v447 = vld [vmem:[%s2 + $0x18] sm:$0xff]
      %v448 = vld [vmem:[%s2 + $0x20] sm:$0xf]
      %v449 = vld [vmem:[%s2 + $0x24] sm:$0xff]
      %v450 = vld [vmem:[%s2 + $0x2c] sm:$0xf]
      %v451 = vld [vmem:[%s2 + $0x30] sm:$0xff]
      %v452 = vld [vmem:[%s2 + $0x38] sm:$0xf]
      %v453 = vld [vmem:[%s2 + $0x3c] sm:$0xff]
      %v454 = vld [vmem:[%s2 + $0x44] sm:$0xf]
      %v455 = vld [vmem:[%s2 + $0x48] sm:$0xff]
      %v456 = vld [vmem:[%s2 + $0x50] sm:$0xf]
      %v457 = vld [vmem:[%s2 + $0x54] sm:$0xff]
      %v458 = vld [vmem:[%s2 + $0x5c] sm:$0xf]
      %v459 = vld [vmem:[%s2 + $0x60] sm:$0xff]
      %v460 = vld [vmem:[%s2 + $0x68] sm:$0xf]
      %v461 = vld [vmem:[%s2 + $0x6c] sm:$0xff]
      %v462 = vld [vmem:[%s2 + $0x74] sm:$0xf]
      %v463 = vld [vmem:[%s2 + $0x78] sm:$0xff]
      %v464 = vld [vmem:[%s2 + $0x80] sm:$0xf]
      %v465 = vld [vmem:[%s2 + $0x84] sm:$0xff]
      %v466 = vld [vmem:[%s2 + $0x8c] sm:$0xf]
      %v467 = vld [vmem:[%s2 + $0x90] sm:$0xff]
      %v468 = vld [vmem:[%s2 + $0x98] sm:$0xf]
      %v469 = vld [vmem:[%s2 + $0x9c] sm:$0xff]
      %v470 = vld [vmem:[%s2 + $0xa4] sm:$0xf]
      %v471 = vld [vmem:[%s2 + $0xa8] sm:$0xff]
      %v472 = vld [vmem:[%s2 + $0xb0] sm:$0xf]
      %v473 = vld [vmem:[%s2 + $0xb4] sm:$0xff]
      %v474 = vld [vmem:[%s2 + $0xbc] sm:$0xf]
      %v475 = vld [vmem:[%s3] sm:$0x7]
      %v477 = vlaneseq
      %v478 = vshrl.u32 %v477, 7
      %v479 = vsub.s32 0, %v478
      %v480 = vrot.slane %v475, %v479
      %v481 = vlaneseq
      %v482 = vshrl.u32 %v481, 7
      %v483 = vsub.s32 1, %v482
      %v484 = vrot.slane %v475, %v483
      %v485 = vlaneseq
      %v486 = vshrl.u32 %v485, 7
      %v487 = vsub.s32 2, %v486
      %v488 = vrot.slane %v475, %v487
      %v524 = vunpack.c.l.b16 %v443
      %v525 = vunpack.c.h.b16 %v443
      %v526 = vunpack.c.l.b16 %v444
      %v527 = vunpack.c.l.b16 %v445
      %v528 = vunpack.c.h.b16 %v445
      %v529 = vunpack.c.l.b16 %v446
      %v530 = vunpack.c.l.b16 %v447
      %v531 = vunpack.c.h.b16 %v447
      %v532 = vunpack.c.l.b16 %v448
      %v533 = vunpack.c.l.b16 %v449
      %v534 = vunpack.c.h.b16 %v449
      %v535 = vunpack.c.l.b16 %v450
      %v536 = vunpack.c.l.b16 %v451
      %v537 = vunpack.c.h.b16 %v451
      %v538 = vunpack.c.l.b16 %v452
      %v539 = vunpack.c.l.b16 %v453
      %v540 = vunpack.c.h.b16 %v453
      %v541 = vunpack.c.l.b16 %v454
      %v542 = vunpack.c.l.b16 %v455
      %v543 = vunpack.c.h.b16 %v455
      %v544 = vunpack.c.l.b16 %v456
      %v545 = vunpack.c.l.b16 %v457
      %v546 = vunpack.c.h.b16 %v457
      %v547 = vunpack.c.l.b16 %v458
      %v548 = vunpack.c.l.b16 %v459
      %v549 = vunpack.c.h.b16 %v459
      %v550 = vunpack.c.l.b16 %v460
      %v551 = vunpack.c.l.b16 %v461
      %v552 = vunpack.c.h.b16 %v461
      %v553 = vunpack.c.l.b16 %v462
      %v554 = vunpack.c.l.b16 %v463
      %v555 = vunpack.c.h.b16 %v463
      %v556 = vunpack.c.l.b16 %v464
      %v557 = vunpack.c.l.b16 %v465
      %v558 = vunpack.c.h.b16 %v465
      %v559 = vunpack.c.l.b16 %v466
      %v560 = vunpack.c.l.b16 %v467
      %v561 = vunpack.c.h.b16 %v467
      %v562 = vunpack.c.l.b16 %v468
      %v563 = vunpack.c.l.b16 %v469
      %v564 = vunpack.c.h.b16 %v469
      %v565 = vunpack.c.l.b16 %v470
      %v566 = vunpack.c.l.b16 %v471
      %v567 = vunpack.c.h.b16 %v471
      %v568 = vunpack.c.l.b16 %v472
      %v569 = vunpack.c.l.b16 %v473
      %v570 = vunpack.c.h.b16 %v473
      %v571 = vunpack.c.l.b16 %v474
      %v572 = vpack.c.b16 %v527, %v524
      %v573 = vpack.c.b16 %v528, %v525
      %v574 = vpack.c.b16 %v529, %v526
      %v575 = vpack.c.b16 %v533, %v530
      %v576 = vpack.c.b16 %v534, %v531
      %v577 = vpack.c.b16 %v535, %v532
      %v578 = vpack.c.b16 %v539, %v536
      %v579 = vpack.c.b16 %v540, %v537
      %v580 = vpack.c.b16 %v541, %v538
      %v581 = vpack.c.b16 %v545, %v542
      %v582 = vpack.c.b16 %v546, %v543
      %v583 = vpack.c.b16 %v547, %v544
      %v584 = vpack.c.b16 %v551, %v548
      %v585 = vpack.c.b16 %v552, %v549
      %v586 = vpack.c.b16 %v553, %v550
      %v587 = vpack.c.b16 %v557, %v554
      %v588 = vpack.c.b16 %v558, %v555
      %v589 = vpack.c.b16 %v559, %v556
      %v590 = vpack.c.b16 %v563, %v560
      %v591 = vpack.c.b16 %v564, %v561
      %v592 = vpack.c.b16 %v565, %v562
      %v593 = vpack.c.b16 %v569, %v566
      %v594 = vpack.c.b16 %v570, %v567
      %v595 = vpack.c.b16 %v571, %v568
      %620 = vmatprep.subr.bf16.mxu0 %v573
      %621 = vmatpush1.bf16.msra.mxu0 %v572
      %622 = vmatprep.subr.bf16.mxu0 %v576
      %623 = vmatpush1.bf16.msra.mxu0 %v575
      %624 = vmatprep.subr.bf16.mxu0 %v579
      %625 = vmatpush1.bf16.msra.mxu0 %v578
      %626 = vmatprep.subr.bf16.mxu0 %v582
      %627 = vmatpush1.bf16.msra.mxu0 %v581
      %628 = vmatprep.subr.bf16.mxu0 %v585
      %629 = vmatpush1.bf16.msra.mxu0 %v584
      %630 = vmatprep.subr.bf16.mxu0 %v588
      %631 = vmatpush1.bf16.msra.mxu0 %v587
      %632 = vmatprep.subr.bf16.mxu0 %v591
      %633 = vmatpush1.bf16.msra.mxu0 %v590
      %634 = vmatprep.subr.bf16.mxu0 %v594
      %635 = vmatpush1.bf16.msra.mxu0 %v593
      %636 = vmatprep.subr.bf16.mxu0 0
      %637 = vmatpush1.bf16.msra.mxu0 0
      %638 = vmatprep.subr.bf16.mxu0 0
      %639 = vmatpush1.bf16.msra.mxu0 0
      %640 = vmatprep.subr.bf16.mxu0 0
      %641 = vmatpush1.bf16.msra.mxu0 0
      %642 = vmatprep.subr.bf16.mxu0 0
      %643 = vmatpush1.bf16.msra.mxu0 0
      %644 = vmatprep.subr.bf16.mxu0 0
      %645 = vmatpush1.bf16.msra.mxu0 0
      %646 = vmatprep.subr.bf16.mxu0 0
      %647 = vmatpush1.bf16.msra.mxu0 0
      %648 = vmatprep.subr.bf16.mxu0 0
      %649 = vmatpush1.bf16.msra.mxu0 0
      %650 = vmatprep.subr.bf16.mxu0 0
      %651 = vmatpush1.bf16.msra.mxu0 0
      %652 = vmatprep.mubr.bf16.mxu0 0
      %653 = vmatmul.mubr.bf16.gmra.mrb[0].mxu0 %v441
      %v654 = vpop.f32.mrb[0].mxu0
      %v655 = vadd.f32 %v480, %v654
      %v656 = vpop.f32.mrb[0].mxu0
      %v657 = vadd.f32 %v484, %v656
      %v658 = vpop.f32.mrb[0].mxu0
      %v659 = vadd.f32 %v480, %v658
      %v660 = vpop.f32.mrb[0].mxu0
      %v661 = vadd.f32 %v484, %v660
      %662 = vmatprep.mubr.bf16.mxu0 0
      %663 = vmatmul.mubr.bf16.gmra.mrb[0].mxu0 %v442
      %v664 = vpop.f32.mrb[0].mxu0
      %v665 = vadd.f32 %v480, %v664
      %v666 = vpop.f32.mrb[0].mxu0
      %v667 = vadd.f32 %v484, %v666
      %v668 = vpop.f32.mrb[0].mxu0
      %v669 = vadd.f32 %v480, %v668
      %v670 = vpop.f32.mrb[0].mxu0
      %v671 = vadd.f32 %v484, %v670
      %672 = vdwg.mxu0
      %673 = vmatprep.subr.bf16.mxu0 0
      %674 = vmatpush1.bf16.msra.mxu0 %v574
      %675 = vmatprep.subr.bf16.mxu0 0
      %676 = vmatpush1.bf16.msra.mxu0 %v577
      %677 = vmatprep.subr.bf16.mxu0 0
      %678 = vmatpush1.bf16.msra.mxu0 %v580
      %679 = vmatprep.subr.bf16.mxu0 0
      %680 = vmatpush1.bf16.msra.mxu0 %v583
      %681 = vmatprep.subr.bf16.mxu0 0
      %682 = vmatpush1.bf16.msra.mxu0 %v586
      %683 = vmatprep.subr.bf16.mxu0 0
      %684 = vmatpush1.bf16.msra.mxu0 %v589
      %685 = vmatprep.subr.bf16.mxu0 0
      %686 = vmatpush1.bf16.msra.mxu0 %v592
      %687 = vmatprep.subr.bf16.mxu0 0
      %688 = vmatpush1.bf16.msra.mxu0 %v595
      %689 = vmatprep.subr.bf16.mxu0 0
      %690 = vmatpush1.bf16.msra.mxu0 0
      %691 = vmatprep.subr.bf16.mxu0 0
      %692 = vmatpush1.bf16.msra.mxu0 0
      %693 = vmatprep.subr.bf16.mxu0 0
      %694 = vmatpush1.bf16.msra.mxu0 0
      %695 = vmatprep.subr.bf16.mxu0 0
      %696 = vmatpush1.bf16.msra.mxu0 0
      %697 = vmatprep.subr.bf16.mxu0 0
      %698 = vmatpush1.bf16.msra.mxu0 0
      %699 = vmatprep.subr.bf16.mxu0 0
      %700 = vmatpush1.bf16.msra.mxu0 0
      %701 = vmatprep.subr.bf16.mxu0 0
      %702 = vmatpush1.bf16.msra.mxu0 0
      %703 = vmatprep.subr.bf16.mxu0 0
      %704 = vmatpush1.bf16.msra.mxu0 0
      %705 = vmatprep.mubr.bf16.mxu0 0
      %706 = vmatmul.mubr.bf16.gmra.mrb[0].mxu0 %v441
      %v707 = vpop.f32.mrb[0].mxu0
      %v708 = vadd.f32 %v488, %v707
      %v709 = vpop.f32.mrb[0].mxu0
      %v710 = vpop.f32.mrb[0].mxu0
      %v711 = vadd.f32 %v488, %v710
      %v712 = vpop.f32.mrb[0].mxu0
      %713 = vmatprep.mubr.bf16.mxu0 0
      %714 = vmatmul.mubr.bf16.gmra.mrb[0].mxu0 %v442
      %v715 = vpop.f32.mrb[0].mxu0
      %v716 = vadd.f32 %v488, %v715
      %v717 = vpop.f32.mrb[0].mxu0
      %v718 = vpop.f32.mrb[0].mxu0
      %v719 = vadd.f32 %v488, %v718
      %v720 = vpop.f32.mrb[0].mxu0
      %721 = vdwg.mxu0
      %v722 = vld [vmem:[%s4] sm:$0x1]
      %v723 = vld [vmem:[%s5] sm:$0x1]
      %724 = vadd.xlane.f32.xlu0 %v655
      %v725 = vpop.xlane.xlu0 %724
      %726 = vadd.xlane.f32.xlu0 %v659
      %v727 = vpop.xlane.xlu0 %726
      %728 = vadd.xlane.f32.xlu0 %v665
      %v729 = vpop.xlane.xlu0 %728
      %730 = vadd.xlane.f32.xlu0 %v669
      %v731 = vpop.xlane.xlu0 %730
      %v732 = vmul.f32 %v725, %v390
      %v733 = vmul.f32 %v727, %v390
      %v734 = vmul.f32 %v729, %v390
      %v735 = vmul.f32 %v731, %v390
      %v736 = vsub.f32 %v655, %v732
      %v737 = vsub.f32 %v659, %v733
      %v738 = vsub.f32 %v665, %v734
      %v739 = vsub.f32 %v669, %v735
      %v740 = vmul.f32 %v736, %v736
      %v741 = vmul.f32 %v737, %v737
      %v742 = vmul.f32 %v738, %v738
      %v743 = vmul.f32 %v739, %v739
      %744 = vadd.xlane.f32.xlu0 %v740
      %v745 = vpop.xlane.xlu0 %744
      %746 = vadd.xlane.f32.xlu0 %v741
      %v747 = vpop.xlane.xlu0 %746
      %748 = vadd.xlane.f32.xlu0 %v742
      %v749 = vpop.xlane.xlu0 %748
      %750 = vadd.xlane.f32.xlu0 %v743
      %v751 = vpop.xlane.xlu0 %750
      %v752 = vmul.f32 %v745, %v390
      %v753 = vmul.f32 %v747, %v390
      %v754 = vmul.f32 %v749, %v390
      %v755 = vmul.f32 %v751, %v390
      %v756 = vadd.f32 %v752, 1e-05
      %v757 = vadd.f32 %v753, 1e-05
      %v758 = vadd.f32 %v754, 1e-05
      %v759 = vadd.f32 %v755, 1e-05
      %v760 = vrsqrt.pop %v756
      %v761 = vrsqrt.pop %v757
      %v762 = vrsqrt.pop %v758
      %v763 = vrsqrt.pop %v759
      %v764 = vmul.f32 %v736, %v760
      %v765 = vmul.f32 %v737, %v761
      %v766 = vmul.f32 %v738, %v762
      %v767 = vmul.f32 %v739, %v763
      %v769 = vlaneseq
      %v770 = vshrl.u32 %v769, 7
      %v771 = vsub.s32 0, %v770
      %v772 = vrot.slane %v722, %v771
      %v774 = vmul.f32 %v764, %v772
      %v775 = vmul.f32 %v765, %v772
      %v776 = vmul.f32 %v766, %v772
      %v777 = vmul.f32 %v767, %v772
      %v779 = vlaneseq
      %v780 = vshrl.u32 %v779, 7
      %v781 = vsub.s32 0, %v780
      %v782 = vrot.slane %v723, %v781
      %v784 = vadd.f32 %v774, %v782
      %v785 = vadd.f32 %v775, %v782
      %v786 = vadd.f32 %v776, %v782
      %v787 = vadd.f32 %v777, %v782
      %788 = vadd.xlane.f32.xlu0 %v657
      %v789 = vpop.xlane.xlu0 %788
      %790 = vadd.xlane.f32.xlu0 %v661
      %v791 = vpop.xlane.xlu0 %790
      %792 = vadd.xlane.f32.xlu0 %v667
      %v793 = vpop.xlane.xlu0 %792
      %794 = vadd.xlane.f32.xlu0 %v671
      %v795 = vpop.xlane.xlu0 %794
      %v796 = vmul.f32 %v789, %v390
      %v797 = vmul.f32 %v791, %v390
      %v798 = vmul.f32 %v793, %v390
      %v799 = vmul.f32 %v795, %v390
      %v800 = vsub.f32 %v657, %v796
      %v801 = vsub.f32 %v661, %v797
      %v802 = vsub.f32 %v667, %v798
      %v803 = vsub.f32 %v671, %v799
      %v804 = vmul.f32 %v800, %v800
      %v805 = vmul.f32 %v801, %v801
      %v806 = vmul.f32 %v802, %v802
      %v807 = vmul.f32 %v803, %v803
      %808 = vadd.xlane.f32.xlu0 %v804
      %v809 = vpop.xlane.xlu0 %808
      %810 = vadd.xlane.f32.xlu0 %v805
      %v811 = vpop.xlane.xlu0 %810
      %812 = vadd.xlane.f32.xlu0 %v806
      %v813 = vpop.xlane.xlu0 %812
      %814 = vadd.xlane.f32.xlu0 %v807
      %v815 = vpop.xlane.xlu0 %814
      %v816 = vmul.f32 %v809, %v390
      %v817 = vmul.f32 %v811, %v390
      %v818 = vmul.f32 %v813, %v390
      %v819 = vmul.f32 %v815, %v390
      %v820 = vadd.f32 %v816, 1e-05
      %v821 = vadd.f32 %v817, 1e-05
      %v822 = vadd.f32 %v818, 1e-05
      %v823 = vadd.f32 %v819, 1e-05
      %v824 = vrsqrt.pop %v820
      %v825 = vrsqrt.pop %v821
      %v826 = vrsqrt.pop %v822
      %v827 = vrsqrt.pop %v823
      %v828 = vmul.f32 %v800, %v824
      %v829 = vmul.f32 %v801, %v825
      %v830 = vmul.f32 %v802, %v826
      %v831 = vmul.f32 %v803, %v827
      %v832 = vmul.f32 %v828, %v772
      %v833 = vmul.f32 %v829, %v772
      %v834 = vmul.f32 %v830, %v772
      %v835 = vmul.f32 %v831, %v772
      %v836 = vadd.f32 %v832, %v782
      %v837 = vadd.f32 %v833, %v782
      %v838 = vadd.f32 %v834, %v782
      %v839 = vadd.f32 %v835, %v782
      %840 = vadd.xlane.f32.xlu0 %v708
      %v841 = vpop.xlane.xlu0 %840
      %842 = vadd.xlane.f32.xlu0 %v711
      %v843 = vpop.xlane.xlu0 %842
      %844 = vadd.xlane.f32.xlu0 %v716
      %v845 = vpop.xlane.xlu0 %844
      %846 = vadd.xlane.f32.xlu0 %v719
      %v847 = vpop.xlane.xlu0 %846
      %v848 = vmul.f32 %v841, %v390
      %v849 = vmul.f32 %v843, %v390
      %v850 = vmul.f32 %v845, %v390
      %v851 = vmul.f32 %v847, %v390
      %v852 = vsub.f32 %v708, %v848
      %v853 = vsub.f32 %v711, %v849
      %v854 = vsub.f32 %v716, %v850
      %v855 = vsub.f32 %v719, %v851
      %v856 = vmul.f32 %v852, %v852
      %v857 = vmul.f32 %v853, %v853
      %v858 = vmul.f32 %v854, %v854
      %v859 = vmul.f32 %v855, %v855
      %860 = vadd.xlane.f32.xlu0 %v856
      %v861 = vpop.xlane.xlu0 %860
      %862 = vadd.xlane.f32.xlu0 %v857
      %v863 = vpop.xlane.xlu0 %862
      %864 = vadd.xlane.f32.xlu0 %v858
      %v865 = vpop.xlane.xlu0 %864
      %866 = vadd.xlane.f32.xlu0 %v859
      %v867 = vpop.xlane.xlu0 %866
      %v868 = vmul.f32 %v861, %v390
      %v869 = vmul.f32 %v863, %v390
      %v870 = vmul.f32 %v865, %v390
      %v871 = vmul.f32 %v867, %v390
      %v872 = vadd.f32 %v868, 1e-05
      %v873 = vadd.f32 %v869, 1e-05
      %v874 = vadd.f32 %v870, 1e-05
      %v875 = vadd.f32 %v871, 1e-05
      %v876 = vrsqrt.pop %v872
      %v877 = vrsqrt.pop %v873
      %v878 = vrsqrt.pop %v874
      %v879 = vrsqrt.pop %v875
      %v880 = vmul.f32 %v852, %v876
      %v881 = vmul.f32 %v853, %v877
      %v882 = vmul.f32 %v854, %v878
      %v883 = vmul.f32 %v855, %v879
      %v884 = vmul.f32 %v880, %v772
      %v885 = vmul.f32 %v881, %v772
      %v886 = vmul.f32 %v882, %v772
      %v887 = vmul.f32 %v883, %v772
      %v888 = vadd.f32 %v884, %v782
      %v889 = vadd.f32 %v885, %v782
      %v890 = vadd.f32 %v886, %v782
      %v891 = vadd.f32 %v887, %v782
      %v892 = vpack.c.bf16 %v785, %v784
      %v893 = vpack.c.bf16 %v787, %v786
      %v894 = vpack.c.bf16 %v837, %v836
      %v895 = vpack.c.bf16 %v839, %v838
      %896 = vmatprep.subr.bf16.mxu0 0
      %897 = vmatpush1.bf16.xpose.msra.mxu0 %v894
      %898 = vmatprep.subr.bf16.mxu0 0
      %899 = vmatpush1.bf16.xpose.msra.mxu0 0
      %900 = vmatprep.subr.bf16.mxu0 0
      %901 = vmatpush1.bf16.xpose.msra.mxu0 0
      %902 = vmatprep.subr.bf16.mxu0 0
      %903 = vmatpush1.bf16.xpose.msra.mxu0 0
      %904 = vmatprep.subr.bf16.mxu0 0
      %905 = vmatpush1.bf16.xpose.msra.mxu0 0
      %906 = vmatprep.subr.bf16.mxu0 0
      %907 = vmatpush1.bf16.xpose.msra.mxu0 0
      %908 = vmatprep.subr.bf16.mxu0 0
      %909 = vmatpush1.bf16.xpose.msra.mxu0 0
      %910 = vmatprep.subr.bf16.mxu0 0
      %911 = vmatpush1.bf16.xpose.msra.mxu0 0
      %912 = vmatprep.subr.bf16.mxu0 0
      %913 = vmatpush1.bf16.xpose.msra.mxu0 0
      %914 = vmatprep.subr.bf16.mxu0 0
      %915 = vmatpush1.bf16.xpose.msra.mxu0 0
      %916 = vmatprep.subr.bf16.mxu0 0
      %917 = vmatpush1.bf16.xpose.msra.mxu0 0
      %918 = vmatprep.subr.bf16.mxu0 0
      %919 = vmatpush1.bf16.xpose.msra.mxu0 0
      %920 = vmatprep.subr.bf16.mxu0 0
      %921 = vmatpush1.bf16.xpose.msra.mxu0 0
      %922 = vmatprep.subr.bf16.mxu0 0
      %923 = vmatpush1.bf16.xpose.msra.mxu0 0
      %924 = vmatprep.subr.bf16.mxu0 0
      %925 = vmatpush1.bf16.xpose.msra.mxu0 0
      %926 = vmatprep.subr.bf16.mxu0 0
      %927 = vmatpush1.bf16.xpose.msra.mxu0 0
      %928 = vmatprep.mubr.bf16.mxu0 0
      %929 = vmatmul.mubr.bf16.gmra.mrb[0].mxu0 %v892
      %v930 = vpop.f32.mrb[0].mxu0
      %v931 = vadd.f32 0.0, %v930
      %v932 = vpop.f32.mrb[0].mxu0
      %v933 = vpop.f32.mrb[0].mxu0
      %v934 = vadd.f32 0.0, %v933
      %v935 = vpop.f32.mrb[0].mxu0
      %936 = vdwg.mxu0
      %937 = vmatprep.subr.bf16.mxu0 0
      %938 = vmatpush1.bf16.xpose.msra.mxu0 %v895
      %939 = vmatprep.subr.bf16.mxu0 0
      %940 = vmatpush1.bf16.xpose.msra.mxu0 0
      %941 = vmatprep.subr.bf16.mxu0 0
      %942 = vmatpush1.bf16.xpose.msra.mxu0 0
      %943 = vmatprep.subr.bf16.mxu0 0
      %944 = vmatpush1.bf16.xpose.msra.mxu0 0
      %945 = vmatprep.subr.bf16.mxu0 0
      %946 = vmatpush1.bf16.xpose.msra.mxu0 0
      %947 = vmatprep.subr.bf16.mxu0 0
      %948 = vmatpush1.bf16.xpose.msra.mxu0 0
      %949 = vmatprep.subr.bf16.mxu0 0
      %950 = vmatpush1.bf16.xpose.msra.mxu0 0
      %951 = vmatprep.subr.bf16.mxu0 0
      %952 = vmatpush1.bf16.xpose.msra.mxu0 0
      %953 = vmatprep.subr.bf16.mxu0 0
      %954 = vmatpush1.bf16.xpose.msra.mxu0 0
      %955 = vmatprep.subr.bf16.mxu0 0
      %956 = vmatpush1.bf16.xpose.msra.mxu0 0
      %957 = vmatprep.subr.bf16.mxu0 0
      %958 = vmatpush1.bf16.xpose.msra.mxu0 0
      %959 = vmatprep.subr.bf16.mxu0 0
      %960 = vmatpush1.bf16.xpose.msra.mxu0 0
      %961 = vmatprep.subr.bf16.mxu0 0
      %962 = vmatpush1.bf16.xpose.msra.mxu0 0
      %963 = vmatprep.subr.bf16.mxu0 0
      %964 = vmatpush1.bf16.xpose.msra.mxu0 0
      %965 = vmatprep.subr.bf16.mxu0 0
      %966 = vmatpush1.bf16.xpose.msra.mxu0 0
      %967 = vmatprep.subr.bf16.mxu0 0
      %968 = vmatpush1.bf16.xpose.msra.mxu0 0
      %969 = vmatprep.mubr.bf16.mxu0 0
      %970 = vmatmul.mubr.bf16.gmra.mrb[0].mxu0 %v893
      %v971 = vpop.f32.mrb[0].mxu0
      %v972 = vadd.f32 0.0, %v971
      %v973 = vpop.f32.mrb[0].mxu0
      %v974 = vpop.f32.mrb[0].mxu0
      %v975 = vadd.f32 0.0, %v974
      %v976 = vpop.f32.mrb[0].mxu0
      %977 = vdwg.mxu0
      %v978 = vmul.f32 %v931, 0.088388346
      %v979 = vmul.f32 %v934, 0.088388346
      %v980 = vmul.f32 %v972, 0.088388346
      %v981 = vmul.f32 %v975, 0.088388346
      %vm982 = vcmask 130048
      %v983 = vsel %vm982, %v978, -inf
      %984 = vmax.xlane.f32.xlu0 %v983
      %v985 = vpop.xlane.xlu0 %984
      %v986 = vsel %vm982, %v979, -inf
      %987 = vmax.xlane.f32.xlu0 %v986
      %v988 = vpop.xlane.xlu0 %987
      %v989 = vsel %vm982, %v980, -inf
      %990 = vmax.xlane.f32.xlu0 %v989
      %v991 = vpop.xlane.xlu0 %990
      %v992 = vsel %vm982, %v981, -inf
      %993 = vmax.xlane.f32.xlu0 %v992
      %v994 = vpop.xlane.xlu0 %993
      %v995 = vsub.f32 %v978, %v985
      %v996 = vsub.f32 %v979, %v988
      %v997 = vsub.f32 %v980, %v991
      %v998 = vsub.f32 %v981, %v994
      %v999 = vmul.f32 %v995, 1.442695
      %v1000 = vpow.pop %v999
      %v1001 = vmul.f32 %v996, 1.442695
      %v1002 = vpow.pop %v1001
      %v1003 = vmul.f32 %v997, 1.442695
      %v1004 = vpow.pop %v1003
      %v1005 = vmul.f32 %v998, 1.442695
      %v1006 = vpow.pop %v1005
      %v1007 = vsel %vm982, %v1000, 0.0
      %1008 = vadd.xlane.f32.xlu0 %v1007
      %v1009 = vpop.xlane.xlu0 %1008
      %v1010 = vsel %vm982, %v1002, 0.0
      %1011 = vadd.xlane.f32.xlu0 %v1010
      %v1012 = vpop.xlane.xlu0 %1011
      %v1013 = vsel %vm982, %v1004, 0.0
      %1014 = vadd.xlane.f32.xlu0 %v1013
      %v1015 = vpop.xlane.xlu0 %1014
      %v1016 = vsel %vm982, %v1006, 0.0
      %1017 = vadd.xlane.f32.xlu0 %v1016
      %v1018 = vpop.xlane.xlu0 %1017
      %v1019 = vrcp.pop %v1009
      %v1020 = vrcp.pop %v1012
      %v1021 = vrcp.pop %v1015
      %v1022 = vrcp.pop %v1018
      %v1023 = vmul.f32 %v1000, %v1019
      %v1024 = vmul.f32 %v1002, %v1020
      %v1025 = vmul.f32 %v1004, %v1021
      %v1026 = vmul.f32 %v1006, %v1022
      %v1027 = vpack.c.bf16 %v1024, %v1023
      %v1028 = vpack.c.bf16 %v1026, %v1025
      %v1029 = vpack.c.bf16 %v889, %v888
      %v1030 = vpack.c.bf16 %v891, %v890
      %v1032 = vsel %vm982, %v1027, 0
      %1034 = vmatprep.subr.bf16.mxu0 0
      %1035 = vmatpush1.bf16.msra.mxu0 %v1029
      %1036 = vmatprep.subr.bf16.mxu0 0
      %1037 = vmatpush1.bf16.msra.mxu0 0
      %1038 = vmatprep.subr.bf16.mxu0 0
      %1039 = vmatpush1.bf16.msra.mxu0 0
      %1040 = vmatprep.subr.bf16.mxu0 0
      %1041 = vmatpush1.bf16.msra.mxu0 0
      %1042 = vmatprep.subr.bf16.mxu0 0
      %1043 = vmatpush1.bf16.msra.mxu0 0
      %1044 = vmatprep.subr.bf16.mxu0 0
      %1045 = vmatpush1.bf16.msra.mxu0 0
      %1046 = vmatprep.subr.bf16.mxu0 0
      %1047 = vmatpush1.bf16.msra.mxu0 0
      %1048 = vmatprep.subr.bf16.mxu0 0
      %1049 = vmatpush1.bf16.msra.mxu0 0
      %1050 = vmatprep.subr.bf16.mxu0 0
      %1051 = vmatpush1.bf16.msra.mxu0 0
      %1052 = vmatprep.subr.bf16.mxu0 0
      %1053 = vmatpush1.bf16.msra.mxu0 0
      %1054 = vmatprep.subr.bf16.mxu0 0
      %1055 = vmatpush1.bf16.msra.mxu0 0
      %1056 = vmatprep.subr.bf16.mxu0 0
      %1057 = vmatpush1.bf16.msra.mxu0 0
      %1058 = vmatprep.subr.bf16.mxu0 0
      %1059 = vmatpush1.bf16.msra.mxu0 0
      %1060 = vmatprep.subr.bf16.mxu0 0
      %1061 = vmatpush1.bf16.msra.mxu0 0
      %1062 = vmatprep.subr.bf16.mxu0 0
      %1063 = vmatpush1.bf16.msra.mxu0 0
      %1064 = vmatprep.subr.bf16.mxu0 0
      %1065 = vmatpush1.bf16.msra.mxu0 0
      %1066 = vmatprep.mubr.bf16.mxu0 0
      %1067 = vmatmul.mubr.bf16.gmra.mrb[0].mxu0 %v1032
      %v1068 = vpop.f32.mrb[0].mxu0
      %v1069 = vadd.f32 0.0, %v1068
      %v1070 = vpop.f32.mrb[0].mxu0
      %v1071 = vpop.f32.mrb[0].mxu0
      %v1072 = vadd.f32 0.0, %v1071
      %v1073 = vpop.f32.mrb[0].mxu0
      %1074 = vdwg.mxu0
      %v1076 = vsel %vm982, %v1028, 0
      %1078 = vmatprep.subr.bf16.mxu0 0
      %1079 = vmatpush1.bf16.msra.mxu0 %v1030
      %1080 = vmatprep.subr.bf16.mxu0 0
      %1081 = vmatpush1.bf16.msra.mxu0 0
      %1082 = vmatprep.subr.bf16.mxu0 0
      %1083 = vmatpush1.bf16.msra.mxu0 0
      %1084 = vmatprep.subr.bf16.mxu0 0
      %1085 = vmatpush1.bf16.msra.mxu0 0
      %1086 = vmatprep.subr.bf16.mxu0 0
      %1087 = vmatpush1.bf16.msra.mxu0 0
      %1088 = vmatprep.subr.bf16.mxu0 0
      %1089 = vmatpush1.bf16.msra.mxu0 0
      %1090 = vmatprep.subr.bf16.mxu0 0
      %1091 = vmatpush1.bf16.msra.mxu0 0
      %1092 = vmatprep.subr.bf16.mxu0 0
      %1093 = vmatpush1.bf16.msra.mxu0 0
      %1094 = vmatprep.subr.bf16.mxu0 0
      %1095 = vmatpush1.bf16.msra.mxu0 0
      %1096 = vmatprep.subr.bf16.mxu0 0
      %1097 = vmatpush1.bf16.msra.mxu0 0
      %1098 = vmatprep.subr.bf16.mxu0 0
      %1099 = vmatpush1.bf16.msra.mxu0 0
      %1100 = vmatprep.subr.bf16.mxu0 0
      %1101 = vmatpush1.bf16.msra.mxu0 0
      %1102 = vmatprep.subr.bf16.mxu0 0
      %1103 = vmatpush1.bf16.msra.mxu0 0
      %1104 = vmatprep.subr.bf16.mxu0 0
      %1105 = vmatpush1.bf16.msra.mxu0 0
      %1106 = vmatprep.subr.bf16.mxu0 0
      %1107 = vmatpush1.bf16.msra.mxu0 0
      %1108 = vmatprep.subr.bf16.mxu0 0
      %1109 = vmatpush1.bf16.msra.mxu0 0
      %1110 = vmatprep.mubr.bf16.mxu0 0
      %1111 = vmatmul.mubr.bf16.gmra.mrb[0].mxu0 %v1076
      %v1112 = vpop.f32.mrb[0].mxu0
      %v1113 = vadd.f32 0.0, %v1112
      %v1114 = vpop.f32.mrb[0].mxu0
      %v1115 = vpop.f32.mrb[0].mxu0
      %v1116 = vadd.f32 0.0, %v1115
      %v1117 = vpop.f32.mrb[0].mxu0
      %1118 = vdwg.mxu0
      %v1119 = vadd.f32 %v1069, %v377
      %v1120 = vadd.f32 %v1072, %v378
      %v1121 = vadd.f32 %v1113, %v379
      %v1122 = vadd.f32 %v1116, %v380
      %v1123 = vpack.c.bf16 %v1120, %v1119
      %v1124 = vpack.c.bf16 %v1122, %v1121
      %v1125 = vld [vmem:[%s6] sm:$0xff]
      %v1126 = vld [vmem:[%s6 + $0x8] sm:$0xff]
      %v1127 = vld [vmem:[%s6 + $0x10] sm:$0xff]
      %v1128 = vld [vmem:[%s6 + $0x18] sm:$0xff]
      %v1129 = vld [vmem:[%s6 + $0x20] sm:$0xff]
      %v1130 = vld [vmem:[%s6 + $0x28] sm:$0xff]
      %v1131 = vld [vmem:[%s6 + $0x30] sm:$0xff]
      %v1132 = vld [vmem:[%s6 + $0x38] sm:$0xff]
      %v1133 = vld [vmem:[%s6 + $0x40] sm:$0xff]
      %v1134 = vld [vmem:[%s6 + $0x48] sm:$0xff]
      %v1135 = vld [vmem:[%s6 + $0x50] sm:$0xff]
      %v1136 = vld [vmem:[%s6 + $0x58] sm:$0xff]
      %v1137 = vld [vmem:[%s6 + $0x60] sm:$0xff]
      %v1138 = vld [vmem:[%s6 + $0x68] sm:$0xff]
      %v1139 = vld [vmem:[%s6 + $0x70] sm:$0xff]
      %v1140 = vld [vmem:[%s6 + $0x78] sm:$0xff]
      %v1141 = vld [vmem:[%s6 + $0x80] sm:$0xff]
      %v1142 = vld [vmem:[%s6 + $0x88] sm:$0xff]
      %v1143 = vld [vmem:[%s6 + $0x90] sm:$0xff]
      %v1144 = vld [vmem:[%s6 + $0x98] sm:$0xff]
      %v1145 = vld [vmem:[%s6 + $0xa0] sm:$0xff]
      %v1146 = vld [vmem:[%s6 + $0xa8] sm:$0xff]
      %v1147 = vld [vmem:[%s6 + $0xb0] sm:$0xff]
      %v1148 = vld [vmem:[%s6 + $0xb8] sm:$0xff]
      %v1149 = vld [vmem:[%s6 + $0xc0] sm:$0xff]
      %v1150 = vld [vmem:[%s6 + $0xc8] sm:$0xff]
      %v1151 = vld [vmem:[%s6 + $0xd0] sm:$0xff]
      %v1152 = vld [vmem:[%s6 + $0xd8] sm:$0xff]
      %v1153 = vld [vmem:[%s6 + $0xe0] sm:$0xff]
      %v1154 = vld [vmem:[%s6 + $0xe8] sm:$0xff]
      %v1155 = vld [vmem:[%s6 + $0xf0] sm:$0xff]
      %v1156 = vld [vmem:[%s6 + $0xf8] sm:$0xff]
      %v1157 = vld [vmem:[%s7] sm:$0xf]
      %v1159 = vlaneseq
      %v1160 = vshrl.u32 %v1159, 7
      %v1161 = vsub.s32 0, %v1160
      %v1162 = vrot.slane %v1157, %v1161
      %v1163 = vlaneseq
      %v1164 = vshrl.u32 %v1163, 7
      %v1165 = vsub.s32 1, %v1164
      %v1166 = vrot.slane %v1157, %v1165
      %v1167 = vlaneseq
      %v1168 = vshrl.u32 %v1167, 7
      %v1169 = vsub.s32 2, %v1168
      %v1170 = vrot.slane %v1157, %v1169
      %v1171 = vlaneseq
      %v1172 = vshrl.u32 %v1171, 7
      %v1173 = vsub.s32 3, %v1172
      %v1174 = vrot.slane %v1157, %v1173
      %v1211 = vunpack.c.l.b16 %v1125
      %v1212 = vunpack.c.h.b16 %v1125
      %v1213 = vunpack.c.l.b16 %v1126
      %v1214 = vunpack.c.h.b16 %v1126
      %v1215 = vunpack.c.l.b16 %v1127
      %v1216 = vunpack.c.h.b16 %v1127
      %v1217 = vunpack.c.l.b16 %v1128
      %v1218 = vunpack.c.h.b16 %v1128
      %v1219 = vunpack.c.l.b16 %v1129
      %v1220 = vunpack.c.h.b16 %v1129
      %v1221 = vunpack.c.l.b16 %v1130
      %v1222 = vunpack.c.h.b16 %v1130
      %v1223 = vunpack.c.l.b16 %v1131
      %v1224 = vunpack.c.h.b16 %v1131
      %v1225 = vunpack.c.l.b16 %v1132
      %v1226 = vunpack.c.h.b16 %v1132
      %v1227 = vunpack.c.l.b16 %v1133
      %v1228 = vunpack.c.h.b16 %v1133
      %v1229 = vunpack.c.l.b16 %v1134
      %v1230 = vunpack.c.h.b16 %v1134
      %v1231 = vunpack.c.l.b16 %v1135
      %v1232 = vunpack.c.h.b16 %v1135
      %v1233 = vunpack.c.l.b16 %v1136
      %v1234 = vunpack.c.h.b16 %v1136
      %v1235 = vunpack.c.l.b16 %v1137
      %v1236 = vunpack.c.h.b16 %v1137
      %v1237 = vunpack.c.l.b16 %v1138
      %v1238 = vunpack.c.h.b16 %v1138
      %v1239 = vunpack.c.l.b16 %v1139
      %v1240 = vunpack.c.h.b16 %v1139
      %v1241 = vunpack.c.l.b16 %v1140
      %v1242 = vunpack.c.h.b16 %v1140
      %v1243 = vunpack.c.l.b16 %v1141
      %v1244 = vunpack.c.h.b16 %v1141
      %v1245 = vunpack.c.l.b16 %v1142
      %v1246 = vunpack.c.h.b16 %v1142
      %v1247 = vunpack.c.l.b16 %v1143
      %v1248 = vunpack.c.h.b16 %v1143
      %v1249 = vunpack.c.l.b16 %v1144
      %v1250 = vunpack.c.h.b16 %v1144
      %v1251 = vunpack.c.l.b16 %v1145
      %v1252 = vunpack.c.h.b16 %v1145
      %v1253 = vunpack.c.l.b16 %v1146
      %v1254 = vunpack.c.h.b16 %v1146
      %v1255 = vunpack.c.l.b16 %v1147
      %v1256 = vunpack.c.h.b16 %v1147
      %v1257 = vunpack.c.l.b16 %v1148
      %v1258 = vunpack.c.h.b16 %v1148
      %v1259 = vunpack.c.l.b16 %v1149
      %v1260 = vunpack.c.h.b16 %v1149
      %v1261 = vunpack.c.l.b16 %v1150
      %v1262 = vunpack.c.h.b16 %v1150
      %v1263 = vunpack.c.l.b16 %v1151
      %v1264 = vunpack.c.h.b16 %v1151
      %v1265 = vunpack.c.l.b16 %v1152
      %v1266 = vunpack.c.h.b16 %v1152
      %v1267 = vunpack.c.l.b16 %v1153
      %v1268 = vunpack.c.h.b16 %v1153
      %v1269 = vunpack.c.l.b16 %v1154
      %v1270 = vunpack.c.h.b16 %v1154
      %v1271 = vunpack.c.l.b16 %v1155
      %v1272 = vunpack.c.h.b16 %v1155
      %v1273 = vunpack.c.l.b16 %v1156
      %v1274 = vunpack.c.h.b16 %v1156
      %v1275 = vpack.c.b16 %v1215, %v1211
      %v1276 = vpack.c.b16 %v1216, %v1212
      %v1277 = vpack.c.b16 %v1217, %v1213
      %v1278 = vpack.c.b16 %v1218, %v1214
      %v1279 = vpack.c.b16 %v1223, %v1219
      %v1280 = vpack.c.b16 %v1224, %v1220
      %v1281 = vpack.c.b16 %v1225, %v1221
      %v1282 = vpack.c.b16 %v1226, %v1222
      %v1283 = vpack.c.b16 %v1231, %v1227
      %v1284 = vpack.c.b16 %v1232, %v1228
      %v1285 = vpack.c.b16 %v1233, %v1229
      %v1286 = vpack.c.b16 %v1234, %v1230
      %v1287 = vpack.c.b16 %v1239, %v1235
      %v1288 = vpack.c.b16 %v1240, %v1236
      %v1289 = vpack.c.b16 %v1241, %v1237
      %v1290 = vpack.c.b16 %v1242, %v1238
      %v1291 = vpack.c.b16 %v1247, %v1243
      %v1292 = vpack.c.b16 %v1248, %v1244
      %v1293 = vpack.c.b16 %v1249, %v1245
      %v1294 = vpack.c.b16 %v1250, %v1246
      %v1295 = vpack.c.b16 %v1255, %v1251
      %v1296 = vpack.c.b16 %v1256, %v1252
      %v1297 = vpack.c.b16 %v1257, %v1253
      %v1298 = vpack.c.b16 %v1258, %v1254
      %v1299 = vpack.c.b16 %v1263, %v1259
      %v1300 = vpack.c.b16 %v1264, %v1260
      %v1301 = vpack.c.b16 %v1265, %v1261
      %v1302 = vpack.c.b16 %v1266, %v1262
      %v1303 = vpack.c.b16 %v1271, %v1267
      %v1304 = vpack.c.b16 %v1272, %v1268
      %v1305 = vpack.c.b16 %v1273, %v1269
      %v1306 = vpack.c.b16 %v1274, %v1270
      %1339 = vmatprep.subr.bf16.mxu0 %v1276
      %1340 = vmatpush1.bf16.msra.mxu0 %v1275
      %1341 = vmatprep.subr.bf16.mxu0 %v1280
      %1342 = vmatpush1.bf16.msra.mxu0 %v1279
      %1343 = vmatprep.subr.bf16.mxu0 %v1284
      %1344 = vmatpush1.bf16.msra.mxu0 %v1283
      %1345 = vmatprep.subr.bf16.mxu0 %v1288
      %1346 = vmatpush1.bf16.msra.mxu0 %v1287
      %1347 = vmatprep.subr.bf16.mxu0 %v1292
      %1348 = vmatpush1.bf16.msra.mxu0 %v1291
      %1349 = vmatprep.subr.bf16.mxu0 %v1296
      %1350 = vmatpush1.bf16.msra.mxu0 %v1295
      %1351 = vmatprep.subr.bf16.mxu0 %v1300
      %1352 = vmatpush1.bf16.msra.mxu0 %v1299
      %1353 = vmatprep.subr.bf16.mxu0 %v1304
      %1354 = vmatpush1.bf16.msra.mxu0 %v1303
      %1355 = vmatprep.subr.bf16.mxu0 0
      %1356 = vmatpush1.bf16.msra.mxu0 0
      %1357 = vmatprep.subr.bf16.mxu0 0
      %1358 = vmatpush1.bf16.msra.mxu0 0
      %1359 = vmatprep.subr.bf16.mxu0 0
      %1360 = vmatpush1.bf16.msra.mxu0 0
      %1361 = vmatprep.subr.bf16.mxu0 0
      %1362 = vmatpush1.bf16.msra.mxu0 0
      %1363 = vmatprep.subr.bf16.mxu0 0
      %1364 = vmatpush1.bf16.msra.mxu0 0
      %1365 = vmatprep.subr.bf16.mxu0 0
      %1366 = vmatpush1.bf16.msra.mxu0 0
      %1367 = vmatprep.subr.bf16.mxu0 0
      %1368 = vmatpush1.bf16.msra.mxu0 0
      %1369 = vmatprep.subr.bf16.mxu0 0
      %1370 = vmatpush1.bf16.msra.mxu0 0
      %1371 = vmatprep.mubr.bf16.mxu0 0
      %1372 = vmatmul.mubr.bf16.gmra.mrb[0].mxu0 %v1123
      %v1373 = vpop.f32.mrb[0].mxu0
      %v1374 = vadd.f32 %v1162, %v1373
      %v1375 = vpop.f32.mrb[0].mxu0
      %v1376 = vadd.f32 %v1166, %v1375
      %v1377 = vpop.f32.mrb[0].mxu0
      %v1378 = vadd.f32 %v1162, %v1377
      %v1379 = vpop.f32.mrb[0].mxu0
      %v1380 = vadd.f32 %v1166, %v1379
      %1381 = vmatprep.mubr.bf16.mxu0 0
      %1382 = vmatmul.mubr.bf16.gmra.mrb[0].mxu0 %v1124
      %v1383 = vpop.f32.mrb[0].mxu0
      %v1384 = vadd.f32 %v1162, %v1383
      %v1385 = vpop.f32.mrb[0].mxu0
      %v1386 = vadd.f32 %v1166, %v1385
      %v1387 = vpop.f32.mrb[0].mxu0
      %v1388 = vadd.f32 %v1162, %v1387
      %v1389 = vpop.f32.mrb[0].mxu0
      %v1390 = vadd.f32 %v1166, %v1389
      %1391 = vdwg.mxu0
      %1392 = vmatprep.subr.bf16.mxu0 %v1278
      %1393 = vmatpush1.bf16.msra.mxu0 %v1277
      %1394 = vmatprep.subr.bf16.mxu0 %v1282
      %1395 = vmatpush1.bf16.msra.mxu0 %v1281
      %1396 = vmatprep.subr.bf16.mxu0 %v1286
      %1397 = vmatpush1.bf16.msra.mxu0 %v1285
      %1398 = vmatprep.subr.bf16.mxu0 %v1290
      %1399 = vmatpush1.bf16.msra.mxu0 %v1289
      %1400 = vmatprep.subr.bf16.mxu0 %v1294
      %1401 = vmatpush1.bf16.msra.mxu0 %v1293
      %1402 = vmatprep.subr.bf16.mxu0 %v1298
      %1403 = vmatpush1.bf16.msra.mxu0 %v1297
      %1404 = vmatprep.subr.bf16.mxu0 %v1302
      %1405 = vmatpush1.bf16.msra.mxu0 %v1301
      %1406 = vmatprep.subr.bf16.mxu0 %v1306
      %1407 = vmatpush1.bf16.msra.mxu0 %v1305
      %1408 = vmatprep.subr.bf16.mxu0 0
      %1409 = vmatpush1.bf16.msra.mxu0 0
      %1410 = vmatprep.subr.bf16.mxu0 0
      %1411 = vmatpush1.bf16.msra.mxu0 0
      %1412 = vmatprep.subr.bf16.mxu0 0
      %1413 = vmatpush1.bf16.msra.mxu0 0
      %1414 = vmatprep.subr.bf16.mxu0 0
      %1415 = vmatpush1.bf16.msra.mxu0 0
      %1416 = vmatprep.subr.bf16.mxu0 0
      %1417 = vmatpush1.bf16.msra.mxu0 0
      %1418 = vmatprep.subr.bf16.mxu0 0
      %1419 = vmatpush1.bf16.msra.mxu0 0
      %1420 = vmatprep.subr.bf16.mxu0 0
      %1421 = vmatpush1.bf16.msra.mxu0 0
      %1422 = vmatprep.subr.bf16.mxu0 0
      %1423 = vmatpush1.bf16.msra.mxu0 0
      %1424 = vmatprep.mubr.bf16.mxu0 0
      %1425 = vmatmul.mubr.bf16.gmra.mrb[0].mxu0 %v1123
      %v1426 = vpop.f32.mrb[0].mxu0
      %v1427 = vadd.f32 %v1170, %v1426
      %v1428 = vpop.f32.mrb[0].mxu0
      %v1429 = vadd.f32 %v1174, %v1428
      %v1430 = vpop.f32.mrb[0].mxu0
      %v1431 = vadd.f32 %v1170, %v1430
      %v1432 = vpop.f32.mrb[0].mxu0
      %v1433 = vadd.f32 %v1174, %v1432
      %1434 = vmatprep.mubr.bf16.mxu0 0
      %1435 = vmatmul.mubr.bf16.gmra.mrb[0].mxu0 %v1124
      %v1436 = vpop.f32.mrb[0].mxu0
      %v1437 = vadd.f32 %v1170, %v1436
      %v1438 = vpop.f32.mrb[0].mxu0
      %v1439 = vadd.f32 %v1174, %v1438
      %v1440 = vpop.f32.mrb[0].mxu0
      %v1441 = vadd.f32 %v1170, %v1440
      %v1442 = vpop.f32.mrb[0].mxu0
      %v1443 = vadd.f32 %v1174, %v1442
      %1444 = vdwg.mxu0
      %v1445 = vpack.c.bf16 %v1378, %v1374
      %v1446 = vpack.c.bf16 %v1380, %v1376
      %v1447 = vpack.c.bf16 %v1431, %v1427
      %v1448 = vpack.c.bf16 %v1433, %v1429
      %v1449 = vpack.c.bf16 %v1388, %v1384
      %v1450 = vpack.c.bf16 %v1390, %v1386
      %v1451 = vpack.c.bf16 %v1441, %v1437
      %v1452 = vpack.c.bf16 %v1443, %v1439
      %v1453 = vmul.bf16 %v1445, 1056980736
      %v1454 = vmul.bf16 %v1446, 1056980736
      %v1455 = vmul.bf16 %v1447, 1056980736
      %v1456 = vmul.bf16 %v1448, 1056980736
      %v1457 = vmul.bf16 %v1449, 1056980736
      %v1458 = vmul.bf16 %v1450, 1056980736
      %v1459 = vmul.bf16 %v1451, 1056980736
      %v1460 = vmul.bf16 %v1452, 1056980736
      %v1461 = vmul.bf16 %v1445, 1027030327
      %v1462 = vmul.bf16 %v1446, 1027030327
      %v1463 = vmul.bf16 %v1447, 1027030327
      %v1464 = vmul.bf16 %v1448, 1027030327
      %v1465 = vmul.bf16 %v1449, 1027030327
      %v1466 = vmul.bf16 %v1450, 1027030327
      %v1467 = vmul.bf16 %v1451, 1027030327
      %v1468 = vmul.bf16 %v1452, 1027030327
      %v1469 = vmul.bf16 %v1461, %v1445
      %v1470 = vmul.bf16 %v1462, %v1446
      %v1471 = vmul.bf16 %v1463, %v1447
      %v1472 = vmul.bf16 %v1464, %v1448
      %v1473 = vmul.bf16 %v1465, %v1449
      %v1474 = vmul.bf16 %v1466, %v1450
      %v1475 = vmul.bf16 %v1467, %v1451
      %v1476 = vmul.bf16 %v1468, %v1452
      %v1477 = vmul.bf16 %v1469, %v1445
      %v1478 = vmul.bf16 %v1470, %v1446
      %v1479 = vmul.bf16 %v1471, %v1447
      %v1480 = vmul.bf16 %v1472, %v1448
      %v1481 = vmul.bf16 %v1473, %v1449
      %v1482 = vmul.bf16 %v1474, %v1450
      %v1483 = vmul.bf16 %v1475, %v1451
      %v1484 = vmul.bf16 %v1476, %v1452
      %v1485 = vadd.bf16 %v1445, %v1477
      %v1486 = vadd.bf16 %v1446, %v1478
      %v1487 = vadd.bf16 %v1447, %v1479
      %v1488 = vadd.bf16 %v1448, %v1480
      %v1489 = vadd.bf16 %v1449, %v1481
      %v1490 = vadd.bf16 %v1450, %v1482
      %v1491 = vadd.bf16 %v1451, %v1483
      %v1492 = vadd.bf16 %v1452, %v1484
      %v1493 = vmul.bf16 %v1485, 1061961548
      %v1494 = vmul.bf16 %v1486, 1061961548
      %v1495 = vmul.bf16 %v1487, 1061961548
      %v1496 = vmul.bf16 %v1488, 1061961548
      %v1497 = vmul.bf16 %v1489, 1061961548
      %v1498 = vmul.bf16 %v1490, 1061961548
      %v1499 = vmul.bf16 %v1491, 1061961548
      %v1500 = vmul.bf16 %v1492, 1061961548
      %v1501 = vtanh.bf16.pop %v1493
      %v1502 = vtanh.bf16.pop %v1494
      %v1503 = vtanh.bf16.pop %v1495
      %v1504 = vtanh.bf16.pop %v1496
      %v1505 = vtanh.bf16.pop %v1497
      %v1506 = vtanh.bf16.pop %v1498
      %v1507 = vtanh.bf16.pop %v1499
      %v1508 = vtanh.bf16.pop %v1500
      %v1509 = vadd.bf16 %v1501, 1065369472
      %v1510 = vadd.bf16 %v1502, 1065369472
      %v1511 = vadd.bf16 %v1503, 1065369472
      %v1512 = vadd.bf16 %v1504, 1065369472
      %v1513 = vadd.bf16 %v1505, 1065369472
      %v1514 = vadd.bf16 %v1506, 1065369472
      %v1515 = vadd.bf16 %v1507, 1065369472
      %v1516 = vadd.bf16 %v1508, 1065369472
      %v1517 = vmul.bf16 %v1453, %v1509
      %v1518 = vmul.bf16 %v1454, %v1510
      %v1519 = vmul.bf16 %v1455, %v1511
      %v1520 = vmul.bf16 %v1456, %v1512
      %v1521 = vmul.bf16 %v1457, %v1513
      %v1522 = vmul.bf16 %v1458, %v1514
      %v1523 = vmul.bf16 %v1459, %v1515
      %v1524 = vmul.bf16 %v1460, %v1516
      %v1525 = vld [vmem:[%s8] sm:$0xf]
      %v1526 = vld [vmem:[%s8 + $0x4] sm:$0xf]
      %v1527 = vld [vmem:[%s8 + $0x8] sm:$0xf]
      %v1528 = vld [vmem:[%s8 + $0xc] sm:$0xf]
      %v1529 = vld [vmem:[%s8 + $0x10] sm:$0xf]
      %v1530 = vld [vmem:[%s8 + $0x14] sm:$0xf]
      %v1531 = vld [vmem:[%s8 + $0x18] sm:$0xf]
      %v1532 = vld [vmem:[%s8 + $0x1c] sm:$0xf]
      %v1533 = vld [vmem:[%s8 + $0x20] sm:$0xf]
      %v1534 = vld [vmem:[%s8 + $0x24] sm:$0xf]
      %v1535 = vld [vmem:[%s8 + $0x28] sm:$0xf]
      %v1536 = vld [vmem:[%s8 + $0x2c] sm:$0xf]
      %v1537 = vld [vmem:[%s8 + $0x30] sm:$0xf]
      %v1538 = vld [vmem:[%s8 + $0x34] sm:$0xf]
      %v1539 = vld [vmem:[%s8 + $0x38] sm:$0xf]
      %v1540 = vld [vmem:[%s8 + $0x3c] sm:$0xf]
      %v1541 = vld [vmem:[%s8 + $0x40] sm:$0xf]
      %v1542 = vld [vmem:[%s8 + $0x44] sm:$0xf]
      %v1543 = vld [vmem:[%s8 + $0x48] sm:$0xf]
      %v1544 = vld [vmem:[%s8 + $0x4c] sm:$0xf]
      %v1545 = vld [vmem:[%s8 + $0x50] sm:$0xf]
      %v1546 = vld [vmem:[%s8 + $0x54] sm:$0xf]
      %v1547 = vld [vmem:[%s8 + $0x58] sm:$0xf]
      %v1548 = vld [vmem:[%s8 + $0x5c] sm:$0xf]
      %v1549 = vld [vmem:[%s8 + $0x60] sm:$0xf]
      %v1550 = vld [vmem:[%s8 + $0x64] sm:$0xf]
      %v1551 = vld [vmem:[%s8 + $0x68] sm:$0xf]
      %v1552 = vld [vmem:[%s8 + $0x6c] sm:$0xf]
      %v1553 = vld [vmem:[%s8 + $0x70] sm:$0xf]
      %v1554 = vld [vmem:[%s8 + $0x74] sm:$0xf]
      %v1555 = vld [vmem:[%s8 + $0x78] sm:$0xf]
      %v1556 = vld [vmem:[%s8 + $0x7c] sm:$0xf]
      %v1557 = vld [vmem:[%s8 + $0x80] sm:$0xf]
      %v1558 = vld [vmem:[%s8 + $0x84] sm:$0xf]
      %v1559 = vld [vmem:[%s8 + $0x88] sm:$0xf]
      %v1560 = vld [vmem:[%s8 + $0x8c] sm:$0xf]
      %v1561 = vld [vmem:[%s8 + $0x90] sm:$0xf]
      %v1562 = vld [vmem:[%s8 + $0x94] sm:$0xf]
      %v1563 = vld [vmem:[%s8 + $0x98] sm:$0xf]
      %v1564 = vld [vmem:[%s8 + $0x9c] sm:$0xf]
      %v1565 = vld [vmem:[%s8 + $0xa0] sm:$0xf]
      %v1566 = vld [vmem:[%s8 + $0xa4] sm:$0xf]
      %v1567 = vld [vmem:[%s8 + $0xa8] sm:$0xf]
      %v1568 = vld [vmem:[%s8 + $0xac] sm:$0xf]
      %v1569 = vld [vmem:[%s8 + $0xb0] sm:$0xf]
      %v1570 = vld [vmem:[%s8 + $0xb4] sm:$0xf]
      %v1571 = vld [vmem:[%s8 + $0xb8] sm:$0xf]
      %v1572 = vld [vmem:[%s8 + $0xbc] sm:$0xf]
      %v1573 = vld [vmem:[%s8 + $0xc0] sm:$0xf]
      %v1574 = vld [vmem:[%s8 + $0xc4] sm:$0xf]
      %v1575 = vld [vmem:[%s8 + $0xc8] sm:$0xf]
      %v1576 = vld [vmem:[%s8 + $0xcc] sm:$0xf]
      %v1577 = vld [vmem:[%s8 + $0xd0] sm:$0xf]
      %v1578 = vld [vmem:[%s8 + $0xd4] sm:$0xf]
      %v1579 = vld [vmem:[%s8 + $0xd8] sm:$0xf]
      %v1580 = vld [vmem:[%s8 + $0xdc] sm:$0xf]
      %v1581 = vld [vmem:[%s8 + $0xe0] sm:$0xf]
      %v1582 = vld [vmem:[%s8 + $0xe4] sm:$0xf]
      %v1583 = vld [vmem:[%s8 + $0xe8] sm:$0xf]
      %v1584 = vld [vmem:[%s8 + $0xec] sm:$0xf]
      %v1585 = vld [vmem:[%s8 + $0xf0] sm:$0xf]
      %v1586 = vld [vmem:[%s8 + $0xf4] sm:$0xf]
      %v1587 = vld [vmem:[%s8 + $0xf8] sm:$0xf]
      %v1588 = vld [vmem:[%s8 + $0xfc] sm:$0xf]
      %v1589 = vld [vmem:[%s9] sm:$0x1]
      %v1591 = vlaneseq
      %v1592 = vshrl.u32 %v1591, 7
      %v1593 = vsub.s32 0, %v1592
      %v1594 = vrot.slane %v1589, %v1593
      %v1660 = vunpack.c.l.b16 %v1525
      %v1661 = vunpack.c.l.b16 %v1526
      %v1662 = vunpack.c.l.b16 %v1527
      %v1663 = vunpack.c.l.b16 %v1528
      %v1664 = vunpack.c.l.b16 %v1529
      %v1665 = vunpack.c.l.b16 %v1530
      %v1666 = vunpack.c.l.b16 %v1531
      %v1667 = vunpack.c.l.b16 %v1532
      %v1668 = vunpack.c.l.b16 %v1533
      %v1669 = vunpack.c.l.b16 %v1534
      %v1670 = vunpack.c.l.b16 %v1535
      %v1671 = vunpack.c.l.b16 %v1536
      %v1672 = vunpack.c.l.b16 %v1537
      %v1673 = vunpack.c.l.b16 %v1538
      %v1674 = vunpack.c.l.b16 %v1539
      %v1675 = vunpack.c.l.b16 %v1540
      %v1676 = vunpack.c.l.b16 %v1541
      %v1677 = vunpack.c.l.b16 %v1542
      %v1678 = vunpack.c.l.b16 %v1543
      %v1679 = vunpack.c.l.b16 %v1544
      %v1680 = vunpack.c.l.b16 %v1545
      %v1681 = vunpack.c.l.b16 %v1546
      %v1682 = vunpack.c.l.b16 %v1547
      %v1683 = vunpack.c.l.b16 %v1548
      %v1684 = vunpack.c.l.b16 %v1549
      %v1685 = vunpack.c.l.b16 %v1550
      %v1686 = vunpack.c.l.b16 %v1551
      %v1687 = vunpack.c.l.b16 %v1552
      %v1688 = vunpack.c.l.b16 %v1553
      %v1689 = vunpack.c.l.b16 %v1554
      %v1690 = vunpack.c.l.b16 %v1555
      %v1691 = vunpack.c.l.b16 %v1556
      %v1692 = vunpack.c.l.b16 %v1557
      %v1693 = vunpack.c.l.b16 %v1558
      %v1694 = vunpack.c.l.b16 %v1559
      %v1695 = vunpack.c.l.b16 %v1560
      %v1696 = vunpack.c.l.b16 %v1561
      %v1697 = vunpack.c.l.b16 %v1562
      %v1698 = vunpack.c.l.b16 %v1563
      %v1699 = vunpack.c.l.b16 %v1564
      %v1700 = vunpack.c.l.b16 %v1565
      %v1701 = vunpack.c.l.b16 %v1566
      %v1702 = vunpack.c.l.b16 %v1567
      %v1703 = vunpack.c.l.b16 %v1568
      %v1704 = vunpack.c.l.b16 %v1569
      %v1705 = vunpack.c.l.b16 %v1570
      %v1706 = vunpack.c.l.b16 %v1571
      %v1707 = vunpack.c.l.b16 %v1572
      %v1708 = vunpack.c.l.b16 %v1573
      %v1709 = vunpack.c.l.b16 %v1574
      %v1710 = vunpack.c.l.b16 %v1575
      %v1711 = vunpack.c.l.b16 %v1576
      %v1712 = vunpack.c.l.b16 %v1577
      %v1713 = vunpack.c.l.b16 %v1578
      %v1714 = vunpack.c.l.b16 %v1579
      %v1715 = vunpack.c.l.b16 %v1580
      %v1716 = vunpack.c.l.b16 %v1581
      %v1717 = vunpack.c.l.b16 %v1582
      %v1718 = vunpack.c.l.b16 %v1583
      %v1719 = vunpack.c.l.b16 %v1584
      %v1720 = vunpack.c.l.b16 %v1585
      %v1721 = vunpack.c.l.b16 %v1586
      %v1722 = vunpack.c.l.b16 %v1587
      %v1723 = vunpack.c.l.b16 %v1588
      %v1724 = vpack.c.b16 %v1661, %v1660
      %v1725 = vpack.c.b16 %v1663, %v1662
      %v1726 = vpack.c.b16 %v1665, %v1664
      %v1727 = vpack.c.b16 %v1667, %v1666
      %v1728 = vpack.c.b16 %v1669, %v1668
      %v1729 = vpack.c.b16 %v1671, %v1670
      %v1730 = vpack.c.b16 %v1673, %v1672
      %v1731 = vpack.c.b16 %v1675, %v1674
      %v1732 = vpack.c.b16 %v1677, %v1676
      %v1733 = vpack.c.b16 %v1679, %v1678
      %v1734 = vpack.c.b16 %v1681, %v1680
      %v1735 = vpack.c.b16 %v1683, %v1682
      %v1736 = vpack.c.b16 %v1685, %v1684
      %v1737 = vpack.c.b16 %v1687, %v1686
      %v1738 = vpack.c.b16 %v1689, %v1688
      %v1739 = vpack.c.b16 %v1691, %v1690
      %v1740 = vpack.c.b16 %v1693, %v1692
      %v1741 = vpack.c.b16 %v1695, %v1694
      %v1742 = vpack.c.b16 %v1697, %v1696
      %v1743 = vpack.c.b16 %v1699, %v1698
      %v1744 = vpack.c.b16 %v1701, %v1700
      %v1745 = vpack.c.b16 %v1703, %v1702
      %v1746 = vpack.c.b16 %v1705, %v1704
      %v1747 = vpack.c.b16 %v1707, %v1706
      %v1748 = vpack.c.b16 %v1709, %v1708
      %v1749 = vpack.c.b16 %v1711, %v1710
      %v1750 = vpack.c.b16 %v1713, %v1712
      %v1751 = vpack.c.b16 %v1715, %v1714
      %v1752 = vpack.c.b16 %v1717, %v1716
      %v1753 = vpack.c.b16 %v1719, %v1718
      %v1754 = vpack.c.b16 %v1721, %v1720
      %v1755 = vpack.c.b16 %v1723, %v1722
      %1788 = vmatprep.subr.bf16.mxu0 0
      %1789 = vmatpush1.bf16.msra.mxu0 %v1724
      %1790 = vmatprep.subr.bf16.mxu0 0
      %1791 = vmatpush1.bf16.msra.mxu0 %v1725
      %1792 = vmatprep.subr.bf16.mxu0 0
      %1793 = vmatpush1.bf16.msra.mxu0 %v1726
      %1794 = vmatprep.subr.bf16.mxu0 0
      %1795 = vmatpush1.bf16.msra.mxu0 %v1727
      %1796 = vmatprep.subr.bf16.mxu0 0
      %1797 = vmatpush1.bf16.msra.mxu0 %v1728
      %1798 = vmatprep.subr.bf16.mxu0 0
      %1799 = vmatpush1.bf16.msra.mxu0 %v1729
      %1800 = vmatprep.subr.bf16.mxu0 0
      %1801 = vmatpush1.bf16.msra.mxu0 %v1730
      %1802 = vmatprep.subr.bf16.mxu0 0
      %1803 = vmatpush1.bf16.msra.mxu0 %v1731
      %1804 = vmatprep.subr.bf16.mxu0 0
      %1805 = vmatpush1.bf16.msra.mxu0 %v1732
      %1806 = vmatprep.subr.bf16.mxu0 0
      %1807 = vmatpush1.bf16.msra.mxu0 %v1733
      %1808 = vmatprep.subr.bf16.mxu0 0
      %1809 = vmatpush1.bf16.msra.mxu0 %v1734
      %1810 = vmatprep.subr.bf16.mxu0 0
      %1811 = vmatpush1.bf16.msra.mxu0 %v1735
      %1812 = vmatprep.subr.bf16.mxu0 0
      %1813 = vmatpush1.bf16.msra.mxu0 %v1736
      %1814 = vmatprep.subr.bf16.mxu0 0
      %1815 = vmatpush1.bf16.msra.mxu0 %v1737
      %1816 = vmatprep.subr.bf16.mxu0 0
      %1817 = vmatpush1.bf16.msra.mxu0 %v1738
      %1818 = vmatprep.subr.bf16.mxu0 0
      %1819 = vmatpush1.bf16.msra.mxu0 %v1739
      %1820 = vmatprep.mubr.bf16.mxu0 %v1518
      %1821 = vmatmul.mubr.bf16.gmra.mrb[0].mxu0 %v1517
      %v1822 = vpop.f32.mrb[0].mxu0
      %v1823 = vadd.f32 %v1594, %v1822
      %v1824 = vpop.f32.mrb[0].mxu0
      %v1825 = vpop.f32.mrb[0].mxu0
      %v1826 = vadd.f32 %v1594, %v1825
      %v1827 = vpop.f32.mrb[0].mxu0
      %1828 = vmatprep.mubr.bf16.mxu0 %v1522
      %1829 = vmatmul.mubr.bf16.gmra.mrb[0].mxu0 %v1521
      %v1830 = vpop.f32.mrb[0].mxu0
      %v1831 = vadd.f32 %v1594, %v1830
      %v1832 = vpop.f32.mrb[0].mxu0
      %v1833 = vpop.f32.mrb[0].mxu0
      %v1834 = vadd.f32 %v1594, %v1833
      %v1835 = vpop.f32.mrb[0].mxu0
      %1836 = vdwg.mxu0
      %1837 = vmatprep.subr.bf16.mxu0 0
      %1838 = vmatpush1.bf16.msra.mxu0 %v1740
      %1839 = vmatprep.subr.bf16.mxu0 0
      %1840 = vmatpush1.bf16.msra.mxu0 %v1741
      %1841 = vmatprep.subr.bf16.mxu0 0
      %1842 = vmatpush1.bf16.msra.mxu0 %v1742
      %1843 = vmatprep.subr.bf16.mxu0 0
      %1844 = vmatpush1.bf16.msra.mxu0 %v1743
      %1845 = vmatprep.subr.bf16.mxu0 0
      %1846 = vmatpush1.bf16.msra.mxu0 %v1744
      %1847 = vmatprep.subr.bf16.mxu0 0
      %1848 = vmatpush1.bf16.msra.mxu0 %v1745
      %1849 = vmatprep.subr.bf16.mxu0 0
      %1850 = vmatpush1.bf16.msra.mxu0 %v1746
      %1851 = vmatprep.subr.bf16.mxu0 0
      %1852 = vmatpush1.bf16.msra.mxu0 %v1747
      %1853 = vmatprep.subr.bf16.mxu0 0
      %1854 = vmatpush1.bf16.msra.mxu0 %v1748
      %1855 = vmatprep.subr.bf16.mxu0 0
      %1856 = vmatpush1.bf16.msra.mxu0 %v1749
      %1857 = vmatprep.subr.bf16.mxu0 0
      %1858 = vmatpush1.bf16.msra.mxu0 %v1750
      %1859 = vmatprep.subr.bf16.mxu0 0
      %1860 = vmatpush1.bf16.msra.mxu0 %v1751
      %1861 = vmatprep.subr.bf16.mxu0 0
      %1862 = vmatpush1.bf16.msra.mxu0 %v1752
      %1863 = vmatprep.subr.bf16.mxu0 0
      %1864 = vmatpush1.bf16.msra.mxu0 %v1753
      %1865 = vmatprep.subr.bf16.mxu0 0
      %1866 = vmatpush1.bf16.msra.mxu0 %v1754
      %1867 = vmatprep.subr.bf16.mxu0 0
      %1868 = vmatpush1.bf16.msra.mxu0 %v1755
      %1869 = vmatprep.mubr.bf16.mxu0 %v1520
      %1870 = vmatmul.mubr.bf16.gmra.mrb[0].mxu0 %v1519
      %v1871 = vpop.f32.mrb[0].mxu0
      %v1872 = vadd.f32 %v1823, %v1871
      %v1873 = vpop.f32.mrb[0].mxu0
      %v1874 = vpop.f32.mrb[0].mxu0
      %v1875 = vadd.f32 %v1826, %v1874
      %v1876 = vpop.f32.mrb[0].mxu0
      %1877 = vmatprep.mubr.bf16.mxu0 %v1524
      %1878 = vmatmul.mubr.bf16.gmra.mrb[0].mxu0 %v1523
      %v1879 = vpop.f32.mrb[0].mxu0
      %v1880 = vadd.f32 %v1831, %v1879
      %v1881 = vpop.f32.mrb[0].mxu0
      %v1882 = vpop.f32.mrb[0].mxu0
      %v1883 = vadd.f32 %v1834, %v1882
      %v1884 = vpop.f32.mrb[0].mxu0
      %1885 = vdwg.mxu0
      %v1886 = vadd.f32 %v1872, %v1119
      %v1887 = vadd.f32 %v1875, %v1120
      %v1888 = vadd.f32 %v1880, %v1121
      %v1889 = vadd.f32 %v1883, %v1122
      %v1890 = vpack.c.bf16 %v1887, %v1886
      %v1891 = vpack.c.bf16 %v1889, %v1888
      %v1894 = vunpack.c.l.b16 %v1890
      %v1895 = vunpack.c.h.b16 %v1890
      %v1896 = vunpack.c.l.b16 %v1891
      %v1897 = vunpack.c.h.b16 %v1891
      %v1898 = vpack.c.b16 %v1894, %v1894
      %v1899 = vpack.c.b16 %v1895, %v1895
      %v1900 = vpack.c.b16 %v1896, %v1896
      %v1901 = vpack.c.b16 %v1897, %v1897
      %1906 = vst [vmem:[%s366] sm:$0xf] %v1898
      %1907 = vst [vmem:[%s366 + $0x4] sm:$0xf] %v1899
      %1908 = vst [vmem:[%s366 + $0x8] sm:$0xf] %v1900
      %1909 = vst [vmem:[%s366 + $0xc] sm:$0xf] %v1901
      %s1910 = smul.u32 2, %s21
      %p1911 = scmp.lt.s32.totalorder %s1910, 3
      %s1912 = scalar_select %p1911, %s1910, 3
      %s1913 = smul.addr %s1912, 2
      %s1914 = smul.addr %s1913, 4
      %s1915 = scalar_lea.vmem %s10, %s1914
      // Predicated region
      $region61: #{longnet_forward.4} parent=59 // pred_check
        %p1916 = pneg %p254
      $region62: #{longnet_forward.4} parent=59 // pred_check_branch
        %1918 = sbr.rel (%p1916) target = $region64
      $region63: #{longnet_forward.4} parent=59 // pred_region
        %s1919 = smul.u32 2, %s21
      $region64: #{longnet_forward.4} parent=59 // pred_fallthru
        _
    $region60: #{longnet_forward.4} parent=5 // pred_fallthru
      _
    %p1920 = scmp.le.s32.totalorder 2, %s16
    // Predicated region
    $region65: #{longnet_forward.4} parent=5 // pred_check
      %p1921 = pneg %p1920
    $region66: #{longnet_forward.4} parent=5 // pred_check_branch
      %1923 = sbr.rel (%p1921) target = $region68
    $region67: #{longnet_forward.4} parent=5 // pred_region
      %s1924 = ssub.s32 %s16, 2
      // Predicated region
      $region69: #{longnet_forward.4} parent=67 // pred_check
        %p1925 = pneg %p260
      $region70: #{longnet_forward.4} parent=67 // pred_check_branch
        %1927 = sbr.rel (%p1925) target = $region72
      $region71: #{longnet_forward.4} parent=67 // pred_region
        %s1928 = smul.u32 2, %s22
        %p1929 = scmp.lt.s32.totalorder %s1928, 3
        %s1930 = scalar_select %p1929, %s1928, 3
        %s1931 = smul.addr %s1930, 2
        %s1932 = smul.addr %s1931, 4
        %s1933 = scalar_lea.vmem %s10, %s1932
      $region72: #{longnet_forward.4} parent=67 // pred_fallthru
        _
    $region68: #{longnet_forward.4} parent=5 // pred_fallthru
      _
  $region6: #{longnet_forward.4} parent=0 // loop_footer
    %s20 = sadd.s32 1, %s16
  $region7: #{longnet_forward.4} parent=0 // loop_footer_branch
    %15 = sbr.rel target = $region3
  $region8: #{longnet_forward.4} parent=0 // loop_exit
    _

// kernel: longnet_forward.3
$region0: #{longnet_forward.3}
  #allocation0 [shape = 'u32[]', space=smem, size = 0x4, offset = 0x4, fixed_abs, tag = 'smem constant byte address 0x4 - core index']
  #allocation1 [shape = 'u32[144,128]{1,0:T(1,128)}', space=vmem, size = 0x12000, scoped, tag = 'internal scratch']
  %s0 = inlined_call_operand.vmem [shape: bf16[4,16,128], index: 0, kind: input, shape index: {}]
  %s1 = inlined_call_operand.vmem [shape: f32[1,128], index: 1, kind: input, shape index: {}]
  %s2 = inlined_call_operand.hbm [shape: bf16[128,384], index: 2, kind: input, shape index: {}]
  %s3 = inlined_call_operand.vmem [shape: f32[1,384], index: 3, kind: input, shape index: {}]
  %s4 = inlined_call_operand.vmem [shape: f32[1,128], index: 4, kind: input, shape index: {}]
  %s5 = inlined_call_operand.vmem [shape: f32[1,128], index: 5, kind: input, shape index: {}]
  %s6 = inlined_call_operand.vmem [shape: bf16[128,512], index: 6, kind: input, shape index: {}]
  %s7 = inlined_call_operand.vmem [shape: f32[1,512], index: 7, kind: input, shape index: {}]
  %s8 = inlined_call_operand.hbm [shape: bf16[512,128], index: 8, kind: input, shape index: {}]
  %s9 = inlined_call_operand.vmem [shape: f32[1,128], index: 9, kind: input, shape index: {}]
  %s10 = inlined_call_operand.vmem [shape: bf16[4,16,128], index: 10, kind: output, shape index: {}]
  %s11 = sld [smem:[#allocation0]]
  $region81: #{longnet_forward.3} parent=0
    _
  %s13 = ssub.s32 1, %s11
  %s14 = scalar_select 0, %s13, %s11
  $region1: #{longnet_forward.3} parent=0
    #allocation2 [shape = 'u8[98304]{0}', space=vmem, size = 0x18000, scoped, tag = 'input window, operand 2, single buffered']
    #allocation3 [shape = 's32[2]{0}', space=sflag, size = 0x8, scoped, tag = 'scoped memory for longnet_forward.3']
    #allocation4 [shape = 'u8[131072]{0}', space=vmem, size = 0x20000, scoped, tag = 'input window, operand 8, single buffered']
    #allocation5 [shape = 's32[1]{0}', space=sflag, size = 0x4, scoped, tag = 'scoped memory for longnet_forward.3']
    %15 = vsyncpa [#allocation3], 0
    %16 = vsyncpa [#allocation5], 0
    loop: start=0, step=1, limit=4
    $region2: #{longnet_forward.3} parent=1 // loop_pre_header
      _
    $region3: #{longnet_forward.3} parent=1 // loop_header
      %s18 = sphi 0, %s22
      %p19 = scmp.ge.s32.totalorder %s18, 4
      %s28 = sphi 0, %s30
      %s31 = sphi 0, %s28
      %s32 = sphi 0, %s31
      %s48 = sphi 0, %s32
      %s52 = sphi 0, %s52
      %s54 = sphi 0, %s52
      %s55 = sphi 0, %s54
      %s69 = sphi 0, %s55
      %s73 = sphi 0, %s73
      %s75 = sphi 0, %s73
      %s76 = sphi 0, %s75
      %s90 = sphi 0, %s76
      %s94 = sphi 0, %s94
      %s96 = sphi 0, %s94
      %s97 = sphi 0, %s96
      %s111 = sphi 0, %s97
      %s115 = sphi 0, %s115
      %s117 = sphi 0, %s115
      %s118 = sphi 0, %s117
      %s132 = sphi 0, %s118
      %s136 = sphi 0, %s136
      %s138 = sphi 0, %s136
      %s139 = sphi 0, %s138
      %s153 = sphi 0, %s139
      %s157 = sphi 0, %s157
      %s159 = sphi 0, %s157
      %s160 = sphi 0, %s159
      %s174 = sphi 0, %s160
      %s178 = sphi 0, %s178
      %s180 = sphi 0, %s178
      %s181 = sphi 0, %s180
      %s195 = sphi 0, %s181
      %s199 = sphi 0, %s199
      %s201 = sphi 0, %s199
      %s202 = sphi 0, %s201
      %s216 = sphi 0, %s202
      %s220 = sphi 0, %s220
      %s222 = sphi 0, %s220
      %s223 = sphi 0, %s222
      %s237 = sphi 0, %s223
      %s243 = sphi 0, %s245
      %s246 = sphi 0, %s243
      %s247 = sphi 0, %s246
      %s263 = sphi 0, %s247
    $region4: #{longnet_forward.3} parent=1 // loop_header_branch
      %21 = sbr.rel (%p19) target = $region8
    $region5: #{longnet_forward.3} parent=1 // loop_body
      %s23 = ssub.s32 %s18, 1
      %s24 = ssub.s32 %s18, 2
      %s25 = sadd.s32 %s18, 1
      %s26 = ssub.s32 %s18, %s25
      %p27 = scmp.eq.s32.totalorder %s26, 0
      %s29 = sadd.s32 %s28, 1
      %s30 = scalar_select %p27, %s28, %s29
      %p33 = pneg %p27
      %p34 = scmp.eq.s32.totalorder %s18, 1
      %p35 = por %p33, %p34
      %p36 = scmp.ne.s32.totalorder %s28, %s31
      %p37 = scmp.eq.s32.totalorder %s18, 0
      %p38 = por %p36, %p37
      %p39 = scmp.ne.s32.totalorder %s28, %s31
      %p40 = scmp.eq.s32.totalorder %s23, 1
      %p41 = por %p39, %p40
      %p42 = scmp.ne.s32.totalorder %s31, %s32
      %p43 = scmp.eq.s32.totalorder %s23, 0
      %p44 = por %p42, %p43
      %p45 = scmp.ne.s32.totalorder %s31, %s32
      %p46 = scmp.eq.s32.totalorder %s24, 1
      %p47 = por %p45, %p46
      %p49 = scmp.ne.s32.totalorder %s32, %s48
      %p50 = scmp.eq.s32.totalorder %s24, 0
      %p51 = por %p49, %p50
      %s53 = sadd.s32 %s52, 1
      %p56 = scmp.eq.s32.totalorder %s18, 1
      %p57 = scmp.ne.s32.totalorder %s52, %s54
      %p58 = scmp.eq.s32.totalorder %s18, 0
      %p59 = por %p57, %p58
      %p60 = scmp.ne.s32.totalorder %s52, %s54
      %p61 = scmp.eq.s32.totalorder %s23, 1
      %p62 = por %p60, %p61
      %p63 = scmp.ne.s32.totalorder %s54, %s55
      %p64 = scmp.eq.s32.totalorder %s23, 0
      %p65 = por %p63, %p64
      %p66 = scmp.ne.s32.totalorder %s54, %s55
      %p67 = scmp.eq.s32.totalorder %s24, 1
      %p68 = por %p66, %p67
      %p70 = scmp.ne.s32.totalorder %s55, %s69
      %p71 = scmp.eq.s32.totalorder %s24, 0
      %p72 = por %p70, %p71
      %s74 = sadd.s32 %s73, 1
      %p77 = scmp.eq.s32.totalorder %s18, 1
      %p78 = scmp.ne.s32.totalorder %s73, %s75
      %p79 = scmp.eq.s32.totalorder %s18, 0
      %p80 = por %p78, %p79
      %p81 = scmp.ne.s32.totalorder %s73, %s75
      %p82 = scmp.eq.s32.totalorder %s23, 1
      %p83 = por %p81, %p82
      %p84 = scmp.ne.s32.totalorder %s75, %s76
      %p85 = scmp.eq.s32.totalorder %s23, 0
      %p86 = por %p84, %p85
      %p87 = scmp.ne.s32.totalorder %s75, %s76
      %p88 = scmp.eq.s32.totalorder %s24, 1
      %p89 = por %p87, %p88
      %p91 = scmp.ne.s32.totalorder %s76, %s90
      %p92 = scmp.eq.s32.totalorder %s24, 0
      %p93 = por %p91, %p92
      %s95 = sadd.s32 %s94, 1
      %p98 = scmp.eq.s32.totalorder %s18, 1
      %p99 = scmp.ne.s32.totalorder %s94, %s96
      %p100 = scmp.eq.s32.totalorder %s18, 0
      %p101 = por %p99, %p100
      %p102 = scmp.ne.s32.totalorder %s94, %s96
      %p103 = scmp.eq.s32.totalorder %s23, 1
      %p104 = por %p102, %p103
      %p105 = scmp.ne.s32.totalorder %s96, %s97
      %p106 = scmp.eq.s32.totalorder %s23, 0
      %p107 = por %p105, %p106
      %p108 = scmp.ne.s32.totalorder %s96, %s97
      %p109 = scmp.eq.s32.totalorder %s24, 1
      %p110 = por %p108, %p109
      %p112 = scmp.ne.s32.totalorder %s97, %s111
      %p113 = scmp.eq.s32.totalorder %s24, 0
      %p114 = por %p112, %p113
      %s116 = sadd.s32 %s115, 1
      %p119 = scmp.eq.s32.totalorder %s18, 1
      %p120 = scmp.ne.s32.totalorder %s115, %s117
      %p121 = scmp.eq.s32.totalorder %s18, 0
      %p122 = por %p120, %p121
      %p123 = scmp.ne.s32.totalorder %s115, %s117
      %p124 = scmp.eq.s32.totalorder %s23, 1
      %p125 = por %p123, %p124
      %p126 = scmp.ne.s32.totalorder %s117, %s118
      %p127 = scmp.eq.s32.totalorder %s23, 0
      %p128 = por %p126, %p127
      %p129 = scmp.ne.s32.totalorder %s117, %s118
      %p130 = scmp.eq.s32.totalorder %s24, 1
      %p131 = por %p129, %p130
      %p133 = scmp.ne.s32.totalorder %s118, %s132
      %p134 = scmp.eq.s32.totalorder %s24, 0
      %p135 = por %p133, %p134
      %s137 = sadd.s32 %s136, 1
      %p140 = scmp.eq.s32.totalorder %s18, 1
      %p141 = scmp.ne.s32.totalorder %s136, %s138
      %p142 = scmp.eq.s32.totalorder %s18, 0
      %p143 = por %p141, %p142
      %p144 = scmp.ne.s32.totalorder %s136, %s138
      %p145 = scmp.eq.s32.totalorder %s23, 1
      %p146 = por %p144, %p145
      %p147 = scmp.ne.s32.totalorder %s138, %s139
      %p148 = scmp.eq.s32.totalorder %s23, 0
      %p149 = por %p147, %p148
      %p150 = scmp.ne.s32.totalorder %s138, %s139
      %p151 = scmp.eq.s32.totalorder %s24, 1
      %p152 = por %p150, %p151
      %p154 = scmp.ne.s32.totalorder %s139, %s153
      %p155 = scmp.eq.s32.totalorder %s24, 0
      %p156 = por %p154, %p155
      %s158 = sadd.s32 %s157, 1
      %p161 = scmp.eq.s32.totalorder %s18, 1
      %p162 = scmp.ne.s32.totalorder %s157, %s159
      %p163 = scmp.eq.s32.totalorder %s18, 0
      %p164 = por %p162, %p163
      %p165 = scmp.ne.s32.totalorder %s157, %s159
      %p166 = scmp.eq.s32.totalorder %s23, 1
      %p167 = por %p165, %p166
      %p168 = scmp.ne.s32.totalorder %s159, %s160
      %p169 = scmp.eq.s32.totalorder %s23, 0
      %p170 = por %p168, %p169
      %p171 = scmp.ne.s32.totalorder %s159, %s160
      %p172 = scmp.eq.s32.totalorder %s24, 1
      %p173 = por %p171, %p172
      %p175 = scmp.ne.s32.totalorder %s160, %s174
      %p176 = scmp.eq.s32.totalorder %s24, 0
      %p177 = por %p175, %p176
      %s179 = sadd.s32 %s178, 1
      %p182 = scmp.eq.s32.totalorder %s18, 1
      %p183 = scmp.ne.s32.totalorder %s178, %s180
      %p184 = scmp.eq.s32.totalorder %s18, 0
      %p185 = por %p183, %p184
      %p186 = scmp.ne.s32.totalorder %s178, %s180
      %p187 = scmp.eq.s32.totalorder %s23, 1
      %p188 = por %p186, %p187
      %p189 = scmp.ne.s32.totalorder %s180, %s181
      %p190 = scmp.eq.s32.totalorder %s23, 0
      %p191 = por %p189, %p190
      %p192 = scmp.ne.s32.totalorder %s180, %s181
      %p193 = scmp.eq.s32.totalorder %s24, 1
      %p194 = por %p192, %p193
      %p196 = scmp.ne.s32.totalorder %s181, %s195
      %p197 = scmp.eq.s32.totalorder %s24, 0
      %p198 = por %p196, %p197
      %s200 = sadd.s32 %s199, 1
      %p203 = scmp.eq.s32.totalorder %s18, 1
      %p204 = scmp.ne.s32.totalorder %s199, %s201
      %p205 = scmp.eq.s32.totalorder %s18, 0
      %p206 = por %p204, %p205
      %p207 = scmp.ne.s32.totalorder %s199, %s201
      %p208 = scmp.eq.s32.totalorder %s23, 1
      %p209 = por %p207, %p208
      %p210 = scmp.ne.s32.totalorder %s201, %s202
      %p211 = scmp.eq.s32.totalorder %s23, 0
      %p212 = por %p210, %p211
      %p213 = scmp.ne.s32.totalorder %s201, %s202
      %p214 = scmp.eq.s32.totalorder %s24, 1
      %p215 = por %p213, %p214
      %p217 = scmp.ne.s32.totalorder %s202, %s216
      %p218 = scmp.eq.s32.totalorder %s24, 0
      %p219 = por %p217, %p218
      %s221 = sadd.s32 %s220, 1
      %p224 = scmp.eq.s32.totalorder %s18, 1
      %p225 = scmp.ne.s32.totalorder %s220, %s222
      %p226 = scmp.eq.s32.totalorder %s18, 0
      %p227 = por %p225, %p226
      %p228 = scmp.ne.s32.totalorder %s220, %s222
      %p229 = scmp.eq.s32.totalorder %s23, 1
      %p230 = por %p228, %p229
      %p231 = scmp.ne.s32.totalorder %s222, %s223
      %p232 = scmp.eq.s32.totalorder %s23, 0
      %p233 = por %p231, %p232
      %p234 = scmp.ne.s32.totalorder %s222, %s223
      %p235 = scmp.eq.s32.totalorder %s24, 1
      %p236 = por %p234, %p235
      %p238 = scmp.ne.s32.totalorder %s223, %s237
      %p239 = scmp.eq.s32.totalorder %s24, 0
      %p240 = por %p238, %p239
      %s241 = ssub.s32 %s18, %s25
      %p242 = scmp.eq.s32.totalorder %s241, 0
      %s244 = sadd.s32 %s243, 1
      %s245 = scalar_select %p242, %s243, %s244
      %p248 = pneg %p242
      %p249 = scmp.eq.s32.totalorder %s18, 1
      %p250 = por %p248, %p249
      %p251 = scmp.ne.s32.totalorder %s243, %s246
      %p252 = scmp.eq.s32.totalorder %s18, 0
      %p253 = por %p251, %p252
      %p254 = scmp.ne.s32.totalorder %s243, %s246
      %p255 = scmp.eq.s32.totalorder %s23, 1
      %p256 = por %p254, %p255
      %p257 = scmp.ne.s32.totalorder %s246, %s247
      %p258 = scmp.eq.s32.totalorder %s23, 0
      %p259 = por %p257, %p258
      %p260 = scmp.ne.s32.totalorder %s246, %s247
      %p261 = scmp.eq.s32.totalorder %s24, 1
      %p262 = por %p260, %p261
      %p264 = scmp.ne.s32.totalorder %s247, %s263
      %p265 = scmp.eq.s32.totalorder %s24, 0
      %p266 = por %p264, %p265
      %p267 = scmp.le.s32.totalorder 1, %s18
      %p268 = scmp.lt.s32.totalorder %s18, 3
      %p269 = pnand %p267, %p268
      %p270 = pneg %p269
      // Predicated region
      $region9: #{longnet_forward.3} parent=5 // pred_check
        _
      $region10: #{longnet_forward.3} parent=5 // pred_check_branch
        %272 = sbr.rel (%p269) target = $region12
      $region11: #{longnet_forward.3} parent=5 // pred_region
        %s273 = ssub.s32 %s18, 1
        // Predicated region
        $region13: #{longnet_forward.3} parent=11 // pred_check
          %p274 = pneg %p65
        $region14: #{longnet_forward.3} parent=11 // pred_check_branch
          %276 = sbr.rel (%p274) target = $region16
        $region15: #{longnet_forward.3} parent=11 // pred_region
          _
        $region16: #{longnet_forward.3} parent=11 // pred_fallthru
          _
        // Predicated region
        $region17: #{longnet_forward.3} parent=11 // pred_check
          %p277 = pneg %p86
        $region18: #{longnet_forward.3} parent=11 // pred_check_branch
          %279 = sbr.rel (%p277) target = $region20
        $region19: #{longnet_forward.3} parent=11 // pred_region
          %s281 = ssub.s32 3072, 3072
          %282 = vsyncadd [#allocation3], %s281
          %s283 = sshll.u32 [#allocation2], 4
          %s284 = int_to_ptr.vmem [resolvable:$true] %s283
          %289 = dma.hbm_to_vmem [thread:$0]  %s2, 3072, %s284, [#allocation3], 192, 192, 12
        $region20: #{longnet_forward.3} parent=11 // pred_fallthru
          _
        // Predicated region
        $region21: #{longnet_forward.3} parent=11 // pred_check
          %p290 = pneg %p107
        $region22: #{longnet_forward.3} parent=11 // pred_check_branch
          %292 = sbr.rel (%p290) target = $region24
        $region23: #{longnet_forward.3} parent=11 // pred_region
          _
        $region24: #{longnet_forward.3} parent=11 // pred_fallthru
          _
        // Predicated region
        $region25: #{longnet_forward.3} parent=11 // pred_check
          %p293 = pneg %p128
        $region26: #{longnet_forward.3} parent=11 // pred_check_branch
          %295 = sbr.rel (%p293) target = $region28
        $region27: #{longnet_forward.3} parent=11 // pred_region
          _
        $region28: #{longnet_forward.3} parent=11 // pred_fallthru
          _
        // Predicated region
        $region29: #{longnet_forward.3} parent=11 // pred_check
          %p296 = pneg %p149
        $region30: #{longnet_forward.3} parent=11 // pred_check_branch
          %298 = sbr.rel (%p296) target = $region32
        $region31: #{longnet_forward.3} parent=11 // pred_region
          _
        $region32: #{longnet_forward.3} parent=11 // pred_fallthru
          _
        // Predicated region
        $region33: #{longnet_forward.3} parent=11 // pred_check
          %p299 = pneg %p170
        $region34: #{longnet_forward.3} parent=11 // pred_check_branch
          %301 = sbr.rel (%p299) target = $region36
        $region35: #{longnet_forward.3} parent=11 // pred_region
          _
        $region36: #{longnet_forward.3} parent=11 // pred_fallthru
          _
        // Predicated region
        $region37: #{longnet_forward.3} parent=11 // pred_check
          %p302 = pneg %p191
        $region38: #{longnet_forward.3} parent=11 // pred_check_branch
          %304 = sbr.rel (%p302) target = $region40
        $region39: #{longnet_forward.3} parent=11 // pred_region
          _
        $region40: #{longnet_forward.3} parent=11 // pred_fallthru
          _
        // Predicated region
        $region41: #{longnet_forward.3} parent=11 // pred_check
          %p305 = pneg %p212
        $region42: #{longnet_forward.3} parent=11 // pred_check_branch
          %307 = sbr.rel (%p305) target = $region44
        $region43: #{longnet_forward.3} parent=11 // pred_region
          %s309 = ssub.s32 4096, 4096
          %310 = vsyncadd [#allocation5], %s309
          %s311 = sshll.u32 [#allocation4], 4
          %s312 = int_to_ptr.vmem [resolvable:$true] %s311
          %317 = dma.hbm_to_vmem [thread:$0]  %s8, 4096, %s312, [#allocation5], 64, 64, 4
        $region44: #{longnet_forward.3} parent=11 // pred_fallthru
          _
        // Predicated region
        $region45: #{longnet_forward.3} parent=11 // pred_check
          %p318 = pneg %p233
        $region46: #{longnet_forward.3} parent=11 // pred_check_branch
          %320 = sbr.rel (%p318) target = $region48
        $region47: #{longnet_forward.3} parent=11 // pred_region
          _
        $region48: #{longnet_forward.3} parent=11 // pred_fallthru
          _
      $region12: #{longnet_forward.3} parent=5 // pred_fallthru
        _
      %p321 = scmp.lt.s32.totalorder %s18, 2
      // Predicated region
      $region49: #{longnet_forward.3} parent=5 // pred_check
        %p322 = pneg %p321
      $region50: #{longnet_forward.3} parent=5 // pred_check_branch
        %324 = sbr.rel (%p322) target = $region52
      $region51: #{longnet_forward.3} parent=5 // pred_region
        // Predicated region
        $region53: #{longnet_forward.3} parent=51 // pred_check
          %p325 = pneg %p38
        $region54: #{longnet_forward.3} parent=51 // pred_check_branch
          %327 = sbr.rel (%p325) target = $region56
        $region55: #{longnet_forward.3} parent=51 // pred_region
          %s328 = smul.u32 2, %s18
          %p329 = scmp.lt.s32.totalorder %s328, 3
          %s330 = scalar_select %p329, %s328, 3
          %s331 = smul.addr %s330, 2
          %s332 = smul.addr %s331, 4
          %s333 = scalar_lea.vmem %s0, %s332
          %s334 = smul.u32 2, %s18
        $region56: #{longnet_forward.3} parent=51 // pred_fallthru
          _
      $region52: #{longnet_forward.3} parent=5 // pred_fallthru
        _
      %p335 = scmp.le.s32.totalorder 1, %s18
      %p336 = scmp.lt.s32.totalorder %s18, 3
      %p337 = pnand %p335, %p336
      %p338 = pneg %p337
      // Predicated region
      $region57: #{longnet_forward.3} parent=5 // pred_check
        _
      $region58: #{longnet_forward.3} parent=5 // pred_check_branch
        %340 = sbr.rel (%p337) target = $region60
      $region59: #{longnet_forward.3} parent=5 // pred_region
        %s341 = ssub.s32 %s18, 1
        // Predicated region
        $region61: #{longnet_forward.3} parent=59 // pred_check
          %p342 = pneg %p86
        $region62: #{longnet_forward.3} parent=59 // pred_check_branch
          %344 = sbr.rel (%p342) target = $region64
        $region63: #{longnet_forward.3} parent=59 // pred_region
          %345 = dma.done [#allocation3], 3072
        $region64: #{longnet_forward.3} parent=59 // pred_fallthru
          _
        // Predicated region
        $region65: #{longnet_forward.3} parent=59 // pred_check
          %p346 = pneg %p212
        $region66: #{longnet_forward.3} parent=59 // pred_check_branch
          %348 = sbr.rel (%p346) target = $region68
        $region67: #{longnet_forward.3} parent=59 // pred_region
          %349 = dma.done [#allocation5], 4096
        $region68: #{longnet_forward.3} parent=59 // pred_fallthru
          _
        %s350 = smul.u32 2, %s23
        %p351 = scmp.lt.s32.totalorder %s350, 3
        %s352 = scalar_select %p351, %s350, 3
        %s353 = smul.addr %s352, 2
        %s354 = smul.addr %s353, 4
        %s355 = scalar_lea.vmem %s0, %s354
        %p356 = pneg %p44
        %p357 = pneg %p41
        %p358 = pneg %p65
        %p359 = pneg %p62
        %p360 = pneg %p86
        %p361 = pneg %p83
        %p362 = pneg %p107
        %p363 = pneg %p104
        %p364 = pneg %p128
        %p365 = pneg %p125
        %p366 = pneg %p149
        %p367 = pneg %p146
        %p368 = pneg %p170
        %p369 = pneg %p167
        %p370 = pneg %p191
        %p371 = pneg %p188
        %p372 = pneg %p212
        %p373 = pneg %p209
        %p374 = pneg %p233
        %p375 = pneg %p230
        %p376 = pneg %p259
        %p377 = pneg %p256
        %s378 = smul.u32 2, %s23
        %p379 = scmp.lt.s32.totalorder %s378, 3
        %s380 = scalar_select %p379, %s378, 3
        %s381 = smul.addr %s380, 2
        %s382 = smul.addr %s381, 4
        %s383 = scalar_lea.vmem %s10, %s382
        %s384 = smul.u32 2, %s23
        %p385 = scmp.lt.s32.totalorder %s384, 3
        %s386 = scalar_select %p385, %s384, 3
        %s387 = smul.addr %s386, 2
        %s388 = smul.addr %s387, 4
        %s389 = scalar_lea.vmem %s0, %s388
        %s390 = smul.u32 2, %s23
        %s391 = smul.u32 2, %s23
        %p392 = scmp.lt.s32.totalorder %s391, 3
        %s393 = scalar_select %p392, %s391, 3
        %s394 = smul.addr %s393, 2
        %s395 = smul.addr %s394, 4
        %s396 = scalar_lea.vmem %s10, %s395
        %s397 = smul.u32 2, %s23
        %v403 = vld [vmem:[%s389] sm:$0xf]
        %v404 = vld [vmem:[%s389 + $0x4] sm:$0xf]
        %v405 = vld [vmem:[%s389 + $0x8] sm:$0xf]
        %v406 = vld [vmem:[%s389 + $0xc] sm:$0xf]
        %v407 = vunpack.c.l.bf16 %v403
        %v408 = vunpack.c.l.bf16 %v404
        %v409 = vunpack.c.l.bf16 %v405
        %v410 = vunpack.c.l.bf16 %v406
        %v411 = vld [vmem:[%s1] sm:$0x1]
        %412 = vadd.xlane.f32.xlu0 %v407
        %v413 = vpop.xlane.xlu0 %412
        %414 = vadd.xlane.f32.xlu0 %v408
        %v415 = vpop.xlane.xlu0 %414
        %416 = vadd.xlane.f32.xlu0 %v409
        %v417 = vpop.xlane.xlu0 %416
        %418 = vadd.xlane.f32.xlu0 %v410
        %v419 = vpop.xlane.xlu0 %418
        %v420 = vrcp.pop 128.0
        %v421 = vmul.f32 %v413, %v420
        %v422 = vmul.f32 %v415, %v420
        %v423 = vmul.f32 %v417, %v420
        %v424 = vmul.f32 %v419, %v420
        %v425 = vsub.f32 %v407, %v421
        %v426 = vsub.f32 %v408, %v422
        %v427 = vsub.f32 %v409, %v423
        %v428 = vsub.f32 %v410, %v424
        %v429 = vmul.f32 %v425, %v425
        %v430 = vmul.f32 %v426, %v426
        %v431 = vmul.f32 %v427, %v427
        %v432 = vmul.f32 %v428, %v428
        %433 = vadd.xlane.f32.xlu0 %v429
        %v434 = vpop.xlane.xlu0 %433
        %435 = vadd.xlane.f32.xlu0 %v430
        %v436 = vpop.xlane.xlu0 %435
        %437 = vadd.xlane.f32.xlu0 %v431
        %v438 = vpop.xlane.xlu0 %437
        %439 = vadd.xlane.f32.xlu0 %v432
        %v440 = vpop.xlane.xlu0 %439
        %v441 = vmul.f32 %v434, %v420
        %v442 = vmul.f32 %v436, %v420
        %v443 = vmul.f32 %v438, %v420
        %v444 = vmul.f32 %v440, %v420
        %v445 = vadd.f32 %v441, 1e-05
        %v446 = vadd.f32 %v442, 1e-05
        %v447 = vadd.f32 %v443, 1e-05
        %v448 = vadd.f32 %v444, 1e-05
        %v449 = vrsqrt.pop %v445
        %v450 = vrsqrt.pop %v446
        %v451 = vrsqrt.pop %v447
        %v452 = vrsqrt.pop %v448
        %v453 = vmul.f32 %v425, %v449
        %v454 = vmul.f32 %v426, %v450
        %v455 = vmul.f32 %v427, %v451
        %v456 = vmul.f32 %v428, %v452
        %v458 = vlaneseq
        %v459 = vshrl.u32 %v458, 7
        %v460 = vsub.s32 0, %v459
        %v461 = vrot.slane %v411, %v460
        %v463 = vmul.f32 %v453, %v461
        %v464 = vmul.f32 %v454, %v461
        %v465 = vmul.f32 %v455, %v461
        %v466 = vmul.f32 %v456, %v461
        %v467 = vadd.f32 %v463, 0.0
        %v468 = vadd.f32 %v464, 0.0
        %v469 = vadd.f32 %v465, 0.0
        %v470 = vadd.f32 %v466, 0.0
        %v471 = vpack.c.bf16 %v468, %v467
        %v472 = vpack.c.bf16 %v470, %v469
        %v473 = vld [vmem:[#allocation2] sm:$0xff]
        %v474 = vld [vmem:[#allocation2 + $0x8] sm:$0xf]
        %v475 = vld [vmem:[#allocation2 + $0xc] sm:$0xff]
        %v476 = vld [vmem:[#allocation2 + $0x14] sm:$0xf]
        %v477 = vld [vmem:[#allocation2 + $0x18] sm:$0xff]
        %v478 = vld [vmem:[#allocation2 + $0x20] sm:$0xf]
        %v479 = vld [vmem:[#allocation2 + $0x24] sm:$0xff]
        %v480 = vld [vmem:[#allocation2 + $0x2c] sm:$0xf]
        %v481 = vld [vmem:[#allocation2 + $0x30] sm:$0xff]
        %v482 = vld [vmem:[#allocation2 + $0x38] sm:$0xf]
        %v483 = vld [vmem:[#allocation2 + $0x3c] sm:$0xff]
        %v484 = vld [vmem:[#allocation2 + $0x44] sm:$0xf]
        %v485 = vld [vmem:[#allocation2 + $0x48] sm:$0xff]
        %v486 = vld [vmem:[#allocation2 + $0x50] sm:$0xf]
        %v487 = vld [vmem:[#allocation2 + $0x54] sm:$0xff]
        %v488 = vld [vmem:[#allocation2 + $0x5c] sm:$0xf]
        %v489 = vld [vmem:[#allocation2 + $0x60] sm:$0xff]
        %v490 = vld [vmem:[#allocation2 + $0x68] sm:$0xf]
        %v491 = vld [vmem:[#allocation2 + $0x6c] sm:$0xff]
        %v492 = vld [vmem:[#allocation2 + $0x74] sm:$0xf]
        %v493 = vld [vmem:[#allocation2 + $0x78] sm:$0xff]
        %v494 = vld [vmem:[#allocation2 + $0x80] sm:$0xf]
        %v495 = vld [vmem:[#allocation2 + $0x84] sm:$0xff]
        %v496 = vld [vmem:[#allocation2 + $0x8c] sm:$0xf]
        %v497 = vld [vmem:[#allocation2 + $0x90] sm:$0xff]
        %v498 = vld [vmem:[#allocation2 + $0x98] sm:$0xf]
        %v499 = vld [vmem:[#allocation2 + $0x9c] sm:$0xff]
        %v500 = vld [vmem:[#allocation2 + $0xa4] sm:$0xf]
        %v501 = vld [vmem:[#allocation2 + $0xa8] sm:$0xff]
        %v502 = vld [vmem:[#allocation2 + $0xb0] sm:$0xf]
        %v503 = vld [vmem:[#allocation2 + $0xb4] sm:$0xff]
        %v504 = vld [vmem:[#allocation2 + $0xbc] sm:$0xf]
        %v505 = vld [vmem:[%s3] sm:$0x7]
        %v507 = vlaneseq
        %v508 = vshrl.u32 %v507, 7
        %v509 = vsub.s32 0, %v508
        %v510 = vrot.slane %v505, %v509
        %v511 = vlaneseq
        %v512 = vshrl.u32 %v511, 7
        %v513 = vsub.s32 1, %v512
        %v514 = vrot.slane %v505, %v513
        %v515 = vlaneseq
        %v516 = vshrl.u32 %v515, 7
        %v517 = vsub.s32 2, %v516
        %v518 = vrot.slane %v505, %v517
        %v554 = vunpack.c.l.b16 %v473
        %v555 = vunpack.c.h.b16 %v473
        %v556 = vunpack.c.l.b16 %v474
        %v557 = vunpack.c.l.b16 %v475
        %v558 = vunpack.c.h.b16 %v475
        %v559 = vunpack.c.l.b16 %v476
        %v560 = vunpack.c.l.b16 %v477
        %v561 = vunpack.c.h.b16 %v477
        %v562 = vunpack.c.l.b16 %v478
        %v563 = vunpack.c.l.b16 %v479
        %v564 = vunpack.c.h.b16 %v479
        %v565 = vunpack.c.l.b16 %v480
        %v566 = vunpack.c.l.b16 %v481
        %v567 = vunpack.c.h.b16 %v481
        %v568 = vunpack.c.l.b16 %v482
        %v569 = vunpack.c.l.b16 %v483
        %v570 = vunpack.c.h.b16 %v483
        %v571 = vunpack.c.l.b16 %v484
        %v572 = vunpack.c.l.b16 %v485
        %v573 = vunpack.c.h.b16 %v485
        %v574 = vunpack.c.l.b16 %v486
        %v575 = vunpack.c.l.b16 %v487
        %v576 = vunpack.c.h.b16 %v487
        %v577 = vunpack.c.l.b16 %v488
        %v578 = vunpack.c.l.b16 %v489
        %v579 = vunpack.c.h.b16 %v489
        %v580 = vunpack.c.l.b16 %v490
        %v581 = vunpack.c.l.b16 %v491
        %v582 = vunpack.c.h.b16 %v491
        %v583 = vunpack.c.l.b16 %v492
        %v584 = vunpack.c.l.b16 %v493
        %v585 = vunpack.c.h.b16 %v493
        %v586 = vunpack.c.l.b16 %v494
        %v587 = vunpack.c.l.b16 %v495
        %v588 = vunpack.c.h.b16 %v495
        %v589 = vunpack.c.l.b16 %v496
        %v590 = vunpack.c.l.b16 %v497
        %v591 = vunpack.c.h.b16 %v497
        %v592 = vunpack.c.l.b16 %v498
        %v593 = vunpack.c.l.b16 %v499
        %v594 = vunpack.c.h.b16 %v499
        %v595 = vunpack.c.l.b16 %v500
        %v596 = vunpack.c.l.b16 %v501
        %v597 = vunpack.c.h.b16 %v501
        %v598 = vunpack.c.l.b16 %v502
        %v599 = vunpack.c.l.b16 %v503
        %v600 = vunpack.c.h.b16 %v503
        %v601 = vunpack.c.l.b16 %v504
        %v602 = vpack.c.b16 %v557, %v554
        %v603 = vpack.c.b16 %v558, %v555
        %v604 = vpack.c.b16 %v559, %v556
        %v605 = vpack.c.b16 %v563, %v560
        %v606 = vpack.c.b16 %v564, %v561
        %v607 = vpack.c.b16 %v565, %v562
        %v608 = vpack.c.b16 %v569, %v566
        %v609 = vpack.c.b16 %v570, %v567
        %v610 = vpack.c.b16 %v571, %v568
        %v611 = vpack.c.b16 %v575, %v572
        %v612 = vpack.c.b16 %v576, %v573
        %v613 = vpack.c.b16 %v577, %v574
        %v614 = vpack.c.b16 %v581, %v578
        %v615 = vpack.c.b16 %v582, %v579
        %v616 = vpack.c.b16 %v583, %v580
        %v617 = vpack.c.b16 %v587, %v584
        %v618 = vpack.c.b16 %v588, %v585
        %v619 = vpack.c.b16 %v589, %v586
        %v620 = vpack.c.b16 %v593, %v590
        %v621 = vpack.c.b16 %v594, %v591
        %v622 = vpack.c.b16 %v595, %v592
        %v623 = vpack.c.b16 %v599, %v596
        %v624 = vpack.c.b16 %v600, %v597
        %v625 = vpack.c.b16 %v601, %v598
        %650 = vmatprep.subr.bf16.mxu0 %v603
        %651 = vmatpush1.bf16.msra.mxu0 %v602
        %652 = vmatprep.subr.bf16.mxu0 %v606
        %653 = vmatpush1.bf16.msra.mxu0 %v605
        %654 = vmatprep.subr.bf16.mxu0 %v609
        %655 = vmatpush1.bf16.msra.mxu0 %v608
        %656 = vmatprep.subr.bf16.mxu0 %v612
        %657 = vmatpush1.bf16.msra.mxu0 %v611
        %658 = vmatprep.subr.bf16.mxu0 %v615
        %659 = vmatpush1.bf16.msra.mxu0 %v614
        %660 = vmatprep.subr.bf16.mxu0 %v618
        %661 = vmatpush1.bf16.msra.mxu0 %v617
        %662 = vmatprep.subr.bf16.mxu0 %v621
        %663 = vmatpush1.bf16.msra.mxu0 %v620
        %664 = vmatprep.subr.bf16.mxu0 %v624
        %665 = vmatpush1.bf16.msra.mxu0 %v623
        %666 = vmatprep.subr.bf16.mxu0 0
        %667 = vmatpush1.bf16.msra.mxu0 0
        %668 = vmatprep.subr.bf16.mxu0 0
        %669 = vmatpush1.bf16.msra.mxu0 0
        %670 = vmatprep.subr.bf16.mxu0 0
        %671 = vmatpush1.bf16.msra.mxu0 0
        %672 = vmatprep.subr.bf16.mxu0 0
        %673 = vmatpush1.bf16.msra.mxu0 0
        %674 = vmatprep.subr.bf16.mxu0 0
        %675 = vmatpush1.bf16.msra.mxu0 0
        %676 = vmatprep.subr.bf16.mxu0 0
        %677 = vmatpush1.bf16.msra.mxu0 0
        %678 = vmatprep.subr.bf16.mxu0 0
        %679 = vmatpush1.bf16.msra.mxu0 0
        %680 = vmatprep.subr.bf16.mxu0 0
        %681 = vmatpush1.bf16.msra.mxu0 0
        %682 = vmatprep.mubr.bf16.mxu0 0
        %683 = vmatmul.mubr.bf16.gmra.mrb[0].mxu0 %v471
        %v684 = vpop.f32.mrb[0].mxu0
        %v685 = vadd.f32 %v510, %v684
        %v686 = vpop.f32.mrb[0].mxu0
        %v687 = vadd.f32 %v514, %v686
        %v688 = vpop.f32.mrb[0].mxu0
        %v689 = vadd.f32 %v510, %v688
        %v690 = vpop.f32.mrb[0].mxu0
        %v691 = vadd.f32 %v514, %v690
        %692 = vmatprep.mubr.bf16.mxu0 0
        %693 = vmatmul.mubr.bf16.gmra.mrb[0].mxu0 %v472
        %v694 = vpop.f32.mrb[0].mxu0
        %v695 = vadd.f32 %v510, %v694
        %v696 = vpop.f32.mrb[0].mxu0
        %v697 = vadd.f32 %v514, %v696
        %v698 = vpop.f32.mrb[0].mxu0
        %v699 = vadd.f32 %v510, %v698
        %v700 = vpop.f32.mrb[0].mxu0
        %v701 = vadd.f32 %v514, %v700
        %702 = vdwg.mxu0
        %703 = vmatprep.subr.bf16.mxu0 0
        %704 = vmatpush1.bf16.msra.mxu0 %v604
        %705 = vmatprep.subr.bf16.mxu0 0
        %706 = vmatpush1.bf16.msra.mxu0 %v607
        %707 = vmatprep.subr.bf16.mxu0 0
        %708 = vmatpush1.bf16.msra.mxu0 %v610
        %709 = vmatprep.subr.bf16.mxu0 0
        %710 = vmatpush1.bf16.msra.mxu0 %v613
        %711 = vmatprep.subr.bf16.mxu0 0
        %712 = vmatpush1.bf16.msra.mxu0 %v616
        %713 = vmatprep.subr.bf16.mxu0 0
        %714 = vmatpush1.bf16.msra.mxu0 %v619
        %715 = vmatprep.subr.bf16.mxu0 0
        %716 = vmatpush1.bf16.msra.mxu0 %v622
        %717 = vmatprep.subr.bf16.mxu0 0
        %718 = vmatpush1.bf16.msra.mxu0 %v625
        %719 = vmatprep.subr.bf16.mxu0 0
        %720 = vmatpush1.bf16.msra.mxu0 0
        %721 = vmatprep.subr.bf16.mxu0 0
        %722 = vmatpush1.bf16.msra.mxu0 0
        %723 = vmatprep.subr.bf16.mxu0 0
        %724 = vmatpush1.bf16.msra.mxu0 0
        %725 = vmatprep.subr.bf16.mxu0 0
        %726 = vmatpush1.bf16.msra.mxu0 0
        %727 = vmatprep.subr.bf16.mxu0 0
        %728 = vmatpush1.bf16.msra.mxu0 0
        %729 = vmatprep.subr.bf16.mxu0 0
        %730 = vmatpush1.bf16.msra.mxu0 0
        %731 = vmatprep.subr.bf16.mxu0 0
        %732 = vmatpush1.bf16.msra.mxu0 0
        %733 = vmatprep.subr.bf16.mxu0 0
        %734 = vmatpush1.bf16.msra.mxu0 0
        %735 = vmatprep.mubr.bf16.mxu0 0
        %736 = vmatmul.mubr.bf16.gmra.mrb[0].mxu0 %v471
        %v737 = vpop.f32.mrb[0].mxu0
        %v738 = vadd.f32 %v518, %v737
        %v739 = vpop.f32.mrb[0].mxu0
        %v740 = vpop.f32.mrb[0].mxu0
        %v741 = vadd.f32 %v518, %v740
        %v742 = vpop.f32.mrb[0].mxu0
        %743 = vmatprep.mubr.bf16.mxu0 0
        %744 = vmatmul.mubr.bf16.gmra.mrb[0].mxu0 %v472
        %v745 = vpop.f32.mrb[0].mxu0
        %v746 = vadd.f32 %v518, %v745
        %v747 = vpop.f32.mrb[0].mxu0
        %v748 = vpop.f32.mrb[0].mxu0
        %v749 = vadd.f32 %v518, %v748
        %v750 = vpop.f32.mrb[0].mxu0
        %751 = vdwg.mxu0
        %v752 = vld [vmem:[%s4] sm:$0x1]
        %v753 = vld [vmem:[%s5] sm:$0x1]
        %754 = vadd.xlane.f32.xlu0 %v685
        %v755 = vpop.xlane.xlu0 %754
        %756 = vadd.xlane.f32.xlu0 %v689
        %v757 = vpop.xlane.xlu0 %756
        %758 = vadd.xlane.f32.xlu0 %v695
        %v759 = vpop.xlane.xlu0 %758
        %760 = vadd.xlane.f32.xlu0 %v699
        %v761 = vpop.xlane.xlu0 %760
        %v762 = vmul.f32 %v755, %v420
        %v763 = vmul.f32 %v757, %v420
        %v764 = vmul.f32 %v759, %v420
        %v765 = vmul.f32 %v761, %v420
        %v766 = vsub.f32 %v685, %v762
        %v767 = vsub.f32 %v689, %v763
        %v768 = vsub.f32 %v695, %v764
        %v769 = vsub.f32 %v699, %v765
        %v770 = vmul.f32 %v766, %v766
        %v771 = vmul.f32 %v767, %v767
        %v772 = vmul.f32 %v768, %v768
        %v773 = vmul.f32 %v769, %v769
        %774 = vadd.xlane.f32.xlu0 %v770
        %v775 = vpop.xlane.xlu0 %774
        %776 = vadd.xlane.f32.xlu0 %v771
        %v777 = vpop.xlane.xlu0 %776
        %778 = vadd.xlane.f32.xlu0 %v772
        %v779 = vpop.xlane.xlu0 %778
        %780 = vadd.xlane.f32.xlu0 %v773
        %v781 = vpop.xlane.xlu0 %780
        %v782 = vmul.f32 %v775, %v420
        %v783 = vmul.f32 %v777, %v420
        %v784 = vmul.f32 %v779, %v420
        %v785 = vmul.f32 %v781, %v420
        %v786 = vadd.f32 %v782, 1e-05
        %v787 = vadd.f32 %v783, 1e-05
        %v788 = vadd.f32 %v784, 1e-05
        %v789 = vadd.f32 %v785, 1e-05
        %v790 = vrsqrt.pop %v786
        %v791 = vrsqrt.pop %v787
        %v792 = vrsqrt.pop %v788
        %v793 = vrsqrt.pop %v789
        %v794 = vmul.f32 %v766, %v790
        %v795 = vmul.f32 %v767, %v791
        %v796 = vmul.f32 %v768, %v792
        %v797 = vmul.f32 %v769, %v793
        %v799 = vlaneseq
        %v800 = vshrl.u32 %v799, 7
        %v801 = vsub.s32 0, %v800
        %v802 = vrot.slane %v752, %v801
        %v804 = vmul.f32 %v794, %v802
        %v805 = vmul.f32 %v795, %v802
        %v806 = vmul.f32 %v796, %v802
        %v807 = vmul.f32 %v797, %v802
        %v809 = vlaneseq
        %v810 = vshrl.u32 %v809, 7
        %v811 = vsub.s32 0, %v810
        %v812 = vrot.slane %v753, %v811
        %v814 = vadd.f32 %v804, %v812
        %v815 = vadd.f32 %v805, %v812
        %v816 = vadd.f32 %v806, %v812
        %v817 = vadd.f32 %v807, %v812
        %818 = vadd.xlane.f32.xlu0 %v687
        %v819 = vpop.xlane.xlu0 %818
        %820 = vadd.xlane.f32.xlu0 %v691
        %v821 = vpop.xlane.xlu0 %820
        %822 = vadd.xlane.f32.xlu0 %v697
        %v823 = vpop.xlane.xlu0 %822
        %824 = vadd.xlane.f32.xlu0 %v701
        %v825 = vpop.xlane.xlu0 %824
        %v826 = vmul.f32 %v819, %v420
        %v827 = vmul.f32 %v821, %v420
        %v828 = vmul.f32 %v823, %v420
        %v829 = vmul.f32 %v825, %v420
        %v830 = vsub.f32 %v687, %v826
        %v831 = vsub.f32 %v691, %v827
        %v832 = vsub.f32 %v697, %v828
        %v833 = vsub.f32 %v701, %v829
        %v834 = vmul.f32 %v830, %v830
        %v835 = vmul.f32 %v831, %v831
        %v836 = vmul.f32 %v832, %v832
        %v837 = vmul.f32 %v833, %v833
        %838 = vadd.xlane.f32.xlu0 %v834
        %v839 = vpop.xlane.xlu0 %838
        %840 = vadd.xlane.f32.xlu0 %v835
        %v841 = vpop.xlane.xlu0 %840
        %842 = vadd.xlane.f32.xlu0 %v836
        %v843 = vpop.xlane.xlu0 %842
        %844 = vadd.xlane.f32.xlu0 %v837
        %v845 = vpop.xlane.xlu0 %844
        %v846 = vmul.f32 %v839, %v420
        %v847 = vmul.f32 %v841, %v420
        %v848 = vmul.f32 %v843, %v420
        %v849 = vmul.f32 %v845, %v420
        %v850 = vadd.f32 %v846, 1e-05
        %v851 = vadd.f32 %v847, 1e-05
        %v852 = vadd.f32 %v848, 1e-05
        %v853 = vadd.f32 %v849, 1e-05
        %v854 = vrsqrt.pop %v850
        %v855 = vrsqrt.pop %v851
        %v856 = vrsqrt.pop %v852
        %v857 = vrsqrt.pop %v853
        %v858 = vmul.f32 %v830, %v854
        %v859 = vmul.f32 %v831, %v855
        %v860 = vmul.f32 %v832, %v856
        %v861 = vmul.f32 %v833, %v857
        %v862 = vmul.f32 %v858, %v802
        %v863 = vmul.f32 %v859, %v802
        %v864 = vmul.f32 %v860, %v802
        %v865 = vmul.f32 %v861, %v802
        %v866 = vadd.f32 %v862, %v812
        %v867 = vadd.f32 %v863, %v812
        %v868 = vadd.f32 %v864, %v812
        %v869 = vadd.f32 %v865, %v812
        %870 = vadd.xlane.f32.xlu0 %v738
        %v871 = vpop.xlane.xlu0 %870
        %872 = vadd.xlane.f32.xlu0 %v741
        %v873 = vpop.xlane.xlu0 %872
        %874 = vadd.xlane.f32.xlu0 %v746
        %v875 = vpop.xlane.xlu0 %874
        %876 = vadd.xlane.f32.xlu0 %v749
        %v877 = vpop.xlane.xlu0 %876
        %v878 = vmul.f32 %v871, %v420
        %v879 = vmul.f32 %v873, %v420
        %v880 = vmul.f32 %v875, %v420
        %v881 = vmul.f32 %v877, %v420
        %v882 = vsub.f32 %v738, %v878
        %v883 = vsub.f32 %v741, %v879
        %v884 = vsub.f32 %v746, %v880
        %v885 = vsub.f32 %v749, %v881
        %v886 = vmul.f32 %v882, %v882
        %v887 = vmul.f32 %v883, %v883
        %v888 = vmul.f32 %v884, %v884
        %v889 = vmul.f32 %v885, %v885
        %890 = vadd.xlane.f32.xlu0 %v886
        %v891 = vpop.xlane.xlu0 %890
        %892 = vadd.xlane.f32.xlu0 %v887
        %v893 = vpop.xlane.xlu0 %892
        %894 = vadd.xlane.f32.xlu0 %v888
        %v895 = vpop.xlane.xlu0 %894
        %896 = vadd.xlane.f32.xlu0 %v889
        %v897 = vpop.xlane.xlu0 %896
        %v898 = vmul.f32 %v891, %v420
        %v899 = vmul.f32 %v893, %v420
        %v900 = vmul.f32 %v895, %v420
        %v901 = vmul.f32 %v897, %v420
        %v902 = vadd.f32 %v898, 1e-05
        %v903 = vadd.f32 %v899, 1e-05
        %v904 = vadd.f32 %v900, 1e-05
        %v905 = vadd.f32 %v901, 1e-05
        %v906 = vrsqrt.pop %v902
        %v907 = vrsqrt.pop %v903
        %v908 = vrsqrt.pop %v904
        %v909 = vrsqrt.pop %v905
        %v910 = vmul.f32 %v882, %v906
        %v911 = vmul.f32 %v883, %v907
        %v912 = vmul.f32 %v884, %v908
        %v913 = vmul.f32 %v885, %v909
        %v914 = vmul.f32 %v910, %v802
        %v915 = vmul.f32 %v911, %v802
        %v916 = vmul.f32 %v912, %v802
        %v917 = vmul.f32 %v913, %v802
        %v918 = vadd.f32 %v914, %v812
        %v919 = vadd.f32 %v915, %v812
        %v920 = vadd.f32 %v916, %v812
        %v921 = vadd.f32 %v917, %v812
        %v922 = vpack.c.bf16 %v815, %v814
        %v923 = vpack.c.bf16 %v817, %v816
        %v924 = vpack.c.bf16 %v867, %v866
        %v925 = vpack.c.bf16 %v869, %v868
        %926 = vmatprep.subr.bf16.mxu0 0
        %927 = vmatpush1.bf16.xpose.msra.mxu0 %v924
        %928 = vmatprep.subr.bf16.mxu0 0
        %929 = vmatpush1.bf16.xpose.msra.mxu0 0
        %930 = vmatprep.subr.bf16.mxu0 0
        %931 = vmatpush1.bf16.xpose.msra.mxu0 0
        %932 = vmatprep.subr.bf16.mxu0 0
        %933 = vmatpush1.bf16.xpose.msra.mxu0 0
        %934 = vmatprep.subr.bf16.mxu0 0
        %935 = vmatpush1.bf16.xpose.msra.mxu0 0
        %936 = vmatprep.subr.bf16.mxu0 0
        %937 = vmatpush1.bf16.xpose.msra.mxu0 0
        %938 = vmatprep.subr.bf16.mxu0 0
        %939 = vmatpush1.bf16.xpose.msra.mxu0 0
        %940 = vmatprep.subr.bf16.mxu0 0
        %941 = vmatpush1.bf16.xpose.msra.mxu0 0
        %942 = vmatprep.subr.bf16.mxu0 0
        %943 = vmatpush1.bf16.xpose.msra.mxu0 0
        %944 = vmatprep.subr.bf16.mxu0 0
        %945 = vmatpush1.bf16.xpose.msra.mxu0 0
        %946 = vmatprep.subr.bf16.mxu0 0
        %947 = vmatpush1.bf16.xpose.msra.mxu0 0
        %948 = vmatprep.subr.bf16.mxu0 0
        %949 = vmatpush1.bf16.xpose.msra.mxu0 0
        %950 = vmatprep.subr.bf16.mxu0 0
        %951 = vmatpush1.bf16.xpose.msra.mxu0 0
        %952 = vmatprep.subr.bf16.mxu0 0
        %953 = vmatpush1.bf16.xpose.msra.mxu0 0
        %954 = vmatprep.subr.bf16.mxu0 0
        %955 = vmatpush1.bf16.xpose.msra.mxu0 0
        %956 = vmatprep.subr.bf16.mxu0 0
        %957 = vmatpush1.bf16.xpose.msra.mxu0 0
        %958 = vmatprep.mubr.bf16.mxu0 0
        %959 = vmatmul.mubr.bf16.gmra.mrb[0].mxu0 %v922
        %v960 = vpop.f32.mrb[0].mxu0
        %v961 = vadd.f32 0.0, %v960
        %v962 = vpop.f32.mrb[0].mxu0
        %v963 = vpop.f32.mrb[0].mxu0
        %v964 = vadd.f32 0.0, %v963
        %v965 = vpop.f32.mrb[0].mxu0
        %966 = vdwg.mxu0
        %967 = vmatprep.subr.bf16.mxu0 0
        %968 = vmatpush1.bf16.xpose.msra.mxu0 %v925
        %969 = vmatprep.subr.bf16.mxu0 0
        %970 = vmatpush1.bf16.xpose.msra.mxu0 0
        %971 = vmatprep.subr.bf16.mxu0 0
        %972 = vmatpush1.bf16.xpose.msra.mxu0 0
        %973 = vmatprep.subr.bf16.mxu0 0
        %974 = vmatpush1.bf16.xpose.msra.mxu0 0
        %975 = vmatprep.subr.bf16.mxu0 0
        %976 = vmatpush1.bf16.xpose.msra.mxu0 0
        %977 = vmatprep.subr.bf16.mxu0 0
        %978 = vmatpush1.bf16.xpose.msra.mxu0 0
        %979 = vmatprep.subr.bf16.mxu0 0
        %980 = vmatpush1.bf16.xpose.msra.mxu0 0
        %981 = vmatprep.subr.bf16.mxu0 0
        %982 = vmatpush1.bf16.xpose.msra.mxu0 0
        %983 = vmatprep.subr.bf16.mxu0 0
        %984 = vmatpush1.bf16.xpose.msra.mxu0 0
        %985 = vmatprep.subr.bf16.mxu0 0
        %986 = vmatpush1.bf16.xpose.msra.mxu0 0
        %987 = vmatprep.subr.bf16.mxu0 0
        %988 = vmatpush1.bf16.xpose.msra.mxu0 0
        %989 = vmatprep.subr.bf16.mxu0 0
        %990 = vmatpush1.bf16.xpose.msra.mxu0 0
        %991 = vmatprep.subr.bf16.mxu0 0
        %992 = vmatpush1.bf16.xpose.msra.mxu0 0
        %993 = vmatprep.subr.bf16.mxu0 0
        %994 = vmatpush1.bf16.xpose.msra.mxu0 0
        %995 = vmatprep.subr.bf16.mxu0 0
        %996 = vmatpush1.bf16.xpose.msra.mxu0 0
        %997 = vmatprep.subr.bf16.mxu0 0
        %998 = vmatpush1.bf16.xpose.msra.mxu0 0
        %999 = vmatprep.mubr.bf16.mxu0 0
        %1000 = vmatmul.mubr.bf16.gmra.mrb[0].mxu0 %v923
        %v1001 = vpop.f32.mrb[0].mxu0
        %v1002 = vadd.f32 0.0, %v1001
        %v1003 = vpop.f32.mrb[0].mxu0
        %v1004 = vpop.f32.mrb[0].mxu0
        %v1005 = vadd.f32 0.0, %v1004
        %v1006 = vpop.f32.mrb[0].mxu0
        %1007 = vdwg.mxu0
        %v1008 = vmul.f32 %v961, 0.088388346
        %v1009 = vmul.f32 %v964, 0.088388346
        %v1010 = vmul.f32 %v1002, 0.088388346
        %v1011 = vmul.f32 %v1005, 0.088388346
        %vm1012 = vcmask 130048
        %v1013 = vsel %vm1012, %v1008, -inf
        %1014 = vmax.xlane.f32.xlu0 %v1013
        %v1015 = vpop.xlane.xlu0 %1014
        %v1016 = vsel %vm1012, %v1009, -inf
        %1017 = vmax.xlane.f32.xlu0 %v1016
        %v1018 = vpop.xlane.xlu0 %1017
        %v1019 = vsel %vm1012, %v1010, -inf
        %1020 = vmax.xlane.f32.xlu0 %v1019
        %v1021 = vpop.xlane.xlu0 %1020
        %v1022 = vsel %vm1012, %v1011, -inf
        %1023 = vmax.xlane.f32.xlu0 %v1022
        %v1024 = vpop.xlane.xlu0 %1023
        %v1025 = vsub.f32 %v1008, %v1015
        %v1026 = vsub.f32 %v1009, %v1018
        %v1027 = vsub.f32 %v1010, %v1021
        %v1028 = vsub.f32 %v1011, %v1024
        %v1029 = vmul.f32 %v1025, 1.442695
        %v1030 = vpow.pop %v1029
        %v1031 = vmul.f32 %v1026, 1.442695
        %v1032 = vpow.pop %v1031
        %v1033 = vmul.f32 %v1027, 1.442695
        %v1034 = vpow.pop %v1033
        %v1035 = vmul.f32 %v1028, 1.442695
        %v1036 = vpow.pop %v1035
        %v1037 = vsel %vm1012, %v1030, 0.0
        %1038 = vadd.xlane.f32.xlu0 %v1037
        %v1039 = vpop.xlane.xlu0 %1038
        %v1040 = vsel %vm1012, %v1032, 0.0
        %1041 = vadd.xlane.f32.xlu0 %v1040
        %v1042 = vpop.xlane.xlu0 %1041
        %v1043 = vsel %vm1012, %v1034, 0.0
        %1044 = vadd.xlane.f32.xlu0 %v1043
        %v1045 = vpop.xlane.xlu0 %1044
        %v1046 = vsel %vm1012, %v1036, 0.0
        %1047 = vadd.xlane.f32.xlu0 %v1046
        %v1048 = vpop.xlane.xlu0 %1047
        %v1049 = vrcp.pop %v1039
        %v1050 = vrcp.pop %v1042
        %v1051 = vrcp.pop %v1045
        %v1052 = vrcp.pop %v1048
        %v1053 = vmul.f32 %v1030, %v1049
        %v1054 = vmul.f32 %v1032, %v1050
        %v1055 = vmul.f32 %v1034, %v1051
        %v1056 = vmul.f32 %v1036, %v1052
        %v1057 = vpack.c.bf16 %v1054, %v1053
        %v1058 = vpack.c.bf16 %v1056, %v1055
        %v1059 = vpack.c.bf16 %v919, %v918
        %v1060 = vpack.c.bf16 %v921, %v920
        %v1062 = vsel %vm1012, %v1057, 0
        %1064 = vmatprep.subr.bf16.mxu0 0
        %1065 = vmatpush1.bf16.msra.mxu0 %v1059
        %1066 = vmatprep.subr.bf16.mxu0 0
        %1067 = vmatpush1.bf16.msra.mxu0 0
        %1068 = vmatprep.subr.bf16.mxu0 0
        %1069 = vmatpush1.bf16.msra.mxu0 0
        %1070 = vmatprep.subr.bf16.mxu0 0
        %1071 = vmatpush1.bf16.msra.mxu0 0
        %1072 = vmatprep.subr.bf16.mxu0 0
        %1073 = vmatpush1.bf16.msra.mxu0 0
        %1074 = vmatprep.subr.bf16.mxu0 0
        %1075 = vmatpush1.bf16.msra.mxu0 0
        %1076 = vmatprep.subr.bf16.mxu0 0
        %1077 = vmatpush1.bf16.msra.mxu0 0
        %1078 = vmatprep.subr.bf16.mxu0 0
        %1079 = vmatpush1.bf16.msra.mxu0 0
        %1080 = vmatprep.subr.bf16.mxu0 0
        %1081 = vmatpush1.bf16.msra.mxu0 0
        %1082 = vmatprep.subr.bf16.mxu0 0
        %1083 = vmatpush1.bf16.msra.mxu0 0
        %1084 = vmatprep.subr.bf16.mxu0 0
        %1085 = vmatpush1.bf16.msra.mxu0 0
        %1086 = vmatprep.subr.bf16.mxu0 0
        %1087 = vmatpush1.bf16.msra.mxu0 0
        %1088 = vmatprep.subr.bf16.mxu0 0
        %1089 = vmatpush1.bf16.msra.mxu0 0
        %1090 = vmatprep.subr.bf16.mxu0 0
        %1091 = vmatpush1.bf16.msra.mxu0 0
        %1092 = vmatprep.subr.bf16.mxu0 0
        %1093 = vmatpush1.bf16.msra.mxu0 0
        %1094 = vmatprep.subr.bf16.mxu0 0
        %1095 = vmatpush1.bf16.msra.mxu0 0
        %1096 = vmatprep.mubr.bf16.mxu0 0
        %1097 = vmatmul.mubr.bf16.gmra.mrb[0].mxu0 %v1062
        %v1098 = vpop.f32.mrb[0].mxu0
        %v1099 = vadd.f32 0.0, %v1098
        %v1100 = vpop.f32.mrb[0].mxu0
        %v1101 = vpop.f32.mrb[0].mxu0
        %v1102 = vadd.f32 0.0, %v1101
        %v1103 = vpop.f32.mrb[0].mxu0
        %1104 = vdwg.mxu0
        %v1106 = vsel %vm1012, %v1058, 0
        %1108 = vmatprep.subr.bf16.mxu0 0
        %1109 = vmatpush1.bf16.msra.mxu0 %v1060
        %1110 = vmatprep.subr.bf16.mxu0 0
        %1111 = vmatpush1.bf16.msra.mxu0 0
        %1112 = vmatprep.subr.bf16.mxu0 0
        %1113 = vmatpush1.bf16.msra.mxu0 0
        %1114 = vmatprep.subr.bf16.mxu0 0
        %1115 = vmatpush1.bf16.msra.mxu0 0
        %1116 = vmatprep.subr.bf16.mxu0 0
        %1117 = vmatpush1.bf16.msra.mxu0 0
        %1118 = vmatprep.subr.bf16.mxu0 0
        %1119 = vmatpush1.bf16.msra.mxu0 0
        %1120 = vmatprep.subr.bf16.mxu0 0
        %1121 = vmatpush1.bf16.msra.mxu0 0
        %1122 = vmatprep.subr.bf16.mxu0 0
        %1123 = vmatpush1.bf16.msra.mxu0 0
        %1124 = vmatprep.subr.bf16.mxu0 0
        %1125 = vmatpush1.bf16.msra.mxu0 0
        %1126 = vmatprep.subr.bf16.mxu0 0
        %1127 = vmatpush1.bf16.msra.mxu0 0
        %1128 = vmatprep.subr.bf16.mxu0 0
        %1129 = vmatpush1.bf16.msra.mxu0 0
        %1130 = vmatprep.subr.bf16.mxu0 0
        %1131 = vmatpush1.bf16.msra.mxu0 0
        %1132 = vmatprep.subr.bf16.mxu0 0
        %1133 = vmatpush1.bf16.msra.mxu0 0
        %1134 = vmatprep.subr.bf16.mxu0 0
        %1135 = vmatpush1.bf16.msra.mxu0 0
        %1136 = vmatprep.subr.bf16.mxu0 0
        %1137 = vmatpush1.bf16.msra.mxu0 0
        %1138 = vmatprep.subr.bf16.mxu0 0
        %1139 = vmatpush1.bf16.msra.mxu0 0
        %1140 = vmatprep.mubr.bf16.mxu0 0
        %1141 = vmatmul.mubr.bf16.gmra.mrb[0].mxu0 %v1106
        %v1142 = vpop.f32.mrb[0].mxu0
        %v1143 = vadd.f32 0.0, %v1142
        %v1144 = vpop.f32.mrb[0].mxu0
        %v1145 = vpop.f32.mrb[0].mxu0
        %v1146 = vadd.f32 0.0, %v1145
        %v1147 = vpop.f32.mrb[0].mxu0
        %1148 = vdwg.mxu0
        %v1149 = vadd.f32 %v1099, %v407
        %v1150 = vadd.f32 %v1102, %v408
        %v1151 = vadd.f32 %v1143, %v409
        %v1152 = vadd.f32 %v1146, %v410
        %v1153 = vpack.c.bf16 %v1150, %v1149
        %v1154 = vpack.c.bf16 %v1152, %v1151
        %v1155 = vld [vmem:[%s6] sm:$0xff]
        %v1156 = vld [vmem:[%s6 + $0x8] sm:$0xff]
        %v1157 = vld [vmem:[%s6 + $0x10] sm:$0xff]
        %v1158 = vld [vmem:[%s6 + $0x18] sm:$0xff]
        %v1159 = vld [vmem:[%s6 + $0x20] sm:$0xff]
        %v1160 = vld [vmem:[%s6 + $0x28] sm:$0xff]
        %v1161 = vld [vmem:[%s6 + $0x30] sm:$0xff]
        %v1162 = vld [vmem:[%s6 + $0x38] sm:$0xff]
        %v1163 = vld [vmem:[%s6 + $0x40] sm:$0xff]
        %v1164 = vld [vmem:[%s6 + $0x48] sm:$0xff]
        %v1165 = vld [vmem:[%s6 + $0x50] sm:$0xff]
        %v1166 = vld [vmem:[%s6 + $0x58] sm:$0xff]
        %v1167 = vld [vmem:[%s6 + $0x60] sm:$0xff]
        %v1168 = vld [vmem:[%s6 + $0x68] sm:$0xff]
        %v1169 = vld [vmem:[%s6 + $0x70] sm:$0xff]
        %v1170 = vld [vmem:[%s6 + $0x78] sm:$0xff]
        %v1171 = vld [vmem:[%s6 + $0x80] sm:$0xff]
        %v1172 = vld [vmem:[%s6 + $0x88] sm:$0xff]
        %v1173 = vld [vmem:[%s6 + $0x90] sm:$0xff]
        %v1174 = vld [vmem:[%s6 + $0x98] sm:$0xff]
        %v1175 = vld [vmem:[%s6 + $0xa0] sm:$0xff]
        %v1176 = vld [vmem:[%s6 + $0xa8] sm:$0xff]
        %v1177 = vld [vmem:[%s6 + $0xb0] sm:$0xff]
        %v1178 = vld [vmem:[%s6 + $0xb8] sm:$0xff]
        %v1179 = vld [vmem:[%s6 + $0xc0] sm:$0xff]
        %v1180 = vld [vmem:[%s6 + $0xc8] sm:$0xff]
        %v1181 = vld [vmem:[%s6 + $0xd0] sm:$0xff]
        %v1182 = vld [vmem:[%s6 + $0xd8] sm:$0xff]
        %v1183 = vld [vmem:[%s6 + $0xe0] sm:$0xff]
        %v1184 = vld [vmem:[%s6 + $0xe8] sm:$0xff]
        %v1185 = vld [vmem:[%s6 + $0xf0] sm:$0xff]
        %v1186 = vld [vmem:[%s6 + $0xf8] sm:$0xff]
        %v1187 = vld [vmem:[%s7] sm:$0xf]
        %v1189 = vlaneseq
        %v1190 = vshrl.u32 %v1189, 7
        %v1191 = vsub.s32 0, %v1190
        %v1192 = vrot.slane %v1187, %v1191
        %v1193 = vlaneseq
        %v1194 = vshrl.u32 %v1193, 7
        %v1195 = vsub.s32 1, %v1194
        %v1196 = vrot.slane %v1187, %v1195
        %v1197 = vlaneseq
        %v1198 = vshrl.u32 %v1197, 7
        %v1199 = vsub.s32 2, %v1198
        %v1200 = vrot.slane %v1187, %v1199
        %v1201 = vlaneseq
        %v1202 = vshrl.u32 %v1201, 7
        %v1203 = vsub.s32 3, %v1202
        %v1204 = vrot.slane %v1187, %v1203
        %v1241 = vunpack.c.l.b16 %v1155
        %v1242 = vunpack.c.h.b16 %v1155
        %v1243 = vunpack.c.l.b16 %v1156
        %v1244 = vunpack.c.h.b16 %v1156
        %v1245 = vunpack.c.l.b16 %v1157
        %v1246 = vunpack.c.h.b16 %v1157
        %v1247 = vunpack.c.l.b16 %v1158
        %v1248 = vunpack.c.h.b16 %v1158
        %v1249 = vunpack.c.l.b16 %v1159
        %v1250 = vunpack.c.h.b16 %v1159
        %v1251 = vunpack.c.l.b16 %v1160
        %v1252 = vunpack.c.h.b16 %v1160
        %v1253 = vunpack.c.l.b16 %v1161
        %v1254 = vunpack.c.h.b16 %v1161
        %v1255 = vunpack.c.l.b16 %v1162
        %v1256 = vunpack.c.h.b16 %v1162
        %v1257 = vunpack.c.l.b16 %v1163
        %v1258 = vunpack.c.h.b16 %v1163
        %v1259 = vunpack.c.l.b16 %v1164
        %v1260 = vunpack.c.h.b16 %v1164
        %v1261 = vunpack.c.l.b16 %v1165
        %v1262 = vunpack.c.h.b16 %v1165
        %v1263 = vunpack.c.l.b16 %v1166
        %v1264 = vunpack.c.h.b16 %v1166
        %v1265 = vunpack.c.l.b16 %v1167
        %v1266 = vunpack.c.h.b16 %v1167
        %v1267 = vunpack.c.l.b16 %v1168
        %v1268 = vunpack.c.h.b16 %v1168
        %v1269 = vunpack.c.l.b16 %v1169
        %v1270 = vunpack.c.h.b16 %v1169
        %v1271 = vunpack.c.l.b16 %v1170
        %v1272 = vunpack.c.h.b16 %v1170
        %v1273 = vunpack.c.l.b16 %v1171
        %v1274 = vunpack.c.h.b16 %v1171
        %v1275 = vunpack.c.l.b16 %v1172
        %v1276 = vunpack.c.h.b16 %v1172
        %v1277 = vunpack.c.l.b16 %v1173
        %v1278 = vunpack.c.h.b16 %v1173
        %v1279 = vunpack.c.l.b16 %v1174
        %v1280 = vunpack.c.h.b16 %v1174
        %v1281 = vunpack.c.l.b16 %v1175
        %v1282 = vunpack.c.h.b16 %v1175
        %v1283 = vunpack.c.l.b16 %v1176
        %v1284 = vunpack.c.h.b16 %v1176
        %v1285 = vunpack.c.l.b16 %v1177
        %v1286 = vunpack.c.h.b16 %v1177
        %v1287 = vunpack.c.l.b16 %v1178
        %v1288 = vunpack.c.h.b16 %v1178
        %v1289 = vunpack.c.l.b16 %v1179
        %v1290 = vunpack.c.h.b16 %v1179
        %v1291 = vunpack.c.l.b16 %v1180
        %v1292 = vunpack.c.h.b16 %v1180
        %v1293 = vunpack.c.l.b16 %v1181
        %v1294 = vunpack.c.h.b16 %v1181
        %v1295 = vunpack.c.l.b16 %v1182
        %v1296 = vunpack.c.h.b16 %v1182
        %v1297 = vunpack.c.l.b16 %v1183
        %v1298 = vunpack.c.h.b16 %v1183
        %v1299 = vunpack.c.l.b16 %v1184
        %v1300 = vunpack.c.h.b16 %v1184
        %v1301 = vunpack.c.l.b16 %v1185
        %v1302 = vunpack.c.h.b16 %v1185
        %v1303 = vunpack.c.l.b16 %v1186
        %v1304 = vunpack.c.h.b16 %v1186
        %v1305 = vpack.c.b16 %v1245, %v1241
        %v1306 = vpack.c.b16 %v1246, %v1242
        %v1307 = vpack.c.b16 %v1247, %v1243
        %v1308 = vpack.c.b16 %v1248, %v1244
        %v1309 = vpack.c.b16 %v1253, %v1249
        %v1310 = vpack.c.b16 %v1254, %v1250
        %v1311 = vpack.c.b16 %v1255, %v1251
        %v1312 = vpack.c.b16 %v1256, %v1252
        %v1313 = vpack.c.b16 %v1261, %v1257
        %v1314 = vpack.c.b16 %v1262, %v1258
        %v1315 = vpack.c.b16 %v1263, %v1259
        %v1316 = vpack.c.b16 %v1264, %v1260
        %v1317 = vpack.c.b16 %v1269, %v1265
        %v1318 = vpack.c.b16 %v1270, %v1266
        %v1319 = vpack.c.b16 %v1271, %v1267
        %v1320 = vpack.c.b16 %v1272, %v1268
        %v1321 = vpack.c.b16 %v1277, %v1273
        %v1322 = vpack.c.b16 %v1278, %v1274
        %v1323 = vpack.c.b16 %v1279, %v1275
        %v1324 = vpack.c.b16 %v1280, %v1276
        %v1325 = vpack.c.b16 %v1285, %v1281
        %v1326 = vpack.c.b16 %v1286, %v1282
        %v1327 = vpack.c.b16 %v1287, %v1283
        %v1328 = vpack.c.b16 %v1288, %v1284
        %v1329 = vpack.c.b16 %v1293, %v1289
        %v1330 = vpack.c.b16 %v1294, %v1290
        %v1331 = vpack.c.b16 %v1295, %v1291
        %v1332 = vpack.c.b16 %v1296, %v1292
        %v1333 = vpack.c.b16 %v1301, %v1297
        %v1334 = vpack.c.b16 %v1302, %v1298
        %v1335 = vpack.c.b16 %v1303, %v1299
        %v1336 = vpack.c.b16 %v1304, %v1300
        %1369 = vmatprep.subr.bf16.mxu0 %v1306
        %1370 = vmatpush1.bf16.msra.mxu0 %v1305
        %1371 = vmatprep.subr.bf16.mxu0 %v1310
        %1372 = vmatpush1.bf16.msra.mxu0 %v1309
        %1373 = vmatprep.subr.bf16.mxu0 %v1314
        %1374 = vmatpush1.bf16.msra.mxu0 %v1313
        %1375 = vmatprep.subr.bf16.mxu0 %v1318
        %1376 = vmatpush1.bf16.msra.mxu0 %v1317
        %1377 = vmatprep.subr.bf16.mxu0 %v1322
        %1378 = vmatpush1.bf16.msra.mxu0 %v1321
        %1379 = vmatprep.subr.bf16.mxu0 %v1326
        %1380 = vmatpush1.bf16.msra.mxu0 %v1325
        %1381 = vmatprep.subr.bf16.mxu0 %v1330
        %1382 = vmatpush1.bf16.msra.mxu0 %v1329
        %1383 = vmatprep.subr.bf16.mxu0 %v1334
        %1384 = vmatpush1.bf16.msra.mxu0 %v1333
        %1385 = vmatprep.subr.bf16.mxu0 0
        %1386 = vmatpush1.bf16.msra.mxu0 0
        %1387 = vmatprep.subr.bf16.mxu0 0
        %1388 = vmatpush1.bf16.msra.mxu0 0
        %1389 = vmatprep.subr.bf16.mxu0 0
        %1390 = vmatpush1.bf16.msra.mxu0 0
        %1391 = vmatprep.subr.bf16.mxu0 0
        %1392 = vmatpush1.bf16.msra.mxu0 0
        %1393 = vmatprep.subr.bf16.mxu0 0
        %1394 = vmatpush1.bf16.msra.mxu0 0
        %1395 = vmatprep.subr.bf16.mxu0 0
        %1396 = vmatpush1.bf16.msra.mxu0 0
        %1397 = vmatprep.subr.bf16.mxu0 0
        %1398 = vmatpush1.bf16.msra.mxu0 0
        %1399 = vmatprep.subr.bf16.mxu0 0
        %1400 = vmatpush1.bf16.msra.mxu0 0
        %1401 = vmatprep.mubr.bf16.mxu0 0
        %1402 = vmatmul.mubr.bf16.gmra.mrb[0].mxu0 %v1153
        %v1403 = vpop.f32.mrb[0].mxu0
        %v1404 = vadd.f32 %v1192, %v1403
        %v1405 = vpop.f32.mrb[0].mxu0
        %v1406 = vadd.f32 %v1196, %v1405
        %v1407 = vpop.f32.mrb[0].mxu0
        %v1408 = vadd.f32 %v1192, %v1407
        %v1409 = vpop.f32.mrb[0].mxu0
        %v1410 = vadd.f32 %v1196, %v1409
        %1411 = vmatprep.mubr.bf16.mxu0 0
        %1412 = vmatmul.mubr.bf16.gmra.mrb[0].mxu0 %v1154
        %v1413 = vpop.f32.mrb[0].mxu0
        %v1414 = vadd.f32 %v1192, %v1413
        %v1415 = vpop.f32.mrb[0].mxu0
        %v1416 = vadd.f32 %v1196, %v1415
        %v1417 = vpop.f32.mrb[0].mxu0
        %v1418 = vadd.f32 %v1192, %v1417
        %v1419 = vpop.f32.mrb[0].mxu0
        %v1420 = vadd.f32 %v1196, %v1419
        %1421 = vdwg.mxu0
        %1422 = vmatprep.subr.bf16.mxu0 %v1308
        %1423 = vmatpush1.bf16.msra.mxu0 %v1307
        %1424 = vmatprep.subr.bf16.mxu0 %v1312
        %1425 = vmatpush1.bf16.msra.mxu0 %v1311
        %1426 = vmatprep.subr.bf16.mxu0 %v1316
        %1427 = vmatpush1.bf16.msra.mxu0 %v1315
        %1428 = vmatprep.subr.bf16.mxu0 %v1320
        %1429 = vmatpush1.bf16.msra.mxu0 %v1319
        %1430 = vmatprep.subr.bf16.mxu0 %v1324
        %1431 = vmatpush1.bf16.msra.mxu0 %v1323
        %1432 = vmatprep.subr.bf16.mxu0 %v1328
        %1433 = vmatpush1.bf16.msra.mxu0 %v1327
        %1434 = vmatprep.subr.bf16.mxu0 %v1332
        %1435 = vmatpush1.bf16.msra.mxu0 %v1331
        %1436 = vmatprep.subr.bf16.mxu0 %v1336
        %1437 = vmatpush1.bf16.msra.mxu0 %v1335
        %1438 = vmatprep.subr.bf16.mxu0 0
        %1439 = vmatpush1.bf16.msra.mxu0 0
        %1440 = vmatprep.subr.bf16.mxu0 0
        %1441 = vmatpush1.bf16.msra.mxu0 0
        %1442 = vmatprep.subr.bf16.mxu0 0
        %1443 = vmatpush1.bf16.msra.mxu0 0
        %1444 = vmatprep.subr.bf16.mxu0 0
        %1445 = vmatpush1.bf16.msra.mxu0 0
        %1446 = vmatprep.subr.bf16.mxu0 0
        %1447 = vmatpush1.bf16.msra.mxu0 0
        %1448 = vmatprep.subr.bf16.mxu0 0
        %1449 = vmatpush1.bf16.msra.mxu0 0
        %1450 = vmatprep.subr.bf16.mxu0 0
        %1451 = vmatpush1.bf16.msra.mxu0 0
        %1452 = vmatprep.subr.bf16.mxu0 0
        %1453 = vmatpush1.bf16.msra.mxu0 0
        %1454 = vmatprep.mubr.bf16.mxu0 0
        %1455 = vmatmul.mubr.bf16.gmra.mrb[0].mxu0 %v1153
        %v1456 = vpop.f32.mrb[0].mxu0
        %v1457 = vadd.f32 %v1200, %v1456
        %v1458 = vpop.f32.mrb[0].mxu0
        %v1459 = vadd.f32 %v1204, %v1458
        %v1460 = vpop.f32.mrb[0].mxu0
        %v1461 = vadd.f32 %v1200, %v1460
        %v1462 = vpop.f32.mrb[0].mxu0
        %v1463 = vadd.f32 %v1204, %v1462
        %1464 = vmatprep.mubr.bf16.mxu0 0
        %1465 = vmatmul.mubr.bf16.gmra.mrb[0].mxu0 %v1154
        %v1466 = vpop.f32.mrb[0].mxu0
        %v1467 = vadd.f32 %v1200, %v1466
        %v1468 = vpop.f32.mrb[0].mxu0
        %v1469 = vadd.f32 %v1204, %v1468
        %v1470 = vpop.f32.mrb[0].mxu0
        %v1471 = vadd.f32 %v1200, %v1470
        %v1472 = vpop.f32.mrb[0].mxu0
        %v1473 = vadd.f32 %v1204, %v1472
        %1474 = vdwg.mxu0
        %v1475 = vpack.c.bf16 %v1408, %v1404
        %v1476 = vpack.c.bf16 %v1410, %v1406
        %v1477 = vpack.c.bf16 %v1461, %v1457
        %v1478 = vpack.c.bf16 %v1463, %v1459
        %v1479 = vpack.c.bf16 %v1418, %v1414
        %v1480 = vpack.c.bf16 %v1420, %v1416
        %v1481 = vpack.c.bf16 %v1471, %v1467
        %v1482 = vpack.c.bf16 %v1473, %v1469
        %v1483 = vmul.bf16 %v1475, 1056980736
        %v1484 = vmul.bf16 %v1476, 1056980736
        %v1485 = vmul.bf16 %v1477, 1056980736
        %v1486 = vmul.bf16 %v1478, 1056980736
        %v1487 = vmul.bf16 %v1479, 1056980736
        %v1488 = vmul.bf16 %v1480, 1056980736
        %v1489 = vmul.bf16 %v1481, 1056980736
        %v1490 = vmul.bf16 %v1482, 1056980736
        %v1491 = vmul.bf16 %v1475, 1027030327
        %v1492 = vmul.bf16 %v1476, 1027030327
        %v1493 = vmul.bf16 %v1477, 1027030327
        %v1494 = vmul.bf16 %v1478, 1027030327
        %v1495 = vmul.bf16 %v1479, 1027030327
        %v1496 = vmul.bf16 %v1480, 1027030327
        %v1497 = vmul.bf16 %v1481, 1027030327
        %v1498 = vmul.bf16 %v1482, 1027030327
        %v1499 = vmul.bf16 %v1491, %v1475
        %v1500 = vmul.bf16 %v1492, %v1476
        %v1501 = vmul.bf16 %v1493, %v1477
        %v1502 = vmul.bf16 %v1494, %v1478
        %v1503 = vmul.bf16 %v1495, %v1479
        %v1504 = vmul.bf16 %v1496, %v1480
        %v1505 = vmul.bf16 %v1497, %v1481
        %v1506 = vmul.bf16 %v1498, %v1482
        %v1507 = vmul.bf16 %v1499, %v1475
        %v1508 = vmul.bf16 %v1500, %v1476
        %v1509 = vmul.bf16 %v1501, %v1477
        %v1510 = vmul.bf16 %v1502, %v1478
        %v1511 = vmul.bf16 %v1503, %v1479
        %v1512 = vmul.bf16 %v1504, %v1480
        %v1513 = vmul.bf16 %v1505, %v1481
        %v1514 = vmul.bf16 %v1506, %v1482
        %v1515 = vadd.bf16 %v1475, %v1507
        %v1516 = vadd.bf16 %v1476, %v1508
        %v1517 = vadd.bf16 %v1477, %v1509
        %v1518 = vadd.bf16 %v1478, %v1510
        %v1519 = vadd.bf16 %v1479, %v1511
        %v1520 = vadd.bf16 %v1480, %v1512
        %v1521 = vadd.bf16 %v1481, %v1513
        %v1522 = vadd.bf16 %v1482, %v1514
        %v1523 = vmul.bf16 %v1515, 1061961548
        %v1524 = vmul.bf16 %v1516, 1061961548
        %v1525 = vmul.bf16 %v1517, 1061961548
        %v1526 = vmul.bf16 %v1518, 1061961548
        %v1527 = vmul.bf16 %v1519, 1061961548
        %v1528 = vmul.bf16 %v1520, 1061961548
        %v1529 = vmul.bf16 %v1521, 1061961548
        %v1530 = vmul.bf16 %v1522, 1061961548
        %v1531 = vtanh.bf16.pop %v1523
        %v1532 = vtanh.bf16.pop %v1524
        %v1533 = vtanh.bf16.pop %v1525
        %v1534 = vtanh.bf16.pop %v1526
        %v1535 = vtanh.bf16.pop %v1527
        %v1536 = vtanh.bf16.pop %v1528
        %v1537 = vtanh.bf16.pop %v1529
        %v1538 = vtanh.bf16.pop %v1530
        %v1539 = vadd.bf16 %v1531, 1065369472
        %v1540 = vadd.bf16 %v1532, 1065369472
        %v1541 = vadd.bf16 %v1533, 1065369472
        %v1542 = vadd.bf16 %v1534, 1065369472
        %v1543 = vadd.bf16 %v1535, 1065369472
        %v1544 = vadd.bf16 %v1536, 1065369472
        %v1545 = vadd.bf16 %v1537, 1065369472
        %v1546 = vadd.bf16 %v1538, 1065369472
        %v1547 = vmul.bf16 %v1483, %v1539
        %v1548 = vmul.bf16 %v1484, %v1540
        %v1549 = vmul.bf16 %v1485, %v1541
        %v1550 = vmul.bf16 %v1486, %v1542
        %v1551 = vmul.bf16 %v1487, %v1543
        %v1552 = vmul.bf16 %v1488, %v1544
        %v1553 = vmul.bf16 %v1489, %v1545
        %v1554 = vmul.bf16 %v1490, %v1546
        %v1555 = vld [vmem:[#allocation4] sm:$0xf]
        %v1556 = vld [vmem:[#allocation4 + $0x4] sm:$0xf]
        %v1557 = vld [vmem:[#allocation4 + $0x8] sm:$0xf]
        %v1558 = vld [vmem:[#allocation4 + $0xc] sm:$0xf]
        %v1559 = vld [vmem:[#allocation4 + $0x10] sm:$0xf]
        %v1560 = vld [vmem:[#allocation4 + $0x14] sm:$0xf]
        %v1561 = vld [vmem:[#allocation4 + $0x18] sm:$0xf]
        %v1562 = vld [vmem:[#allocation4 + $0x1c] sm:$0xf]
        %v1563 = vld [vmem:[#allocation4 + $0x20] sm:$0xf]
        %v1564 = vld [vmem:[#allocation4 + $0x24] sm:$0xf]
        %v1565 = vld [vmem:[#allocation4 + $0x28] sm:$0xf]
        %v1566 = vld [vmem:[#allocation4 + $0x2c] sm:$0xf]
        %v1567 = vld [vmem:[#allocation4 + $0x30] sm:$0xf]
        %v1568 = vld [vmem:[#allocation4 + $0x34] sm:$0xf]
        %v1569 = vld [vmem:[#allocation4 + $0x38] sm:$0xf]
        %v1570 = vld [vmem:[#allocation4 + $0x3c] sm:$0xf]
        %v1571 = vld [vmem:[#allocation4 + $0x40] sm:$0xf]
        %v1572 = vld [vmem:[#allocation4 + $0x44] sm:$0xf]
        %v1573 = vld [vmem:[#allocation4 + $0x48] sm:$0xf]
        %v1574 = vld [vmem:[#allocation4 + $0x4c] sm:$0xf]
        %v1575 = vld [vmem:[#allocation4 + $0x50] sm:$0xf]
        %v1576 = vld [vmem:[#allocation4 + $0x54] sm:$0xf]
        %v1577 = vld [vmem:[#allocation4 + $0x58] sm:$0xf]
        %v1578 = vld [vmem:[#allocation4 + $0x5c] sm:$0xf]
        %v1579 = vld [vmem:[#allocation4 + $0x60] sm:$0xf]
        %v1580 = vld [vmem:[#allocation4 + $0x64] sm:$0xf]
        %v1581 = vld [vmem:[#allocation4 + $0x68] sm:$0xf]
        %v1582 = vld [vmem:[#allocation4 + $0x6c] sm:$0xf]
        %v1583 = vld [vmem:[#allocation4 + $0x70] sm:$0xf]
        %v1584 = vld [vmem:[#allocation4 + $0x74] sm:$0xf]
        %v1585 = vld [vmem:[#allocation4 + $0x78] sm:$0xf]
        %v1586 = vld [vmem:[#allocation4 + $0x7c] sm:$0xf]
        %v1587 = vld [vmem:[#allocation4 + $0x80] sm:$0xf]
        %v1588 = vld [vmem:[#allocation4 + $0x84] sm:$0xf]
        %v1589 = vld [vmem:[#allocation4 + $0x88] sm:$0xf]
        %v1590 = vld [vmem:[#allocation4 + $0x8c] sm:$0xf]
        %v1591 = vld [vmem:[#allocation4 + $0x90] sm:$0xf]
        %v1592 = vld [vmem:[#allocation4 + $0x94] sm:$0xf]
        %v1593 = vld [vmem:[#allocation4 + $0x98] sm:$0xf]
        %v1594 = vld [vmem:[#allocation4 + $0x9c] sm:$0xf]
        %v1595 = vld [vmem:[#allocation4 + $0xa0] sm:$0xf]
        %v1596 = vld [vmem:[#allocation4 + $0xa4] sm:$0xf]
        %v1597 = vld [vmem:[#allocation4 + $0xa8] sm:$0xf]
        %v1598 = vld [vmem:[#allocation4 + $0xac] sm:$0xf]
        %v1599 = vld [vmem:[#allocation4 + $0xb0] sm:$0xf]
        %v1600 = vld [vmem:[#allocation4 + $0xb4] sm:$0xf]
        %v1601 = vld [vmem:[#allocation4 + $0xb8] sm:$0xf]
        %v1602 = vld [vmem:[#allocation4 + $0xbc] sm:$0xf]
        %v1603 = vld [vmem:[#allocation4 + $0xc0] sm:$0xf]
        %v1604 = vld [vmem:[#allocation4 + $0xc4] sm:$0xf]
        %v1605 = vld [vmem:[#allocation4 + $0xc8] sm:$0xf]
        %v1606 = vld [vmem:[#allocation4 + $0xcc] sm:$0xf]
        %v1607 = vld [vmem:[#allocation4 + $0xd0] sm:$0xf]
        %v1608 = vld [vmem:[#allocation4 + $0xd4] sm:$0xf]
        %v1609 = vld [vmem:[#allocation4 + $0xd8] sm:$0xf]
        %v1610 = vld [vmem:[#allocation4 + $0xdc] sm:$0xf]
        %v1611 = vld [vmem:[#allocation4 + $0xe0] sm:$0xf]
        %v1612 = vld [vmem:[#allocation4 + $0xe4] sm:$0xf]
        %v1613 = vld [vmem:[#allocation4 + $0xe8] sm:$0xf]
        %v1614 = vld [vmem:[#allocation4 + $0xec] sm:$0xf]
        %v1615 = vld [vmem:[#allocation4 + $0xf0] sm:$0xf]
        %v1616 = vld [vmem:[#allocation4 + $0xf4] sm:$0xf]
        %v1617 = vld [vmem:[#allocation4 + $0xf8] sm:$0xf]
        %v1618 = vld [vmem:[#allocation4 + $0xfc] sm:$0xf]
        %v1619 = vld [vmem:[%s9] sm:$0x1]
        %v1621 = vlaneseq
        %v1622 = vshrl.u32 %v1621, 7
        %v1623 = vsub.s32 0, %v1622
        %v1624 = vrot.slane %v1619, %v1623
        %v1690 = vunpack.c.l.b16 %v1555
        %v1691 = vunpack.c.l.b16 %v1556
        %v1692 = vunpack.c.l.b16 %v1557
        %v1693 = vunpack.c.l.b16 %v1558
        %v1694 = vunpack.c.l.b16 %v1559
        %v1695 = vunpack.c.l.b16 %v1560
        %v1696 = vunpack.c.l.b16 %v1561
        %v1697 = vunpack.c.l.b16 %v1562
        %v1698 = vunpack.c.l.b16 %v1563
        %v1699 = vunpack.c.l.b16 %v1564
        %v1700 = vunpack.c.l.b16 %v1565
        %v1701 = vunpack.c.l.b16 %v1566
        %v1702 = vunpack.c.l.b16 %v1567
        %v1703 = vunpack.c.l.b16 %v1568
        %v1704 = vunpack.c.l.b16 %v1569
        %v1705 = vunpack.c.l.b16 %v1570
        %v1706 = vunpack.c.l.b16 %v1571
        %v1707 = vunpack.c.l.b16 %v1572
        %v1708 = vunpack.c.l.b16 %v1573
        %v1709 = vunpack.c.l.b16 %v1574
        %v1710 = vunpack.c.l.b16 %v1575
        %v1711 = vunpack.c.l.b16 %v1576
        %v1712 = vunpack.c.l.b16 %v1577
        %v1713 = vunpack.c.l.b16 %v1578
        %v1714 = vunpack.c.l.b16 %v1579
        %v1715 = vunpack.c.l.b16 %v1580
        %v1716 = vunpack.c.l.b16 %v1581
        %v1717 = vunpack.c.l.b16 %v1582
        %v1718 = vunpack.c.l.b16 %v1583
        %v1719 = vunpack.c.l.b16 %v1584
        %v1720 = vunpack.c.l.b16 %v1585
        %v1721 = vunpack.c.l.b16 %v1586
        %v1722 = vunpack.c.l.b16 %v1587
        %v1723 = vunpack.c.l.b16 %v1588
        %v1724 = vunpack.c.l.b16 %v1589
        %v1725 = vunpack.c.l.b16 %v1590
        %v1726 = vunpack.c.l.b16 %v1591
        %v1727 = vunpack.c.l.b16 %v1592
        %v1728 = vunpack.c.l.b16 %v1593
        %v1729 = vunpack.c.l.b16 %v1594
        %v1730 = vunpack.c.l.b16 %v1595
        %v1731 = vunpack.c.l.b16 %v1596
        %v1732 = vunpack.c.l.b16 %v1597
        %v1733 = vunpack.c.l.b16 %v1598
        %v1734 = vunpack.c.l.b16 %v1599
        %v1735 = vunpack.c.l.b16 %v1600
        %v1736 = vunpack.c.l.b16 %v1601
        %v1737 = vunpack.c.l.b16 %v1602
        %v1738 = vunpack.c.l.b16 %v1603
        %v1739 = vunpack.c.l.b16 %v1604
        %v1740 = vunpack.c.l.b16 %v1605
        %v1741 = vunpack.c.l.b16 %v1606
        %v1742 = vunpack.c.l.b16 %v1607
        %v1743 = vunpack.c.l.b16 %v1608
        %v1744 = vunpack.c.l.b16 %v1609
        %v1745 = vunpack.c.l.b16 %v1610
        %v1746 = vunpack.c.l.b16 %v1611
        %v1747 = vunpack.c.l.b16 %v1612
        %v1748 = vunpack.c.l.b16 %v1613
        %v1749 = vunpack.c.l.b16 %v1614
        %v1750 = vunpack.c.l.b16 %v1615
        %v1751 = vunpack.c.l.b16 %v1616
        %v1752 = vunpack.c.l.b16 %v1617
        %v1753 = vunpack.c.l.b16 %v1618
        %v1754 = vpack.c.b16 %v1691, %v1690
        %v1755 = vpack.c.b16 %v1693, %v1692
        %v1756 = vpack.c.b16 %v1695, %v1694
        %v1757 = vpack.c.b16 %v1697, %v1696
        %v1758 = vpack.c.b16 %v1699, %v1698
        %v1759 = vpack.c.b16 %v1701, %v1700
        %v1760 = vpack.c.b16 %v1703, %v1702
        %v1761 = vpack.c.b16 %v1705, %v1704
        %v1762 = vpack.c.b16 %v1707, %v1706
        %v1763 = vpack.c.b16 %v1709, %v1708
        %v1764 = vpack.c.b16 %v1711, %v1710
        %v1765 = vpack.c.b16 %v1713, %v1712
        %v1766 = vpack.c.b16 %v1715, %v1714
        %v1767 = vpack.c.b16 %v1717, %v1716
        %v1768 = vpack.c.b16 %v1719, %v1718
        %v1769 = vpack.c.b16 %v1721, %v1720
        %v1770 = vpack.c.b16 %v1723, %v1722
        %v1771 = vpack.c.b16 %v1725, %v1724
        %v1772 = vpack.c.b16 %v1727, %v1726
        %v1773 = vpack.c.b16 %v1729, %v1728
        %v1774 = vpack.c.b16 %v1731, %v1730
        %v1775 = vpack.c.b16 %v1733, %v1732
        %v1776 = vpack.c.b16 %v1735, %v1734
        %v1777 = vpack.c.b16 %v1737, %v1736
        %v1778 = vpack.c.b16 %v1739, %v1738
        %v1779 = vpack.c.b16 %v1741, %v1740
        %v1780 = vpack.c.b16 %v1743, %v1742
        %v1781 = vpack.c.b16 %v1745, %v1744
        %v1782 = vpack.c.b16 %v1747, %v1746
        %v1783 = vpack.c.b16 %v1749, %v1748
        %v1784 = vpack.c.b16 %v1751, %v1750
        %v1785 = vpack.c.b16 %v1753, %v1752
        %1818 = vmatprep.subr.bf16.mxu0 0
        %1819 = vmatpush1.bf16.msra.mxu0 %v1754
        %1820 = vmatprep.subr.bf16.mxu0 0
        %1821 = vmatpush1.bf16.msra.mxu0 %v1755
        %1822 = vmatprep.subr.bf16.mxu0 0
        %1823 = vmatpush1.bf16.msra.mxu0 %v1756
        %1824 = vmatprep.subr.bf16.mxu0 0
        %1825 = vmatpush1.bf16.msra.mxu0 %v1757
        %1826 = vmatprep.subr.bf16.mxu0 0
        %1827 = vmatpush1.bf16.msra.mxu0 %v1758
        %1828 = vmatprep.subr.bf16.mxu0 0
        %1829 = vmatpush1.bf16.msra.mxu0 %v1759
        %1830 = vmatprep.subr.bf16.mxu0 0
        %1831 = vmatpush1.bf16.msra.mxu0 %v1760
        %1832 = vmatprep.subr.bf16.mxu0 0
        %1833 = vmatpush1.bf16.msra.mxu0 %v1761
        %1834 = vmatprep.subr.bf16.mxu0 0
        %1835 = vmatpush1.bf16.msra.mxu0 %v1762
        %1836 = vmatprep.subr.bf16.mxu0 0
        %1837 = vmatpush1.bf16.msra.mxu0 %v1763
        %1838 = vmatprep.subr.bf16.mxu0 0
        %1839 = vmatpush1.bf16.msra.mxu0 %v1764
        %1840 = vmatprep.subr.bf16.mxu0 0
        %1841 = vmatpush1.bf16.msra.mxu0 %v1765
        %1842 = vmatprep.subr.bf16.mxu0 0
        %1843 = vmatpush1.bf16.msra.mxu0 %v1766
        %1844 = vmatprep.subr.bf16.mxu0 0
        %1845 = vmatpush1.bf16.msra.mxu0 %v1767
        %1846 = vmatprep.subr.bf16.mxu0 0
        %1847 = vmatpush1.bf16.msra.mxu0 %v1768
        %1848 = vmatprep.subr.bf16.mxu0 0
        %1849 = vmatpush1.bf16.msra.mxu0 %v1769
        %1850 = vmatprep.mubr.bf16.mxu0 %v1548
        %1851 = vmatmul.mubr.bf16.gmra.mrb[0].mxu0 %v1547
        %v1852 = vpop.f32.mrb[0].mxu0
        %v1853 = vadd.f32 %v1624, %v1852
        %v1854 = vpop.f32.mrb[0].mxu0
        %v1855 = vpop.f32.mrb[0].mxu0
        %v1856 = vadd.f32 %v1624, %v1855
        %v1857 = vpop.f32.mrb[0].mxu0
        %1858 = vmatprep.mubr.bf16.mxu0 %v1552
        %1859 = vmatmul.mubr.bf16.gmra.mrb[0].mxu0 %v1551
        %v1860 = vpop.f32.mrb[0].mxu0
        %v1861 = vadd.f32 %v1624, %v1860
        %v1862 = vpop.f32.mrb[0].mxu0
        %v1863 = vpop.f32.mrb[0].mxu0
        %v1864 = vadd.f32 %v1624, %v1863
        %v1865 = vpop.f32.mrb[0].mxu0
        %1866 = vdwg.mxu0
        %1867 = vmatprep.subr.bf16.mxu0 0
        %1868 = vmatpush1.bf16.msra.mxu0 %v1770
        %1869 = vmatprep.subr.bf16.mxu0 0
        %1870 = vmatpush1.bf16.msra.mxu0 %v1771
        %1871 = vmatprep.subr.bf16.mxu0 0
        %1872 = vmatpush1.bf16.msra.mxu0 %v1772
        %1873 = vmatprep.subr.bf16.mxu0 0
        %1874 = vmatpush1.bf16.msra.mxu0 %v1773
        %1875 = vmatprep.subr.bf16.mxu0 0
        %1876 = vmatpush1.bf16.msra.mxu0 %v1774
        %1877 = vmatprep.subr.bf16.mxu0 0
        %1878 = vmatpush1.bf16.msra.mxu0 %v1775
        %1879 = vmatprep.subr.bf16.mxu0 0
        %1880 = vmatpush1.bf16.msra.mxu0 %v1776
        %1881 = vmatprep.subr.bf16.mxu0 0
        %1882 = vmatpush1.bf16.msra.mxu0 %v1777
        %1883 = vmatprep.subr.bf16.mxu0 0
        %1884 = vmatpush1.bf16.msra.mxu0 %v1778
        %1885 = vmatprep.subr.bf16.mxu0 0
        %1886 = vmatpush1.bf16.msra.mxu0 %v1779
        %1887 = vmatprep.subr.bf16.mxu0 0
        %1888 = vmatpush1.bf16.msra.mxu0 %v1780
        %1889 = vmatprep.subr.bf16.mxu0 0
        %1890 = vmatpush1.bf16.msra.mxu0 %v1781
        %1891 = vmatprep.subr.bf16.mxu0 0
        %1892 = vmatpush1.bf16.msra.mxu0 %v1782
        %1893 = vmatprep.subr.bf16.mxu0 0
        %1894 = vmatpush1.bf16.msra.mxu0 %v1783
        %1895 = vmatprep.subr.bf16.mxu0 0
        %1896 = vmatpush1.bf16.msra.mxu0 %v1784
        %1897 = vmatprep.subr.bf16.mxu0 0
        %1898 = vmatpush1.bf16.msra.mxu0 %v1785
        %1899 = vmatprep.mubr.bf16.mxu0 %v1550
        %1900 = vmatmul.mubr.bf16.gmra.mrb[0].mxu0 %v1549
        %v1901 = vpop.f32.mrb[0].mxu0
        %v1902 = vadd.f32 %v1853, %v1901
        %v1903 = vpop.f32.mrb[0].mxu0
        %v1904 = vpop.f32.mrb[0].mxu0
        %v1905 = vadd.f32 %v1856, %v1904
        %v1906 = vpop.f32.mrb[0].mxu0
        %1907 = vmatprep.mubr.bf16.mxu0 %v1554
        %1908 = vmatmul.mubr.bf16.gmra.mrb[0].mxu0 %v1553
        %v1909 = vpop.f32.mrb[0].mxu0
        %v1910 = vadd.f32 %v1861, %v1909
        %v1911 = vpop.f32.mrb[0].mxu0
        %v1912 = vpop.f32.mrb[0].mxu0
        %v1913 = vadd.f32 %v1864, %v1912
        %v1914 = vpop.f32.mrb[0].mxu0
        %1915 = vdwg.mxu0
        %v1916 = vadd.f32 %v1902, %v1149
        %v1917 = vadd.f32 %v1905, %v1150
        %v1918 = vadd.f32 %v1910, %v1151
        %v1919 = vadd.f32 %v1913, %v1152
        %v1920 = vpack.c.bf16 %v1917, %v1916
        %v1921 = vpack.c.bf16 %v1919, %v1918
        %v1924 = vunpack.c.l.b16 %v1920
        %v1925 = vunpack.c.h.b16 %v1920
        %v1926 = vunpack.c.l.b16 %v1921
        %v1927 = vunpack.c.h.b16 %v1921
        %v1928 = vpack.c.b16 %v1924, %v1924
        %v1929 = vpack.c.b16 %v1925, %v1925
        %v1930 = vpack.c.b16 %v1926, %v1926
        %v1931 = vpack.c.b16 %v1927, %v1927
        %1936 = vst [vmem:[%s396] sm:$0xf] %v1928
        %1937 = vst [vmem:[%s396 + $0x4] sm:$0xf] %v1929
        %1938 = vst [vmem:[%s396 + $0x8] sm:$0xf] %v1930
        %1939 = vst [vmem:[%s396 + $0xc] sm:$0xf] %v1931
        %s1940 = smul.u32 2, %s23
        %p1941 = scmp.lt.s32.totalorder %s1940, 3
        %s1942 = scalar_select %p1941, %s1940, 3
        %s1943 = smul.addr %s1942, 2
        %s1944 = smul.addr %s1943, 4
        %s1945 = scalar_lea.vmem %s10, %s1944
        // Predicated region
        $region69: #{longnet_forward.3} parent=59 // pred_check
          %p1946 = pneg %p256
        $region70: #{longnet_forward.3} parent=59 // pred_check_branch
          %1948 = sbr.rel (%p1946) target = $region72
        $region71: #{longnet_forward.3} parent=59 // pred_region
          %s1949 = smul.u32 2, %s23
        $region72: #{longnet_forward.3} parent=59 // pred_fallthru
          _
      $region60: #{longnet_forward.3} parent=5 // pred_fallthru
        _
      %p1950 = scmp.le.s32.totalorder 2, %s18
      // Predicated region
      $region73: #{longnet_forward.3} parent=5 // pred_check
        %p1951 = pneg %p1950
      $region74: #{longnet_forward.3} parent=5 // pred_check_branch
        %1953 = sbr.rel (%p1951) target = $region76
      $region75: #{longnet_forward.3} parent=5 // pred_region
        %s1954 = ssub.s32 %s18, 2
        // Predicated region
        $region77: #{longnet_forward.3} parent=75 // pred_check
          %p1955 = pneg %p262
        $region78: #{longnet_forward.3} parent=75 // pred_check_branch
          %1957 = sbr.rel (%p1955) target = $region80
        $region79: #{longnet_forward.3} parent=75 // pred_region
          %s1958 = smul.u32 2, %s24
          %p1959 = scmp.lt.s32.totalorder %s1958, 3
          %s1960 = scalar_select %p1959, %s1958, 3
          %s1961 = smul.addr %s1960, 2
          %s1962 = smul.addr %s1961, 4
          %s1963 = scalar_lea.vmem %s10, %s1962
        $region80: #{longnet_forward.3} parent=75 // pred_fallthru
          _
      $region76: #{longnet_forward.3} parent=5 // pred_fallthru
        _
    $region6: #{longnet_forward.3} parent=1 // loop_footer
      %s22 = sadd.s32 1, %s18
    $region7: #{longnet_forward.3} parent=1 // loop_footer_branch
      %17 = sbr.rel target = $region3
    $region8: #{longnet_forward.3} parent=1 // loop_exit
      _
    %1964 = vsyncpa [#allocation3], 1
    %s1965 = scalar_lea.sflag [#allocation3], 1
    %1966 = vsyncpa %s1965, 1
    %1967 = vsyncpa [#allocation5], 1

</llo_original>
